<compile_context>
chip_gen: v6e
topology: v6e:2x2x1
jax: 0.10.0
libtpu: 0.0.40
codegen_flags: <defaults>
</compile_context>

<pallas_src>
import math
from functools import partial

import jax
import jax.numpy as jnp
from jax import lax
from jax.experimental import pallas as pl
from jax.experimental.pallas import tpu as pltpu

EPS = 1e-5  # PyTorch nn.LayerNorm default


def _layernorm_f32(x, gamma, beta):
    x = x.astype(jnp.float32)
    mu = jnp.mean(x, axis=-1, keepdims=True)
    var = jnp.mean(jnp.square(x - mu), axis=-1, keepdims=True)
    return (x - mu) * lax.rsqrt(var + EPS) * gamma + beta


def _gelu_exact_f32(x):
    # nn.GELU default is the exact erf formulation
    return 0.5 * x * (1.0 + lax.erf(x * (1.0 / math.sqrt(2.0))))


def _kth_largest(scores, topk):
    """k-th largest value along the last axis, O(topk * N^2) (f32)."""
    neg = jnp.float32(-jnp.inf)

    def mask_max(w):
        cur = jnp.max(w, axis=-1, keepdims=True)
        return jnp.where(w >= cur, neg, w)

    work = scores
    if topk - 1 <= 8:                       # topk is a static Python int
        for _ in range(topk - 1):           # short, fully unrolled
            work = mask_max(work)
    else:
        work = lax.fori_loop(0, topk - 1, lambda i, w: mask_max(w), work)
    return jnp.max(work, axis=-1, keepdims=True)


def block_kernel(x_ref, g1_ref, be1_ref, wqkv_ref, wo_ref, bo_ref,
                 g2_ref, be2_ref, w1_ref, b1_ref, w2_ref, b2_ref,
                 o_ref, *, num_heads, topk, scale, mm_dtype, approx_recip):
    Bt, N, C = x_ref.shape
    G = Bt * num_heads

    x = x_ref[...].astype(jnp.float32)            # (Bt, N, C)
    xf = x.reshape(Bt * N, C)                     # layout no-op (Bt==1 or N%8==0)

    # ---------------- attention branch ----------------
    xn = _layernorm_f32(xf, g1_ref[...], be1_ref[...])          # (Bt*N, C) f32

    # head-batched q/k/v projections: (G, N, C) x (G, C, hd) -> (G, N, hd)
    xng = jnp.broadcast_to(xn.reshape(Bt, 1, N, C),
                           (Bt, num_heads, N, C)).reshape(G, N, C)
    xng = xng.astype(mm_dtype)

    def per_head(w):                              # (nh, a, b) -> (G, a, b)
        # trivial (free) when Bt == 1, which is the common case for ViT N
        return jnp.broadcast_to(w[None], (Bt,) + w.shape).reshape(
            (G,) + w.shape[1:])

    wq = wqkv_ref[0]                              # (nh, C, hd) static views
    wk = wqkv_ref[1]
    wv = wqkv_ref[2]
    q = jnp.einsum('gnc,gcd->gnd', xng, per_head(wq),
                   preferred_element_type=jnp.float32)
    k = jnp.einsum('gnc,gcd->gnd', xng, per_head(wk),
                   preferred_element_type=jnp.float32)
    v = jnp.einsum('gnc,gcd->gnd', xng, per_head(wv),
                   preferred_element_type=jnp.float32)

    qs = (q * scale).astype(mm_dtype)             # scale applied in f32 (matches ref)
    kb = k.astype(mm_dtype)
    vb = v.astype(mm_dtype)

    scores = jnp.einsum('gqd,gkd->gqk', qs, kb,
                        preferred_element_type=jnp.float32)      # (G, N, N)

    # top-k mask + softmax (all f32)
    kth = _kth_largest(scores, topk)
    keep = scores >= kth
    row_max = jnp.max(scores, axis=-1, keepdims=True)
    p = jnp.where(keep, jnp.exp(scores - row_max), jnp.float32(0.0))
    denom = jnp.sum(p, axis=-1, keepdims=True)
    p = p * pl.reciprocal(denom, approx=approx_recip)

    ctx = jnp.einsum('gqk,gkd->gqd', p.astype(mm_dtype), vb,
                     preferred_element_type=jnp.float32)         # (G, N, hd)

    # output projection = sum over heads of ctx_h @ Wproj_h  (== concat @ Wproj)
    proj = jnp.einsum('gnd,gdc->gnc', ctx.astype(mm_dtype),
                      per_head(wo_ref[...]),
                      preferred_element_type=jnp.float32)        # (G, N, C)
    proj = jnp.sum(proj.reshape(Bt, num_heads, N, C), axis=1)    # (Bt, N, C)
    attn_out = proj.reshape(Bt * N, C) + bo_ref[...]
    x1 = xf + attn_out

    # ---------------- MLP branch ----------------
    xn2 = _layernorm_f32(x1, g2_ref[...], be2_ref[...])
    h = jnp.dot(xn2.astype(mm_dtype), w1_ref[...],
                preferred_element_type=jnp.float32) + b1_ref[...]
    h = _gelu_exact_f32(h)
    mlp_out = jnp.dot(h.astype(mm_dtype), w2_ref[...],
                      preferred_element_type=jnp.float32) + b2_ref[...]

    o_ref[...] = (x1 + mlp_out).reshape(Bt, N, C).astype(o_ref.dtype)


def block_forward(x, params, *, num_heads, topk,
                  matmul_dtype=jnp.bfloat16, batch_tile=None,
                  approx_reciprocal=None):
    B, N, C = x.shape
    assert C % num_heads == 0
    hd = C // num_heads
    assert 1 <= topk <= N
    scale = hd ** (-0.5)
    H = params['w1'].shape[1]

    if approx_reciprocal is None:
        approx_reciprocal = (matmul_dtype != jnp.float32)

    # batch tile: amortize per-grid-step overhead / fill the MXU M dim.
    # Only batch when N is sublane-aligned so the (Bt,N,C)<->(Bt*N,C) reshape
    # is a pure layout no-op.
    if batch_tile is None:
        batch_tile = 1
        if N % 8 == 0:
            limit = max(1, -(-256 // N))           # ceil(256 / N)
            for cand in range(1, min(B, limit) + 1):
                if B % cand == 0:
                    batch_tile = cand
    assert B % batch_tile == 0

    # ----- wrapper-side weight prep (pure JAX; head split + bf16 cast) -----
    wqkv = params['wqkv']                          # (C, 3C), qkv_bias=False
    wq, wk, wv = wqkv[:, :C], wqkv[:, C:2 * C], wqkv[:, 2 * C:]

    def split_cols(w):                             # (C, C) -> (nh, C, hd)
        return w.reshape(C, num_heads, hd).transpose(1, 0, 2)

    wqkv_h = jnp.stack([split_cols(wq), split_cols(wk), split_cols(wv)],
                       axis=0).astype(matmul_dtype)              # (3, nh, C, hd)
    wo_h = params['wproj'].reshape(num_heads, hd, C).astype(matmul_dtype)
    w1 = params['w1'].astype(matmul_dtype)
    w2 = params['w2'].astype(matmul_dtype)

    kernel = partial(block_kernel, num_heads=num_heads, topk=topk, scale=scale,
                     mm_dtype=matmul_dtype, approx_recip=approx_reciprocal)

    def const_spec(shape):
        # grid-invariant operand: constant index_map -> copied once, reused.
        return pl.BlockSpec(shape, lambda b: (0,) * len(shape))

    in_specs = [
        pl.BlockSpec((batch_tile, N, C), lambda b: (b, 0, 0)),   # x
        const_spec((1, C)),                   # gamma1
        const_spec((1, C)),                   # beta1
        const_spec((3, num_heads, C, hd)),    # Wq|Wk|Wv (per head, stacked)
        const_spec((num_heads, hd, C)),       # Wproj (per head)
        const_spec((1, C)),                   # proj bias
        const_spec((1, C)),                   # gamma2
        const_spec((1, C)),                   # beta2
        const_spec((C, H)),                   # MLP fc1 weight
        const_spec((1, H)),                   # MLP fc1 bias
        const_spec((H, C)),                   # MLP fc2 weight
        const_spec((1, C)),                   # MLP fc2 bias
    ]
    out_spec = pl.BlockSpec((batch_tile, N, C), lambda b: (b, 0, 0))

    return pl.pallas_call(
        kernel,
        out_shape=jax.ShapeDtypeStruct((B, N, C), x.dtype),
        grid_spec=pltpu.PrefetchScalarGridSpec(
            num_scalar_prefetch=0,
            grid=(B // batch_tile,),
            in_specs=in_specs,
            out_specs=out_spec,
        ),
        compiler_params=pltpu.CompilerParams(
            dimension_semantics=("parallel",),      # batch is independent
            vmem_limit_bytes=48 * 1024 * 1024,
        ),
    )(x, params['g1'], params['be1'], wqkv_h, wo_h, params['bproj'],
      params['g2'], params['be2'], w1, params['b1'], w2, params['b2'])


# ---------------- pure-JAX reference (for correctness checks) ----------------
def block_reference(x, params, *, num_heads, topk, matmul_dtype=jnp.float32):
    B, N, C = x.shape
    hd = C // num_heads
    scale = hd ** (-0.5)
    f32 = jnp.float32

    def ln(y, g, b):
        mu = jnp.mean(y, axis=-1, keepdims=True)
        var = jnp.mean(jnp.square(y - mu), axis=-1, keepdims=True)
        return (y - mu) * lax.rsqrt(var + EPS) * g + b

    def mm(a, b):
        return jnp.matmul(a.astype(matmul_dtype), b.astype(matmul_dtype),
                          preferred_element_type=f32)

    xn = ln(x.astype(f32), params['g1'][0], params['be1'][0])
    qkv = mm(xn, params['wqkv'])                                  # (B, N, 3C)
    qkv = qkv.reshape(B, N, 3, num_heads, hd).transpose(2, 0, 3, 1, 4)
    q, k, v = qkv[0], qkv[1], qkv[2]                              # (B, h, N, hd)
    attn = jnp.einsum('bhqd,bhkd->bhqk',
                      (q * scale).astype(matmul_dtype), k.astype(matmul_dtype),
                      preferred_element_type=f32)
    kth = lax.top_k(attn, topk)[0][..., -1:]
    keep = attn >= kth
    row_max = jnp.max(attn, axis=-1, keepdims=True)
    p = jnp.where(keep, jnp.exp(attn - row_max), 0.0)
    p = p / jnp.sum(p, axis=-1, keepdims=True)
    ctx = jnp.einsum('bhqk,bhkd->bhqd', p.astype(matmul_dtype),
                     v.astype(matmul_dtype), preferred_element_type=f32)
    ctx = ctx.transpose(0, 2, 1, 3).reshape(B, N, C)
    x1 = x.astype(f32) + mm(ctx, params['wproj']) + params['bproj'][0]

    xn2 = ln(x1, params['g2'][0], params['be2'][0])
    h = mm(xn2, params['w1']) + params['b1'][0]
    h = 0.5 * h * (1.0 + lax.erf(h * (1.0 / math.sqrt(2.0))))
    return x1 + mm(h, params['w2']) + params['b2'][0]


if __name__ == "__main__":
    B, N, C = 2, 8, 32
    num_heads = 4
    mlp_ratio = 4.0
    H = int(C * mlp_ratio)
    topk = 4  # module default is 100 but must be <= N; use 4 for N=8

    key = jax.random.PRNGKey(0)
    ks = jax.random.split(key, 8)
    f32 = jnp.float32

    params = {
        "g1":    jnp.ones((1, C), f32),
        "be1":   jnp.zeros((1, C), f32),
        "wqkv":  jax.random.normal(ks[0], (C, 3 * C), f32) * (1.0 / math.sqrt(C)),
        "wproj": jax.random.normal(ks[1], (C, C), f32) * (1.0 / math.sqrt(C)),
        "bproj": jax.random.normal(ks[2], (1, C), f32) * 0.02,
        "g2":    jnp.ones((1, C), f32),
        "be2":   jnp.zeros((1, C), f32),
        "w1":    jax.random.normal(ks[3], (C, H), f32) * (1.0 / math.sqrt(C)),
        "b1":    jax.random.normal(ks[4], (1, H), f32) * 0.02,
        "w2":    jax.random.normal(ks[5], (H, C), f32) * (1.0 / math.sqrt(H)),
        "b2":    jax.random.normal(ks[6], (1, C), f32) * 0.02,
    }
    x = jax.random.normal(ks[7], (B, N, C), f32)

    # --- fast path (default): bf16 MXU matmuls, f32 statistics ---
    out_bf16 = jax.block_until_ready(
        block_forward(x, params, num_heads=num_heads, topk=topk))
    ref_bf16 = jax.block_until_ready(
        block_reference(x, params, num_heads=num_heads, topk=topk,
                        matmul_dtype=jnp.bfloat16))
    assert out_bf16.shape == (B, N, C)
    err_bf = jnp.max(jnp.abs(out_bf16 - ref_bf16))
    assert jnp.allclose(out_bf16, ref_bf16, rtol=2e-2, atol=2e-2), \
        f"bf16 path max abs err {err_bf}"

    # --- exact path: f32 matmuls, exact reciprocal, tight tolerance ---
    out_f32 = jax.block_until_ready(
        block_forward(x, params, num_heads=num_heads, topk=topk,
                      matmul_dtype=jnp.float32, approx_reciprocal=False))
    ref_f32 = jax.block_until_ready(
        block_reference(x, params, num_heads=num_heads, topk=topk,
                        matmul_dtype=jnp.float32))
    err_f = jnp.max(jnp.abs(out_f32 - ref_f32))
    assert jnp.allclose(out_f32, ref_f32, rtol=5e-4, atol=5e-4), \
        f"f32 path max abs err {err_f}"

    print("KERNEL_OK")
</pallas_src>

<mosaic_0001>
module attributes {stable_mosaic.version = 11 : i64} {
  func.func @block_kernel(%arg0: i32, %arg1: memref<2x8x32xf32, #tpu.memory_space<vmem>>, %arg2: memref<1x32xf32, #tpu.memory_space<vmem>>, %arg3: memref<1x32xf32, #tpu.memory_space<vmem>>, %arg4: memref<3x4x32x8xbf16, #tpu.memory_space<vmem>>, %arg5: memref<4x8x32xbf16, #tpu.memory_space<vmem>>, %arg6: memref<1x32xf32, #tpu.memory_space<vmem>>, %arg7: memref<1x32xf32, #tpu.memory_space<vmem>>, %arg8: memref<1x32xf32, #tpu.memory_space<vmem>>, %arg9: memref<32x128xbf16, #tpu.memory_space<vmem>>, %arg10: memref<1x128xf32, #tpu.memory_space<vmem>>, %arg11: memref<128x32xbf16, #tpu.memory_space<vmem>>, %arg12: memref<1x32xf32, #tpu.memory_space<vmem>>, %arg13: memref<2x8x32xf32, #tpu.memory_space<vmem>>) attributes {dimension_semantics = [#tpu.dimension_semantics<parallel>], iteration_bounds = array<i64: 1>, scalar_prefetch = 0 : i64, scratch_operands = 0 : i64, tpu.core_type = #tpu.core_type<tc>, window_params = [{transform_indices = @transform_0, window_bounds = array<i64: 2, 8, 32>}, {pipeline_mode = #tpu.pipeline_mode<synchronous>, transform_indices = @transform_1, window_bounds = array<i64: 1, 32>}, {pipeline_mode = #tpu.pipeline_mode<synchronous>, transform_indices = @transform_2, window_bounds = array<i64: 1, 32>}, {pipeline_mode = #tpu.pipeline_mode<synchronous>, transform_indices = @transform_3, window_bounds = array<i64: 3, 4, 32, 8>}, {pipeline_mode = #tpu.pipeline_mode<synchronous>, transform_indices = @transform_4, window_bounds = array<i64: 4, 8, 32>}, {pipeline_mode = #tpu.pipeline_mode<synchronous>, transform_indices = @transform_5, window_bounds = array<i64: 1, 32>}, {pipeline_mode = #tpu.pipeline_mode<synchronous>, transform_indices = @transform_6, window_bounds = array<i64: 1, 32>}, {pipeline_mode = #tpu.pipeline_mode<synchronous>, transform_indices = @transform_7, window_bounds = array<i64: 1, 32>}, {pipeline_mode = #tpu.pipeline_mode<synchronous>, transform_indices = @transform_8, window_bounds = array<i64: 32, 128>}, {pipeline_mode = #tpu.pipeline_mode<synchronous>, transform_indices = @transform_9, window_bounds = array<i64: 1, 128>}, {pipeline_mode = #tpu.pipeline_mode<synchronous>, transform_indices = @transform_10, window_bounds = array<i64: 128, 32>}, {pipeline_mode = #tpu.pipeline_mode<synchronous>, transform_indices = @transform_11, window_bounds = array<i64: 1, 32>}, {transform_indices = @transform_12, window_bounds = array<i64: 2, 8, 32>}]} {
    %c0 = arith.constant 0 : index
    %c0_0 = arith.constant 0 : index
    %c0_1 = arith.constant 0 : index
    %0 = vector.load %arg1[%c0, %c0_0, %c0_1] : memref<2x8x32xf32, #tpu.memory_space<vmem>>, vector<2x8x32xf32>
    %1 = vector.shape_cast %0 : vector<2x8x32xf32> to vector<16x32xf32>
    %c0_2 = arith.constant 0 : index
    %c0_3 = arith.constant 0 : index
    %2 = vector.load %arg2[%c0_2, %c0_3] : memref<1x32xf32, #tpu.memory_space<vmem>>, vector<1x32xf32>
    %c0_4 = arith.constant 0 : index
    %c0_5 = arith.constant 0 : index
    %3 = vector.load %arg3[%c0_4, %c0_5] : memref<1x32xf32, #tpu.memory_space<vmem>>, vector<1x32xf32>
    %cst = arith.constant dense<0.000000e+00> : vector<16xf32>
    %4 = vector.multi_reduction <add>, %1, %cst [1] : vector<16x32xf32> to vector<16xf32>
    %5 = vector.shape_cast %4 : vector<16xf32> to vector<16x1xf32>
    %cst_6 = arith.constant 3.200000e+01 : f32
    %6 = vector.broadcast %cst_6 : f32 to vector<16x1xf32>
    %7 = arith.divf %5, %6 : vector<16x1xf32>
    %8 = vector.broadcast %7 : vector<16x1xf32> to vector<16x32xf32>
    %9 = arith.subf %1, %8 : vector<16x32xf32>
    %10 = arith.mulf %9, %9 : vector<16x32xf32>
    %cst_7 = arith.constant dense<0.000000e+00> : vector<16xf32>
    %11 = vector.multi_reduction <add>, %10, %cst_7 [1] : vector<16x32xf32> to vector<16xf32>
    %12 = vector.shape_cast %11 : vector<16xf32> to vector<16x1xf32>
    %cst_8 = arith.constant 3.200000e+01 : f32
    %13 = vector.broadcast %cst_8 : f32 to vector<16x1xf32>
    %14 = arith.divf %12, %13 : vector<16x1xf32>
    %15 = vector.broadcast %7 : vector<16x1xf32> to vector<16x32xf32>
    %16 = arith.subf %1, %15 : vector<16x32xf32>
    %cst_9 = arith.constant 9.99999974E-6 : f32
    %17 = vector.broadcast %cst_9 : f32 to vector<16x1xf32>
    %18 = arith.addf %14, %17 : vector<16x1xf32>
    %19 = math.rsqrt %18 : vector<16x1xf32>
    %20 = vector.broadcast %19 : vector<16x1xf32> to vector<16x32xf32>
    %21 = arith.mulf %16, %20 : vector<16x32xf32>
    %22 = vector.broadcast %2 : vector<1x32xf32> to vector<16x32xf32>
    %23 = arith.mulf %21, %22 : vector<16x32xf32>
    %24 = vector.broadcast %3 : vector<1x32xf32> to vector<16x32xf32>
    %25 = arith.addf %23, %24 : vector<16x32xf32>
    %26 = vector.shape_cast %25 : vector<16x32xf32> to vector<2x1x8x32xf32>
    %27 = vector.shape_cast %26 : vector<2x1x8x32xf32> to vector<2x1x8x32xf32>
    %28 = vector.broadcast %27 : vector<2x1x8x32xf32> to vector<2x4x8x32xf32>
    %29 = vector.shape_cast %28 : vector<2x4x8x32xf32> to vector<8x8x32xf32>
    %30 = arith.truncf %29 : vector<8x8x32xf32> to vector<8x8x32xbf16>
    %c0_10 = arith.constant 0 : index
    %c0_11 = arith.constant 0 : index
    %c0_12 = arith.constant 0 : index
    %c0_13 = arith.constant 0 : index
    %31 = vector.load %arg4[%c0_10, %c0_11, %c0_12, %c0_13] : memref<3x4x32x8xbf16, #tpu.memory_space<vmem>>, vector<1x4x32x8xbf16>
    %32 = vector.shape_cast %31 : vector<1x4x32x8xbf16> to vector<4x32x8xbf16>
    %c1 = arith.constant 1 : index
    %c0_14 = arith.constant 0 : index
    %c0_15 = arith.constant 0 : index
    %c0_16 = arith.constant 0 : index
    %33 = vector.load %arg4[%c1, %c0_14, %c0_15, %c0_16] : memref<3x4x32x8xbf16, #tpu.memory_space<vmem>>, vector<1x4x32x8xbf16>
    %34 = vector.shape_cast %33 : vector<1x4x32x8xbf16> to vector<4x32x8xbf16>
    %c2 = arith.constant 2 : index
    %c0_17 = arith.constant 0 : index
    %c0_18 = arith.constant 0 : index
    %c0_19 = arith.constant 0 : index
    %35 = vector.load %arg4[%c2, %c0_17, %c0_18, %c0_19] : memref<3x4x32x8xbf16, #tpu.memory_space<vmem>>, vector<1x4x32x8xbf16>
    %36 = vector.shape_cast %35 : vector<1x4x32x8xbf16> to vector<4x32x8xbf16>
    %37 = vector.shape_cast %32 : vector<4x32x8xbf16> to vector<1x4x32x8xbf16>
    %38 = vector.shape_cast %37 : vector<1x4x32x8xbf16> to vector<1x4x32x8xbf16>
    %39 = vector.broadcast %38 : vector<1x4x32x8xbf16> to vector<2x4x32x8xbf16>
    %40 = vector.shape_cast %39 : vector<2x4x32x8xbf16> to vector<8x32x8xbf16>
    "tpu.trace_start"() <{level = 10 : i32, message = "gnc,gcd->gnd"}> : () -> ()
    %cst_20 = arith.constant dense<0.000000e+00> : vector<8x8x8xf32>
    %41 = tpu.matmul %30, %40, %cst_20 {dimension_numbers = #tpu.dot_dimension_numbers<[2], [1], [1], [2], [0, 0, 0, 1, 1, 2], [0], [0]>} : vector<8x8x32xbf16>, vector<8x32x8xbf16>, vector<8x8x8xf32> -> vector<8x8x8xf32>
    "tpu.trace_stop"() : () -> ()
    %42 = vector.shape_cast %34 : vector<4x32x8xbf16> to vector<1x4x32x8xbf16>
    %43 = vector.shape_cast %42 : vector<1x4x32x8xbf16> to vector<1x4x32x8xbf16>
    %44 = vector.broadcast %43 : vector<1x4x32x8xbf16> to vector<2x4x32x8xbf16>
    %45 = vector.shape_cast %44 : vector<2x4x32x8xbf16> to vector<8x32x8xbf16>
    "tpu.trace_start"() <{level = 10 : i32, message = "gnc,gcd->gnd"}> : () -> ()
    %cst_21 = arith.constant dense<0.000000e+00> : vector<8x8x8xf32>
    %46 = tpu.matmul %30, %45, %cst_21 {dimension_numbers = #tpu.dot_dimension_numbers<[2], [1], [1], [2], [0, 0, 0, 1, 1, 2], [0], [0]>} : vector<8x8x32xbf16>, vector<8x32x8xbf16>, vector<8x8x8xf32> -> vector<8x8x8xf32>
    "tpu.trace_stop"() : () -> ()
    %47 = vector.shape_cast %36 : vector<4x32x8xbf16> to vector<1x4x32x8xbf16>
    %48 = vector.shape_cast %47 : vector<1x4x32x8xbf16> to vector<1x4x32x8xbf16>
    %49 = vector.broadcast %48 : vector<1x4x32x8xbf16> to vector<2x4x32x8xbf16>
    %50 = vector.shape_cast %49 : vector<2x4x32x8xbf16> to vector<8x32x8xbf16>
    "tpu.trace_start"() <{level = 10 : i32, message = "gnc,gcd->gnd"}> : () -> ()
    %cst_22 = arith.constant dense<0.000000e+00> : vector<8x8x8xf32>
    %51 = tpu.matmul %30, %50, %cst_22 {dimension_numbers = #tpu.dot_dimension_numbers<[2], [1], [1], [2], [0, 0, 0, 1, 1, 2], [0], [0]>} : vector<8x8x32xbf16>, vector<8x32x8xbf16>, vector<8x8x8xf32> -> vector<8x8x8xf32>
    "tpu.trace_stop"() : () -> ()
    %cst_23 = arith.constant 0.353553385 : f32
    %52 = vector.broadcast %cst_23 : f32 to vector<8x8x8xf32>
    %53 = arith.mulf %41, %52 : vector<8x8x8xf32>
    %54 = arith.truncf %53 : vector<8x8x8xf32> to vector<8x8x8xbf16>
    %55 = arith.truncf %46 : vector<8x8x8xf32> to vector<8x8x8xbf16>
    %56 = arith.truncf %51 : vector<8x8x8xf32> to vector<8x8x8xbf16>
    "tpu.trace_start"() <{level = 10 : i32, message = "gqd,gkd->gqk"}> : () -> ()
    %cst_24 = arith.constant dense<0.000000e+00> : vector<8x8x8xf32>
    %57 = tpu.matmul %54, %55, %cst_24 {dimension_numbers = #tpu.dot_dimension_numbers<[2], [2], [1], [1], [0, 0, 0, 1, 1, 1], [0], [0]>} : vector<8x8x8xbf16>, vector<8x8x8xbf16>, vector<8x8x8xf32> -> vector<8x8x8xf32>
    "tpu.trace_stop"() : () -> ()
    %cst_25 = arith.constant dense<0xFF800000> : vector<8x8xf32>
    %58 = vector.multi_reduction <maximumf>, %57, %cst_25 [2] : vector<8x8x8xf32> to vector<8x8xf32>
    %59 = vector.shape_cast %58 : vector<8x8xf32> to vector<8x8x1xf32>
    %60 = vector.broadcast %59 : vector<8x8x1xf32> to vector<8x8x8xf32>
    %61 = arith.cmpf oge, %57, %60 : vector<8x8x8xf32>
    %cst_26 = arith.constant 0xFF800000 : f32
    %62 = vector.broadcast %cst_26 : f32 to vector<8x8x8xf32>
    %63 = arith.select %61, %62, %57 : vector<8x8x8xi1>, vector<8x8x8xf32>
    %cst_27 = arith.constant dense<0xFF800000> : vector<8x8xf32>
    %64 = vector.multi_reduction <maximumf>, %63, %cst_27 [2] : vector<8x8x8xf32> to vector<8x8xf32>
    %65 = vector.shape_cast %64 : vector<8x8xf32> to vector<8x8x1xf32>
    %66 = vector.broadcast %65 : vector<8x8x1xf32> to vector<8x8x8xf32>
    %67 = arith.cmpf oge, %63, %66 : vector<8x8x8xf32>
    %cst_28 = arith.constant 0xFF800000 : f32
    %68 = vector.broadcast %cst_28 : f32 to vector<8x8x8xf32>
    %69 = arith.select %67, %68, %63 : vector<8x8x8xi1>, vector<8x8x8xf32>
    %cst_29 = arith.constant dense<0xFF800000> : vector<8x8xf32>
    %70 = vector.multi_reduction <maximumf>, %69, %cst_29 [2] : vector<8x8x8xf32> to vector<8x8xf32>
    %71 = vector.shape_cast %70 : vector<8x8xf32> to vector<8x8x1xf32>
    %72 = vector.broadcast %71 : vector<8x8x1xf32> to vector<8x8x8xf32>
    %73 = arith.cmpf oge, %69, %72 : vector<8x8x8xf32>
    %cst_30 = arith.constant 0xFF800000 : f32
    %74 = vector.broadcast %cst_30 : f32 to vector<8x8x8xf32>
    %75 = arith.select %73, %74, %69 : vector<8x8x8xi1>, vector<8x8x8xf32>
    %cst_31 = arith.constant dense<0xFF800000> : vector<8x8xf32>
    %76 = vector.multi_reduction <maximumf>, %75, %cst_31 [2] : vector<8x8x8xf32> to vector<8x8xf32>
    %77 = vector.shape_cast %76 : vector<8x8xf32> to vector<8x8x1xf32>
    %78 = vector.broadcast %77 : vector<8x8x1xf32> to vector<8x8x8xf32>
    %79 = arith.cmpf oge, %57, %78 : vector<8x8x8xf32>
    %cst_32 = arith.constant dense<0xFF800000> : vector<8x8xf32>
    %80 = vector.multi_reduction <maximumf>, %57, %cst_32 [2] : vector<8x8x8xf32> to vector<8x8xf32>
    %81 = vector.shape_cast %80 : vector<8x8xf32> to vector<8x8x1xf32>
    %82 = vector.broadcast %81 : vector<8x8x1xf32> to vector<8x8x8xf32>
    %83 = arith.subf %57, %82 : vector<8x8x8xf32>
    %84 = math.exp %83 : vector<8x8x8xf32>
    %cst_33 = arith.constant 0.000000e+00 : f32
    %85 = vector.broadcast %cst_33 : f32 to vector<8x8x8xf32>
    %86 = arith.select %79, %84, %85 : vector<8x8x8xi1>, vector<8x8x8xf32>
    %cst_34 = arith.constant dense<0.000000e+00> : vector<8x8xf32>
    %87 = vector.multi_reduction <add>, %86, %cst_34 [2] : vector<8x8x8xf32> to vector<8x8xf32>
    %88 = vector.shape_cast %87 : vector<8x8xf32> to vector<8x8x1xf32>
    %89 = tpu.reciprocal %88 {approx = true} : vector<8x8x1xf32> -> vector<8x8x1xf32>
    %90 = vector.broadcast %89 : vector<8x8x1xf32> to vector<8x8x8xf32>
    %91 = arith.mulf %86, %90 : vector<8x8x8xf32>
    %92 = arith.truncf %91 : vector<8x8x8xf32> to vector<8x8x8xbf16>
    "tpu.trace_start"() <{level = 10 : i32, message = "gqk,gkd->gqd"}> : () -> ()
    %cst_35 = arith.constant dense<0.000000e+00> : vector<8x8x8xf32>
    %93 = tpu.matmul %92, %56, %cst_35 {dimension_numbers = #tpu.dot_dimension_numbers<[2], [1], [1], [2], [0, 0, 0, 1, 1, 2], [0], [0]>} : vector<8x8x8xbf16>, vector<8x8x8xbf16>, vector<8x8x8xf32> -> vector<8x8x8xf32>
    "tpu.trace_stop"() : () -> ()
    %94 = arith.truncf %93 : vector<8x8x8xf32> to vector<8x8x8xbf16>
    %c0_36 = arith.constant 0 : index
    %c0_37 = arith.constant 0 : index
    %c0_38 = arith.constant 0 : index
    %95 = vector.load %arg5[%c0_36, %c0_37, %c0_38] : memref<4x8x32xbf16, #tpu.memory_space<vmem>>, vector<4x8x32xbf16>
    %96 = vector.shape_cast %95 : vector<4x8x32xbf16> to vector<1x4x8x32xbf16>
    %97 = vector.shape_cast %96 : vector<1x4x8x32xbf16> to vector<1x4x8x32xbf16>
    %98 = vector.broadcast %97 : vector<1x4x8x32xbf16> to vector<2x4x8x32xbf16>
    %99 = vector.shape_cast %98 : vector<2x4x8x32xbf16> to vector<8x8x32xbf16>
    "tpu.trace_start"() <{level = 10 : i32, message = "gnd,gdc->gnc"}> : () -> ()
    %cst_39 = arith.constant dense<0.000000e+00> : vector<8x8x32xf32>
    %100 = tpu.matmul %94, %99, %cst_39 {dimension_numbers = #tpu.dot_dimension_numbers<[2], [1], [1], [2], [0, 0, 0, 1, 1, 2], [0], [0]>} : vector<8x8x8xbf16>, vector<8x8x32xbf16>, vector<8x8x32xf32> -> vector<8x8x32xf32>
    "tpu.trace_stop"() : () -> ()
    %101 = vector.shape_cast %100 : vector<8x8x32xf32> to vector<2x4x8x32xf32>
    %cst_40 = arith.constant dense<0.000000e+00> : vector<2x8x32xf32>
    %102 = vector.multi_reduction <add>, %101, %cst_40 [1] : vector<2x4x8x32xf32> to vector<2x8x32xf32>
    %103 = vector.shape_cast %102 : vector<2x8x32xf32> to vector<16x32xf32>
    %c0_41 = arith.constant 0 : index
    %c0_42 = arith.constant 0 : index
    %104 = vector.load %arg6[%c0_41, %c0_42] : memref<1x32xf32, #tpu.memory_space<vmem>>, vector<1x32xf32>
    %105 = vector.broadcast %104 : vector<1x32xf32> to vector<16x32xf32>
    %106 = arith.addf %103, %105 : vector<16x32xf32>
    %107 = arith.addf %1, %106 : vector<16x32xf32>
    %c0_43 = arith.constant 0 : index
    %c0_44 = arith.constant 0 : index
    %108 = vector.load %arg7[%c0_43, %c0_44] : memref<1x32xf32, #tpu.memory_space<vmem>>, vector<1x32xf32>
    %c0_45 = arith.constant 0 : index
    %c0_46 = arith.constant 0 : index
    %109 = vector.load %arg8[%c0_45, %c0_46] : memref<1x32xf32, #tpu.memory_space<vmem>>, vector<1x32xf32>
    %cst_47 = arith.constant dense<0.000000e+00> : vector<16xf32>
    %110 = vector.multi_reduction <add>, %107, %cst_47 [1] : vector<16x32xf32> to vector<16xf32>
    %111 = vector.shape_cast %110 : vector<16xf32> to vector<16x1xf32>
    %cst_48 = arith.constant 3.200000e+01 : f32
    %112 = vector.broadcast %cst_48 : f32 to vector<16x1xf32>
    %113 = arith.divf %111, %112 : vector<16x1xf32>
    %114 = vector.broadcast %113 : vector<16x1xf32> to vector<16x32xf32>
    %115 = arith.subf %107, %114 : vector<16x32xf32>
    %116 = arith.mulf %115, %115 : vector<16x32xf32>
    %cst_49 = arith.constant dense<0.000000e+00> : vector<16xf32>
    %117 = vector.multi_reduction <add>, %116, %cst_49 [1] : vector<16x32xf32> to vector<16xf32>
    %118 = vector.shape_cast %117 : vector<16xf32> to vector<16x1xf32>
    %cst_50 = arith.constant 3.200000e+01 : f32
    %119 = vector.broadcast %cst_50 : f32 to vector<16x1xf32>
    %120 = arith.divf %118, %119 : vector<16x1xf32>
    %121 = vector.broadcast %113 : vector<16x1xf32> to vector<16x32xf32>
    %122 = arith.subf %107, %121 : vector<16x32xf32>
    %cst_51 = arith.constant 9.99999974E-6 : f32
    %123 = vector.broadcast %cst_51 : f32 to vector<16x1xf32>
    %124 = arith.addf %120, %123 : vector<16x1xf32>
    %125 = math.rsqrt %124 : vector<16x1xf32>
    %126 = vector.broadcast %125 : vector<16x1xf32> to vector<16x32xf32>
    %127 = arith.mulf %122, %126 : vector<16x32xf32>
    %128 = vector.broadcast %108 : vector<1x32xf32> to vector<16x32xf32>
    %129 = arith.mulf %127, %128 : vector<16x32xf32>
    %130 = vector.broadcast %109 : vector<1x32xf32> to vector<16x32xf32>
    %131 = arith.addf %129, %130 : vector<16x32xf32>
    %132 = arith.truncf %131 : vector<16x32xf32> to vector<16x32xbf16>
    %c0_52 = arith.constant 0 : index
    %c0_53 = arith.constant 0 : index
    %133 = vector.load %arg9[%c0_52, %c0_53] : memref<32x128xbf16, #tpu.memory_space<vmem>>, vector<32x128xbf16>
    %cst_54 = arith.constant dense<0.000000e+00> : vector<16x128xf32>
    %134 = tpu.matmul %132, %133, %cst_54 {dimension_numbers = #tpu.dot_dimension_numbers<[1], [0], [0], [1], [0, 0, 1, 1], [], []>} : vector<16x32xbf16>, vector<32x128xbf16>, vector<16x128xf32> -> vector<16x128xf32>
    %c0_55 = arith.constant 0 : index
    %c0_56 = arith.constant 0 : index
    %135 = vector.load %arg10[%c0_55, %c0_56] : memref<1x128xf32, #tpu.memory_space<vmem>>, vector<1x128xf32>
    %136 = vector.broadcast %135 : vector<1x128xf32> to vector<16x128xf32>
    %137 = arith.addf %134, %136 : vector<16x128xf32>
    %cst_57 = arith.constant 5.000000e-01 : f32
    %138 = vector.broadcast %cst_57 : f32 to vector<16x128xf32>
    %139 = arith.mulf %138, %137 : vector<16x128xf32>
    %cst_58 = arith.constant 0.707106769 : f32
    %140 = vector.broadcast %cst_58 : f32 to vector<16x128xf32>
    %141 = arith.mulf %137, %140 : vector<16x128xf32>
    %142 = math.erf %141 : vector<16x128xf32>
    %cst_59 = arith.constant 1.000000e+00 : f32
    %143 = vector.broadcast %cst_59 : f32 to vector<16x128xf32>
    %144 = arith.addf %143, %142 : vector<16x128xf32>
    %145 = arith.mulf %139, %144 : vector<16x128xf32>
    %146 = arith.truncf %145 : vector<16x128xf32> to vector<16x128xbf16>
    %c0_60 = arith.constant 0 : index
    %c0_61 = arith.constant 0 : index
    %147 = vector.load %arg11[%c0_60, %c0_61] : memref<128x32xbf16, #tpu.memory_space<vmem>>, vector<128x32xbf16>
    %cst_62 = arith.constant dense<0.000000e+00> : vector<16x32xf32>
    %148 = tpu.matmul %146, %147, %cst_62 {dimension_numbers = #tpu.dot_dimension_numbers<[1], [0], [0], [1], [0, 0, 1, 1], [], []>} : vector<16x128xbf16>, vector<128x32xbf16>, vector<16x32xf32> -> vector<16x32xf32>
    %c0_63 = arith.constant 0 : index
    %c0_64 = arith.constant 0 : index
    %149 = vector.load %arg12[%c0_63, %c0_64] : memref<1x32xf32, #tpu.memory_space<vmem>>, vector<1x32xf32>
    %150 = vector.broadcast %149 : vector<1x32xf32> to vector<16x32xf32>
    %151 = arith.addf %148, %150 : vector<16x32xf32>
    %152 = arith.addf %107, %151 : vector<16x32xf32>
    %153 = vector.shape_cast %152 : vector<16x32xf32> to vector<2x8x32xf32>
    %c0_65 = arith.constant 0 : index
    %c0_66 = arith.constant 0 : index
    %c0_67 = arith.constant 0 : index
    %154 = vector.load %arg13[%c0_65, %c0_66, %c0_67] : memref<2x8x32xf32, #tpu.memory_space<vmem>>, vector<2x8x32xf32>
    tpu.vector_store %arg13[%c0_65, %c0_66, %c0_67], %153 {strides = array<i32>} : memref<2x8x32xf32, #tpu.memory_space<vmem>>, vector<2x8x32xf32>,
    return
  }
  func.func @transform_0(%arg0: i32) -> (i32, i32, i32) {
    %c0_i32 = arith.constant 0 : i32
    %c0_i32_0 = arith.constant 0 : i32
    %c0_i32_1 = arith.constant 0 : i32
    return %arg0, %c0_i32, %c0_i32_0 : i32, i32, i32
  }
  func.func @transform_1(%arg0: i32) -> (i32, i32) {
    %c0_i32 = arith.constant 0 : i32
    %c0_i32_0 = arith.constant 0 : i32
    %c0_i32_1 = arith.constant 0 : i32
    return %c0_i32, %c0_i32_0 : i32, i32
  }
  func.func @transform_2(%arg0: i32) -> (i32, i32) {
    %c0_i32 = arith.constant 0 : i32
    %c0_i32_0 = arith.constant 0 : i32
    %c0_i32_1 = arith.constant 0 : i32
    return %c0_i32, %c0_i32_0 : i32, i32
  }
  func.func @transform_3(%arg0: i32) -> (i32, i32, i32, i32) {
    %c0_i32 = arith.constant 0 : i32
    %c0_i32_0 = arith.constant 0 : i32
    %c0_i32_1 = arith.constant 0 : i32
    %c0_i32_2 = arith.constant 0 : i32
    %c0_i32_3 = arith.constant 0 : i32
    return %c0_i32, %c0_i32_0, %c0_i32_1, %c0_i32_2 : i32, i32, i32, i32
  }
  func.func @transform_4(%arg0: i32) -> (i32, i32, i32) {
    %c0_i32 = arith.constant 0 : i32
    %c0_i32_0 = arith.constant 0 : i32
    %c0_i32_1 = arith.constant 0 : i32
    %c0_i32_2 = arith.constant 0 : i32
    return %c0_i32, %c0_i32_0, %c0_i32_1 : i32, i32, i32
  }
  func.func @transform_5(%arg0: i32) -> (i32, i32) {
    %c0_i32 = arith.constant 0 : i32
    %c0_i32_0 = arith.constant 0 : i32
    %c0_i32_1 = arith.constant 0 : i32
    return %c0_i32, %c0_i32_0 : i32, i32
  }
  func.func @transform_6(%arg0: i32) -> (i32, i32) {
    %c0_i32 = arith.constant 0 : i32
    %c0_i32_0 = arith.constant 0 : i32
    %c0_i32_1 = arith.constant 0 : i32
    return %c0_i32, %c0_i32_0 : i32, i32
  }
  func.func @transform_7(%arg0: i32) -> (i32, i32) {
    %c0_i32 = arith.constant 0 : i32
    %c0_i32_0 = arith.constant 0 : i32
    %c0_i32_1 = arith.constant 0 : i32
    return %c0_i32, %c0_i32_0 : i32, i32
  }
  func.func @transform_8(%arg0: i32) -> (i32, i32) {
    %c0_i32 = arith.constant 0 : i32
    %c0_i32_0 = arith.constant 0 : i32
    %c0_i32_1 = arith.constant 0 : i32
    return %c0_i32, %c0_i32_0 : i32, i32
  }
  func.func @transform_9(%arg0: i32) -> (i32, i32) {
    %c0_i32 = arith.constant 0 : i32
    %c0_i32_0 = arith.constant 0 : i32
    %c0_i32_1 = arith.constant 0 : i32
    return %c0_i32, %c0_i32_0 : i32, i32
  }
  func.func @transform_10(%arg0: i32) -> (i32, i32) {
    %c0_i32 = arith.constant 0 : i32
    %c0_i32_0 = arith.constant 0 : i32
    %c0_i32_1 = arith.constant 0 : i32
    return %c0_i32, %c0_i32_0 : i32, i32
  }
  func.func @transform_11(%arg0: i32) -> (i32, i32) {
    %c0_i32 = arith.constant 0 : i32
    %c0_i32_0 = arith.constant 0 : i32
    %c0_i32_1 = arith.constant 0 : i32
    return %c0_i32, %c0_i32_0 : i32, i32
  }
  func.func @transform_12(%arg0: i32) -> (i32, i32, i32) {
    %c0_i32 = arith.constant 0 : i32
    %c0_i32_0 = arith.constant 0 : i32
    %c0_i32_1 = arith.constant 0 : i32
    return %arg0, %c0_i32, %c0_i32_0 : i32, i32, i32
  }
}

</mosaic_0001>

<llo_original>
// kernel: tpu_custom_call.1
$region0: #{tpu_custom_call.1}
  #allocation0 [shape = 'u32[]', space=smem, size = 0x4, offset = 0x4, fixed_abs, tag = 'smem constant byte address 0x4 - core index']
  #allocation1 [shape = 'u32[144,128]{1,0:T(1,128)}', space=vmem, size = 0x12000, scoped, tag = 'internal scratch']
  %s0 = inlined_call_operand.vmem [shape: f32[2,8,32], index: 0, kind: input, shape index: {}]
  %s1 = inlined_call_operand.vmem [shape: f32[1,32], index: 1, kind: input, shape index: {}]
  %s2 = inlined_call_operand.vmem [shape: f32[1,32], index: 2, kind: input, shape index: {}]
  %s3 = inlined_call_operand.vmem [shape: bf16[3,4,32,8], index: 3, kind: input, shape index: {}]
  %s4 = inlined_call_operand.vmem [shape: bf16[4,8,32], index: 4, kind: input, shape index: {}]
  %s5 = inlined_call_operand.vmem [shape: f32[1,32], index: 5, kind: input, shape index: {}]
  %s6 = inlined_call_operand.vmem [shape: f32[1,32], index: 6, kind: input, shape index: {}]
  %s7 = inlined_call_operand.vmem [shape: f32[1,32], index: 7, kind: input, shape index: {}]
  %s8 = inlined_call_operand.vmem [shape: bf16[32,128], index: 8, kind: input, shape index: {}]
  %s9 = inlined_call_operand.vmem [shape: f32[1,128], index: 9, kind: input, shape index: {}]
  %s10 = inlined_call_operand.vmem [shape: bf16[128,32], index: 10, kind: input, shape index: {}]
  %s11 = inlined_call_operand.vmem [shape: f32[1,32], index: 11, kind: input, shape index: {}]
  %s12 = inlined_call_operand.hbm [shape: f32[2,8,32], index: 12, kind: output, shape index: {}]
  %s13 = sld [smem:[#allocation0]]
  $region58: #{tpu_custom_call.1} parent=0
    _
  %s15 = ssub.s32 1, %s13
  %s16 = scalar_select 0, %s15, %s13
  $region1: #{tpu_custom_call.1} parent=0
    #allocation2 [shape = 'u8[8192]{0}', space=vmem, size = 0x2000, scoped, tag = 'output window, operand 0, single buffered']
    #allocation3 [shape = 's32[1]{0}', space=sflag, size = 0x4, scoped, tag = 'scoped memory for tpu_custom_call.1']
    %17 = vsyncpa [#allocation3], 0
    // Predicated region
    $region2: #{tpu_custom_call.1} parent=1 // pred_check
      _
    $region3: #{tpu_custom_call.1} parent=1 // pred_check_branch
      %19 = sbr.rel (0) target = $region5
    $region4: #{tpu_custom_call.1} parent=1 // pred_region
      _
    $region5: #{tpu_custom_call.1} parent=1 // pred_fallthru
      _
    // Predicated region
    $region6: #{tpu_custom_call.1} parent=1 // pred_check
      _
    $region7: #{tpu_custom_call.1} parent=1 // pred_check_branch
      %21 = sbr.rel (0) target = $region9
    $region8: #{tpu_custom_call.1} parent=1 // pred_region
      _
    $region9: #{tpu_custom_call.1} parent=1 // pred_fallthru
      _
    // Predicated region
    $region10: #{tpu_custom_call.1} parent=1 // pred_check
      _
    $region11: #{tpu_custom_call.1} parent=1 // pred_check_branch
      %23 = sbr.rel (0) target = $region13
    $region12: #{tpu_custom_call.1} parent=1 // pred_region
      _
    $region13: #{tpu_custom_call.1} parent=1 // pred_fallthru
      _
    // Predicated region
    $region14: #{tpu_custom_call.1} parent=1 // pred_check
      _
    $region15: #{tpu_custom_call.1} parent=1 // pred_check_branch
      %25 = sbr.rel (0) target = $region17
    $region16: #{tpu_custom_call.1} parent=1 // pred_region
      _
    $region17: #{tpu_custom_call.1} parent=1 // pred_fallthru
      _
    // Predicated region
    $region18: #{tpu_custom_call.1} parent=1 // pred_check
      _
    $region19: #{tpu_custom_call.1} parent=1 // pred_check_branch
      %27 = sbr.rel (0) target = $region21
    $region20: #{tpu_custom_call.1} parent=1 // pred_region
      _
    $region21: #{tpu_custom_call.1} parent=1 // pred_fallthru
      _
    // Predicated region
    $region22: #{tpu_custom_call.1} parent=1 // pred_check
      _
    $region23: #{tpu_custom_call.1} parent=1 // pred_check_branch
      %29 = sbr.rel (0) target = $region25
    $region24: #{tpu_custom_call.1} parent=1 // pred_region
      _
    $region25: #{tpu_custom_call.1} parent=1 // pred_fallthru
      _
    // Predicated region
    $region26: #{tpu_custom_call.1} parent=1 // pred_check
      _
    $region27: #{tpu_custom_call.1} parent=1 // pred_check_branch
      %31 = sbr.rel (0) target = $region29
    $region28: #{tpu_custom_call.1} parent=1 // pred_region
      _
    $region29: #{tpu_custom_call.1} parent=1 // pred_fallthru
      _
    // Predicated region
    $region30: #{tpu_custom_call.1} parent=1 // pred_check
      _
    $region31: #{tpu_custom_call.1} parent=1 // pred_check_branch
      %33 = sbr.rel (0) target = $region33
    $region32: #{tpu_custom_call.1} parent=1 // pred_region
      _
    $region33: #{tpu_custom_call.1} parent=1 // pred_fallthru
      _
    // Predicated region
    $region34: #{tpu_custom_call.1} parent=1 // pred_check
      _
    $region35: #{tpu_custom_call.1} parent=1 // pred_check_branch
      %35 = sbr.rel (0) target = $region37
    $region36: #{tpu_custom_call.1} parent=1 // pred_region
      _
    $region37: #{tpu_custom_call.1} parent=1 // pred_fallthru
      _
    // Predicated region
    $region38: #{tpu_custom_call.1} parent=1 // pred_check
      _
    $region39: #{tpu_custom_call.1} parent=1 // pred_check_branch
      %37 = sbr.rel (0) target = $region41
    $region40: #{tpu_custom_call.1} parent=1 // pred_region
      _
    $region41: #{tpu_custom_call.1} parent=1 // pred_fallthru
      _
    // Predicated region
    $region42: #{tpu_custom_call.1} parent=1 // pred_check
      _
    $region43: #{tpu_custom_call.1} parent=1 // pred_check_branch
      %39 = sbr.rel (0) target = $region45
    $region44: #{tpu_custom_call.1} parent=1 // pred_region
      _
    $region45: #{tpu_custom_call.1} parent=1 // pred_fallthru
      _
    // Predicated region
    $region46: #{tpu_custom_call.1} parent=1 // pred_check
      _
    $region47: #{tpu_custom_call.1} parent=1 // pred_check_branch
      %41 = sbr.rel (0) target = $region49
    $region48: #{tpu_custom_call.1} parent=1 // pred_region
      _
    $region49: #{tpu_custom_call.1} parent=1 // pred_fallthru
      _
    %v43 = vld [vmem:[%s0] sm:$0xff]
    %v44 = vld [vmem:[%s0 + $0x8] sm:$0xff]
    %v45 = vld [vmem:[%s1] sm:$0x1]
    %v46 = vld [vmem:[%s2] sm:$0x1]
    %vm47 = vcmask 261120
    %v48 = vsel %vm47, %v43, 0.0
    %49 = vadd.xlane.f32.xlu0 %v48
    %v50 = vpop.xlane.xlu0 %49
    %v51 = vsel %vm47, %v44, 0.0
    %52 = vadd.xlane.f32.xlu0 %v51
    %v53 = vpop.xlane.xlu0 %52
    %v54 = vrcp.pop 32.0
    %v55 = vmul.f32 %v50, %v54
    %v56 = vmul.f32 %v53, %v54
    %v57 = vsub.f32 %v43, %v55
    %v58 = vsub.f32 %v44, %v56
    %v59 = vmul.f32 %v57, %v57
    %v60 = vmul.f32 %v58, %v58
    %v61 = vsel %vm47, %v59, 0.0
    %62 = vadd.xlane.f32.xlu0 %v61
    %v63 = vpop.xlane.xlu0 %62
    %v64 = vsel %vm47, %v60, 0.0
    %65 = vadd.xlane.f32.xlu0 %v64
    %v66 = vpop.xlane.xlu0 %65
    %v67 = vmul.f32 %v63, %v54
    %v68 = vmul.f32 %v66, %v54
    %v69 = vadd.f32 %v67, 1e-05
    %v70 = vadd.f32 %v68, 1e-05
    %v71 = vrsqrt.pop %v69
    %v72 = vrsqrt.pop %v70
    %v73 = vmul.f32 %v57, %v71
    %v74 = vmul.f32 %v58, %v72
    %v76 = vlaneseq
    %v77 = vshrl.u32 %v76, 7
    %v78 = vsub.s32 0, %v77
    %v79 = vrot.slane %v45, %v78
    %v81 = vmul.f32 %v73, %v79
    %v82 = vmul.f32 %v74, %v79
    %v84 = vlaneseq
    %v85 = vshrl.u32 %v84, 7
    %v86 = vsub.s32 0, %v85
    %v87 = vrot.slane %v46, %v86
    %v89 = vadd.f32 %v81, %v87
    %v90 = vadd.f32 %v82, %v87
    %v91 = vpack.c.bf16 %v89, %v89
    %v92 = vpack.c.bf16 %v90, %v90
    %v93 = vld [vmem:[%s3] sm:$0xf]
    %v94 = vld [vmem:[%s3 + $0x4] sm:$0xf]
    %v95 = vld [vmem:[%s3 + $0x8] sm:$0xf]
    %v96 = vld [vmem:[%s3 + $0xc] sm:$0xf]
    %v97 = vld [vmem:[%s3 + $0x10] sm:$0xf]
    %v98 = vld [vmem:[%s3 + $0x14] sm:$0xf]
    %v99 = vld [vmem:[%s3 + $0x18] sm:$0xf]
    %v100 = vld [vmem:[%s3 + $0x1c] sm:$0xf]
    %v101 = vld [vmem:[%s3 + $0x20] sm:$0xf]
    %v102 = vld [vmem:[%s3 + $0x24] sm:$0xf]
    %v103 = vld [vmem:[%s3 + $0x28] sm:$0xf]
    %v104 = vld [vmem:[%s3 + $0x2c] sm:$0xf]
    %v105 = vld [vmem:[%s3 + $0x30] sm:$0xf]
    %v106 = vld [vmem:[%s3 + $0x34] sm:$0xf]
    %v107 = vld [vmem:[%s3 + $0x38] sm:$0xf]
    %v108 = vld [vmem:[%s3 + $0x3c] sm:$0xf]
    %s109 = scalar_lea.vmem %s3, 64
    %v110 = vld [vmem:[%s109] sm:$0xf]
    %v111 = vld [vmem:[%s109 + $0x4] sm:$0xf]
    %v112 = vld [vmem:[%s109 + $0x8] sm:$0xf]
    %v113 = vld [vmem:[%s109 + $0xc] sm:$0xf]
    %v114 = vld [vmem:[%s109 + $0x10] sm:$0xf]
    %v115 = vld [vmem:[%s109 + $0x14] sm:$0xf]
    %v116 = vld [vmem:[%s109 + $0x18] sm:$0xf]
    %v117 = vld [vmem:[%s109 + $0x1c] sm:$0xf]
    %v118 = vld [vmem:[%s109 + $0x20] sm:$0xf]
    %v119 = vld [vmem:[%s109 + $0x24] sm:$0xf]
    %v120 = vld [vmem:[%s109 + $0x28] sm:$0xf]
    %v121 = vld [vmem:[%s109 + $0x2c] sm:$0xf]
    %v122 = vld [vmem:[%s109 + $0x30] sm:$0xf]
    %v123 = vld [vmem:[%s109 + $0x34] sm:$0xf]
    %v124 = vld [vmem:[%s109 + $0x38] sm:$0xf]
    %v125 = vld [vmem:[%s109 + $0x3c] sm:$0xf]
    %s126 = scalar_lea.vmem %s3, 128
    %v127 = vld [vmem:[%s126] sm:$0xf]
    %v128 = vld [vmem:[%s126 + $0x4] sm:$0xf]
    %v129 = vld [vmem:[%s126 + $0x8] sm:$0xf]
    %v130 = vld [vmem:[%s126 + $0xc] sm:$0xf]
    %v131 = vld [vmem:[%s126 + $0x10] sm:$0xf]
    %v132 = vld [vmem:[%s126 + $0x14] sm:$0xf]
    %v133 = vld [vmem:[%s126 + $0x18] sm:$0xf]
    %v134 = vld [vmem:[%s126 + $0x1c] sm:$0xf]
    %v135 = vld [vmem:[%s126 + $0x20] sm:$0xf]
    %v136 = vld [vmem:[%s126 + $0x24] sm:$0xf]
    %v137 = vld [vmem:[%s126 + $0x28] sm:$0xf]
    %v138 = vld [vmem:[%s126 + $0x2c] sm:$0xf]
    %v139 = vld [vmem:[%s126 + $0x30] sm:$0xf]
    %v140 = vld [vmem:[%s126 + $0x34] sm:$0xf]
    %v141 = vld [vmem:[%s126 + $0x38] sm:$0xf]
    %v142 = vld [vmem:[%s126 + $0x3c] sm:$0xf]
    %v147 = vunpack.c.l.b16 %v93
    %v148 = vunpack.c.l.b16 %v94
    %v149 = vunpack.c.l.b16 %v95
    %v150 = vunpack.c.l.b16 %v96
    %v151 = vpack.c.b16 %v148, %v147
    %v152 = vpack.c.b16 %v150, %v149
    %v156 = vsel %vm47, %v91, 0
    %158 = vmatprep.subr.bf16.mxu0 0
    %159 = vmatpush1.bf16.msra.mxu0 0
    %160 = vmatprep.subr.bf16.mxu0 0
    %161 = vmatpush1.bf16.msra.mxu0 0
    %162 = vmatprep.subr.bf16.mxu0 0
    %163 = vmatpush1.bf16.msra.mxu0 0
    %164 = vmatprep.subr.bf16.mxu0 0
    %165 = vmatpush1.bf16.msra.mxu0 0
    %166 = vmatprep.subr.bf16.mxu0 0
    %167 = vmatpush1.bf16.msra.mxu0 0
    %168 = vmatprep.subr.bf16.mxu0 0
    %169 = vmatpush1.bf16.msra.mxu0 0
    %170 = vmatprep.subr.bf16.mxu0 0
    %171 = vmatpush1.bf16.msra.mxu0 %v152
    %172 = vmatprep.subr.bf16.mxu0 0
    %173 = vmatpush1.bf16.msra.mxu0 %v151
    %174 = vmatprep.subr.bf16.mxu0 0
    %175 = vmatpush2.bf16.msra.mxu0 0
    %176 = vmatprep.subr.bf16.mxu0 0
    %177 = vmatpush2.bf16.msra.mxu0 0
    %178 = vmatprep.subr.bf16.mxu0 0
    %179 = vmatpush2.bf16.msra.mxu0 0
    %180 = vmatprep.subr.bf16.mxu0 0
    %181 = vmatpush2.bf16.msra.mxu0 0
    %182 = vmatprep.subr.bf16.mxu0 0
    %183 = vmatpush2.bf16.msra.mxu0 0
    %184 = vmatprep.subr.bf16.mxu0 0
    %185 = vmatpush2.bf16.msra.mxu0 0
    %186 = vmatprep.subr.bf16.mxu0 0
    %187 = vmatpush2.bf16.msra.mxu0 0
    %188 = vmatprep.subr.bf16.mxu0 0
    %189 = vmatpush2.bf16.msra.mxu0 0
    %190 = vmatprep.mubr.bf16.mxu0 0
    %191 = vmatmul.mubr.bf16.gmra.mxu0 %v156
    %v192 = vpop.f32.mrf.mxu0
    %v193 = vadd.f32 0.0, %v192
    %v194 = vpop.f32.mrf.mxu0
    %v195 = vpop.f32.mrf.mxu0
    %v196 = vpop.f32.mrf.mxu0
    %197 = vdwg.mxu0
    %v202 = vunpack.c.l.b16 %v97
    %v203 = vunpack.c.l.b16 %v98
    %v204 = vunpack.c.l.b16 %v99
    %v205 = vunpack.c.l.b16 %v100
    %v206 = vpack.c.b16 %v203, %v202
    %v207 = vpack.c.b16 %v205, %v204
    %210 = vmatprep.subr.bf16.mxu0 0
    %211 = vmatpush1.bf16.msra.mxu0 0
    %212 = vmatprep.subr.bf16.mxu0 0
    %213 = vmatpush1.bf16.msra.mxu0 0
    %214 = vmatprep.subr.bf16.mxu0 0
    %215 = vmatpush1.bf16.msra.mxu0 0
    %216 = vmatprep.subr.bf16.mxu0 0
    %217 = vmatpush1.bf16.msra.mxu0 0
    %218 = vmatprep.subr.bf16.mxu0 0
    %219 = vmatpush1.bf16.msra.mxu0 0
    %220 = vmatprep.subr.bf16.mxu0 0
    %221 = vmatpush1.bf16.msra.mxu0 0
    %222 = vmatprep.subr.bf16.mxu0 0
    %223 = vmatpush1.bf16.msra.mxu0 %v207
    %224 = vmatprep.subr.bf16.mxu0 0
    %225 = vmatpush1.bf16.msra.mxu0 %v206
    %226 = vmatprep.subr.bf16.mxu0 0
    %227 = vmatpush2.bf16.msra.mxu0 0
    %228 = vmatprep.subr.bf16.mxu0 0
    %229 = vmatpush2.bf16.msra.mxu0 0
    %230 = vmatprep.subr.bf16.mxu0 0
    %231 = vmatpush2.bf16.msra.mxu0 0
    %232 = vmatprep.subr.bf16.mxu0 0
    %233 = vmatpush2.bf16.msra.mxu0 0
    %234 = vmatprep.subr.bf16.mxu0 0
    %235 = vmatpush2.bf16.msra.mxu0 0
    %236 = vmatprep.subr.bf16.mxu0 0
    %237 = vmatpush2.bf16.msra.mxu0 0
    %238 = vmatprep.subr.bf16.mxu0 0
    %239 = vmatpush2.bf16.msra.mxu0 0
    %240 = vmatprep.subr.bf16.mxu0 0
    %241 = vmatpush2.bf16.msra.mxu0 0
    %242 = vmatprep.mubr.bf16.mxu0 0
    %243 = vmatmul.mubr.bf16.gmra.mxu0 %v156
    %v244 = vpop.f32.mrf.mxu0
    %v245 = vadd.f32 0.0, %v244
    %v246 = vpop.f32.mrf.mxu0
    %v247 = vpop.f32.mrf.mxu0
    %v248 = vpop.f32.mrf.mxu0
    %249 = vdwg.mxu0
    %v254 = vunpack.c.l.b16 %v101
    %v255 = vunpack.c.l.b16 %v102
    %v256 = vunpack.c.l.b16 %v103
    %v257 = vunpack.c.l.b16 %v104
    %v258 = vpack.c.b16 %v255, %v254
    %v259 = vpack.c.b16 %v257, %v256
    %262 = vmatprep.subr.bf16.mxu0 0
    %263 = vmatpush1.bf16.msra.mxu0 0
    %264 = vmatprep.subr.bf16.mxu0 0
    %265 = vmatpush1.bf16.msra.mxu0 0
    %266 = vmatprep.subr.bf16.mxu0 0
    %267 = vmatpush1.bf16.msra.mxu0 0
    %268 = vmatprep.subr.bf16.mxu0 0
    %269 = vmatpush1.bf16.msra.mxu0 0
    %270 = vmatprep.subr.bf16.mxu0 0
    %271 = vmatpush1.bf16.msra.mxu0 0
    %272 = vmatprep.subr.bf16.mxu0 0
    %273 = vmatpush1.bf16.msra.mxu0 0
    %274 = vmatprep.subr.bf16.mxu0 0
    %275 = vmatpush1.bf16.msra.mxu0 %v259
    %276 = vmatprep.subr.bf16.mxu0 0
    %277 = vmatpush1.bf16.msra.mxu0 %v258
    %278 = vmatprep.subr.bf16.mxu0 0
    %279 = vmatpush2.bf16.msra.mxu0 0
    %280 = vmatprep.subr.bf16.mxu0 0
    %281 = vmatpush2.bf16.msra.mxu0 0
    %282 = vmatprep.subr.bf16.mxu0 0
    %283 = vmatpush2.bf16.msra.mxu0 0
    %284 = vmatprep.subr.bf16.mxu0 0
    %285 = vmatpush2.bf16.msra.mxu0 0
    %286 = vmatprep.subr.bf16.mxu0 0
    %287 = vmatpush2.bf16.msra.mxu0 0
    %288 = vmatprep.subr.bf16.mxu0 0
    %289 = vmatpush2.bf16.msra.mxu0 0
    %290 = vmatprep.subr.bf16.mxu0 0
    %291 = vmatpush2.bf16.msra.mxu0 0
    %292 = vmatprep.subr.bf16.mxu0 0
    %293 = vmatpush2.bf16.msra.mxu0 0
    %294 = vmatprep.mubr.bf16.mxu0 0
    %295 = vmatmul.mubr.bf16.gmra.mxu0 %v156
    %v296 = vpop.f32.mrf.mxu0
    %v297 = vadd.f32 0.0, %v296
    %v298 = vpop.f32.mrf.mxu0
    %v299 = vpop.f32.mrf.mxu0
    %v300 = vpop.f32.mrf.mxu0
    %301 = vdwg.mxu0
    %v306 = vunpack.c.l.b16 %v105
    %v307 = vunpack.c.l.b16 %v106
    %v308 = vunpack.c.l.b16 %v107
    %v309 = vunpack.c.l.b16 %v108
    %v310 = vpack.c.b16 %v307, %v306
    %v311 = vpack.c.b16 %v309, %v308
    %314 = vmatprep.subr.bf16.mxu0 0
    %315 = vmatpush1.bf16.msra.mxu0 0
    %316 = vmatprep.subr.bf16.mxu0 0
    %317 = vmatpush1.bf16.msra.mxu0 0
    %318 = vmatprep.subr.bf16.mxu0 0
    %319 = vmatpush1.bf16.msra.mxu0 0
    %320 = vmatprep.subr.bf16.mxu0 0
    %321 = vmatpush1.bf16.msra.mxu0 0
    %322 = vmatprep.subr.bf16.mxu0 0
    %323 = vmatpush1.bf16.msra.mxu0 0
    %324 = vmatprep.subr.bf16.mxu0 0
    %325 = vmatpush1.bf16.msra.mxu0 0
    %326 = vmatprep.subr.bf16.mxu0 0
    %327 = vmatpush1.bf16.msra.mxu0 %v311
    %328 = vmatprep.subr.bf16.mxu0 0
    %329 = vmatpush1.bf16.msra.mxu0 %v310
    %330 = vmatprep.subr.bf16.mxu0 0
    %331 = vmatpush2.bf16.msra.mxu0 0
    %332 = vmatprep.subr.bf16.mxu0 0
    %333 = vmatpush2.bf16.msra.mxu0 0
    %334 = vmatprep.subr.bf16.mxu0 0
    %335 = vmatpush2.bf16.msra.mxu0 0
    %336 = vmatprep.subr.bf16.mxu0 0
    %337 = vmatpush2.bf16.msra.mxu0 0
    %338 = vmatprep.subr.bf16.mxu0 0
    %339 = vmatpush2.bf16.msra.mxu0 0
    %340 = vmatprep.subr.bf16.mxu0 0
    %341 = vmatpush2.bf16.msra.mxu0 0
    %342 = vmatprep.subr.bf16.mxu0 0
    %343 = vmatpush2.bf16.msra.mxu0 0
    %344 = vmatprep.subr.bf16.mxu0 0
    %345 = vmatpush2.bf16.msra.mxu0 0
    %346 = vmatprep.mubr.bf16.mxu0 0
    %347 = vmatmul.mubr.bf16.gmra.mxu0 %v156
    %v348 = vpop.f32.mrf.mxu0
    %v349 = vadd.f32 0.0, %v348
    %v350 = vpop.f32.mrf.mxu0
    %v351 = vpop.f32.mrf.mxu0
    %v352 = vpop.f32.mrf.mxu0
    %353 = vdwg.mxu0
    %v355 = vsel %vm47, %v92, 0
    %357 = vmatprep.subr.bf16.mxu0 0
    %358 = vmatpush1.bf16.msra.mxu0 0
    %359 = vmatprep.subr.bf16.mxu0 0
    %360 = vmatpush1.bf16.msra.mxu0 0
    %361 = vmatprep.subr.bf16.mxu0 0
    %362 = vmatpush1.bf16.msra.mxu0 0
    %363 = vmatprep.subr.bf16.mxu0 0
    %364 = vmatpush1.bf16.msra.mxu0 0
    %365 = vmatprep.subr.bf16.mxu0 0
    %366 = vmatpush1.bf16.msra.mxu0 0
    %367 = vmatprep.subr.bf16.mxu0 0
    %368 = vmatpush1.bf16.msra.mxu0 0
    %369 = vmatprep.subr.bf16.mxu0 0
    %370 = vmatpush1.bf16.msra.mxu0 %v152
    %371 = vmatprep.subr.bf16.mxu0 0
    %372 = vmatpush1.bf16.msra.mxu0 %v151
    %373 = vmatprep.subr.bf16.mxu0 0
    %374 = vmatpush2.bf16.msra.mxu0 0
    %375 = vmatprep.subr.bf16.mxu0 0
    %376 = vmatpush2.bf16.msra.mxu0 0
    %377 = vmatprep.subr.bf16.mxu0 0
    %378 = vmatpush2.bf16.msra.mxu0 0
    %379 = vmatprep.subr.bf16.mxu0 0
    %380 = vmatpush2.bf16.msra.mxu0 0
    %381 = vmatprep.subr.bf16.mxu0 0
    %382 = vmatpush2.bf16.msra.mxu0 0
    %383 = vmatprep.subr.bf16.mxu0 0
    %384 = vmatpush2.bf16.msra.mxu0 0
    %385 = vmatprep.subr.bf16.mxu0 0
    %386 = vmatpush2.bf16.msra.mxu0 0
    %387 = vmatprep.subr.bf16.mxu0 0
    %388 = vmatpush2.bf16.msra.mxu0 0
    %389 = vmatprep.mubr.bf16.mxu0 0
    %390 = vmatmul.mubr.bf16.gmra.mxu0 %v355
    %v391 = vpop.f32.mrf.mxu0
    %v392 = vadd.f32 0.0, %v391
    %v393 = vpop.f32.mrf.mxu0
    %v394 = vpop.f32.mrf.mxu0
    %v395 = vpop.f32.mrf.mxu0
    %396 = vdwg.mxu0
    %397 = vmatprep.subr.bf16.mxu0 0
    %398 = vmatpush1.bf16.msra.mxu0 0
    %399 = vmatprep.subr.bf16.mxu0 0
    %400 = vmatpush1.bf16.msra.mxu0 0
    %401 = vmatprep.subr.bf16.mxu0 0
    %402 = vmatpush1.bf16.msra.mxu0 0
    %403 = vmatprep.subr.bf16.mxu0 0
    %404 = vmatpush1.bf16.msra.mxu0 0
    %405 = vmatprep.subr.bf16.mxu0 0
    %406 = vmatpush1.bf16.msra.mxu0 0
    %407 = vmatprep.subr.bf16.mxu0 0
    %408 = vmatpush1.bf16.msra.mxu0 0
    %409 = vmatprep.subr.bf16.mxu0 0
    %410 = vmatpush1.bf16.msra.mxu0 %v207
    %411 = vmatprep.subr.bf16.mxu0 0
    %412 = vmatpush1.bf16.msra.mxu0 %v206
    %413 = vmatprep.subr.bf16.mxu0 0
    %414 = vmatpush2.bf16.msra.mxu0 0
    %415 = vmatprep.subr.bf16.mxu0 0
    %416 = vmatpush2.bf16.msra.mxu0 0
    %417 = vmatprep.subr.bf16.mxu0 0
    %418 = vmatpush2.bf16.msra.mxu0 0
    %419 = vmatprep.subr.bf16.mxu0 0
    %420 = vmatpush2.bf16.msra.mxu0 0
    %421 = vmatprep.subr.bf16.mxu0 0
    %422 = vmatpush2.bf16.msra.mxu0 0
    %423 = vmatprep.subr.bf16.mxu0 0
    %424 = vmatpush2.bf16.msra.mxu0 0
    %425 = vmatprep.subr.bf16.mxu0 0
    %426 = vmatpush2.bf16.msra.mxu0 0
    %427 = vmatprep.subr.bf16.mxu0 0
    %428 = vmatpush2.bf16.msra.mxu0 0
    %429 = vmatprep.mubr.bf16.mxu0 0
    %430 = vmatmul.mubr.bf16.gmra.mxu0 %v355
    %v431 = vpop.f32.mrf.mxu0
    %v432 = vadd.f32 0.0, %v431
    %v433 = vpop.f32.mrf.mxu0
    %v434 = vpop.f32.mrf.mxu0
    %v435 = vpop.f32.mrf.mxu0
    %436 = vdwg.mxu0
    %437 = vmatprep.subr.bf16.mxu0 0
    %438 = vmatpush1.bf16.msra.mxu0 0
    %439 = vmatprep.subr.bf16.mxu0 0
    %440 = vmatpush1.bf16.msra.mxu0 0
    %441 = vmatprep.subr.bf16.mxu0 0
    %442 = vmatpush1.bf16.msra.mxu0 0
    %443 = vmatprep.subr.bf16.mxu0 0
    %444 = vmatpush1.bf16.msra.mxu0 0
    %445 = vmatprep.subr.bf16.mxu0 0
    %446 = vmatpush1.bf16.msra.mxu0 0
    %447 = vmatprep.subr.bf16.mxu0 0
    %448 = vmatpush1.bf16.msra.mxu0 0
    %449 = vmatprep.subr.bf16.mxu0 0
    %450 = vmatpush1.bf16.msra.mxu0 %v259
    %451 = vmatprep.subr.bf16.mxu0 0
    %452 = vmatpush1.bf16.msra.mxu0 %v258
    %453 = vmatprep.subr.bf16.mxu0 0
    %454 = vmatpush2.bf16.msra.mxu0 0
    %455 = vmatprep.subr.bf16.mxu0 0
    %456 = vmatpush2.bf16.msra.mxu0 0
    %457 = vmatprep.subr.bf16.mxu0 0
    %458 = vmatpush2.bf16.msra.mxu0 0
    %459 = vmatprep.subr.bf16.mxu0 0
    %460 = vmatpush2.bf16.msra.mxu0 0
    %461 = vmatprep.subr.bf16.mxu0 0
    %462 = vmatpush2.bf16.msra.mxu0 0
    %463 = vmatprep.subr.bf16.mxu0 0
    %464 = vmatpush2.bf16.msra.mxu0 0
    %465 = vmatprep.subr.bf16.mxu0 0
    %466 = vmatpush2.bf16.msra.mxu0 0
    %467 = vmatprep.subr.bf16.mxu0 0
    %468 = vmatpush2.bf16.msra.mxu0 0
    %469 = vmatprep.mubr.bf16.mxu0 0
    %470 = vmatmul.mubr.bf16.gmra.mxu0 %v355
    %v471 = vpop.f32.mrf.mxu0
    %v472 = vadd.f32 0.0, %v471
    %v473 = vpop.f32.mrf.mxu0
    %v474 = vpop.f32.mrf.mxu0
    %v475 = vpop.f32.mrf.mxu0
    %476 = vdwg.mxu0
    %477 = vmatprep.subr.bf16.mxu0 0
    %478 = vmatpush1.bf16.msra.mxu0 0
    %479 = vmatprep.subr.bf16.mxu0 0
    %480 = vmatpush1.bf16.msra.mxu0 0
    %481 = vmatprep.subr.bf16.mxu0 0
    %482 = vmatpush1.bf16.msra.mxu0 0
    %483 = vmatprep.subr.bf16.mxu0 0
    %484 = vmatpush1.bf16.msra.mxu0 0
    %485 = vmatprep.subr.bf16.mxu0 0
    %486 = vmatpush1.bf16.msra.mxu0 0
    %487 = vmatprep.subr.bf16.mxu0 0
    %488 = vmatpush1.bf16.msra.mxu0 0
    %489 = vmatprep.subr.bf16.mxu0 0
    %490 = vmatpush1.bf16.msra.mxu0 %v311
    %491 = vmatprep.subr.bf16.mxu0 0
    %492 = vmatpush1.bf16.msra.mxu0 %v310
    %493 = vmatprep.subr.bf16.mxu0 0
    %494 = vmatpush2.bf16.msra.mxu0 0
    %495 = vmatprep.subr.bf16.mxu0 0
    %496 = vmatpush2.bf16.msra.mxu0 0
    %497 = vmatprep.subr.bf16.mxu0 0
    %498 = vmatpush2.bf16.msra.mxu0 0
    %499 = vmatprep.subr.bf16.mxu0 0
    %500 = vmatpush2.bf16.msra.mxu0 0
    %501 = vmatprep.subr.bf16.mxu0 0
    %502 = vmatpush2.bf16.msra.mxu0 0
    %503 = vmatprep.subr.bf16.mxu0 0
    %504 = vmatpush2.bf16.msra.mxu0 0
    %505 = vmatprep.subr.bf16.mxu0 0
    %506 = vmatpush2.bf16.msra.mxu0 0
    %507 = vmatprep.subr.bf16.mxu0 0
    %508 = vmatpush2.bf16.msra.mxu0 0
    %509 = vmatprep.mubr.bf16.mxu0 0
    %510 = vmatmul.mubr.bf16.gmra.mxu0 %v355
    %v511 = vpop.f32.mrf.mxu0
    %v512 = vadd.f32 0.0, %v511
    %v513 = vpop.f32.mrf.mxu0
    %v514 = vpop.f32.mrf.mxu0
    %v515 = vpop.f32.mrf.mxu0
    %516 = vdwg.mxu0
    %v521 = vunpack.c.l.b16 %v110
    %v522 = vunpack.c.l.b16 %v111
    %v523 = vunpack.c.l.b16 %v112
    %v524 = vunpack.c.l.b16 %v113
    %v525 = vpack.c.b16 %v522, %v521
    %v526 = vpack.c.b16 %v524, %v523
    %529 = vmatprep.subr.bf16.mxu0 0
    %530 = vmatpush1.bf16.msra.mxu0 0
    %531 = vmatprep.subr.bf16.mxu0 0
    %532 = vmatpush1.bf16.msra.mxu0 0
    %533 = vmatprep.subr.bf16.mxu0 0
    %534 = vmatpush1.bf16.msra.mxu0 0
    %535 = vmatprep.subr.bf16.mxu0 0
    %536 = vmatpush1.bf16.msra.mxu0 0
    %537 = vmatprep.subr.bf16.mxu0 0
    %538 = vmatpush1.bf16.msra.mxu0 0
    %539 = vmatprep.subr.bf16.mxu0 0
    %540 = vmatpush1.bf16.msra.mxu0 0
    %541 = vmatprep.subr.bf16.mxu0 0
    %542 = vmatpush1.bf16.msra.mxu0 %v526
    %543 = vmatprep.subr.bf16.mxu0 0
    %544 = vmatpush1.bf16.msra.mxu0 %v525
    %545 = vmatprep.subr.bf16.mxu0 0
    %546 = vmatpush2.bf16.msra.mxu0 0
    %547 = vmatprep.subr.bf16.mxu0 0
    %548 = vmatpush2.bf16.msra.mxu0 0
    %549 = vmatprep.subr.bf16.mxu0 0
    %550 = vmatpush2.bf16.msra.mxu0 0
    %551 = vmatprep.subr.bf16.mxu0 0
    %552 = vmatpush2.bf16.msra.mxu0 0
    %553 = vmatprep.subr.bf16.mxu0 0
    %554 = vmatpush2.bf16.msra.mxu0 0
    %555 = vmatprep.subr.bf16.mxu0 0
    %556 = vmatpush2.bf16.msra.mxu0 0
    %557 = vmatprep.subr.bf16.mxu0 0
    %558 = vmatpush2.bf16.msra.mxu0 0
    %559 = vmatprep.subr.bf16.mxu0 0
    %560 = vmatpush2.bf16.msra.mxu0 0
    %561 = vmatprep.mubr.bf16.mxu0 0
    %562 = vmatmul.mubr.bf16.gmra.mxu0 %v156
    %v563 = vpop.f32.mrf.mxu0
    %v564 = vadd.f32 0.0, %v563
    %v565 = vpop.f32.mrf.mxu0
    %v566 = vpop.f32.mrf.mxu0
    %v567 = vpop.f32.mrf.mxu0
    %568 = vdwg.mxu0
    %v573 = vunpack.c.l.b16 %v114
    %v574 = vunpack.c.l.b16 %v115
    %v575 = vunpack.c.l.b16 %v116
    %v576 = vunpack.c.l.b16 %v117
    %v577 = vpack.c.b16 %v574, %v573
    %v578 = vpack.c.b16 %v576, %v575
    %581 = vmatprep.subr.bf16.mxu0 0
    %582 = vmatpush1.bf16.msra.mxu0 0
    %583 = vmatprep.subr.bf16.mxu0 0
    %584 = vmatpush1.bf16.msra.mxu0 0
    %585 = vmatprep.subr.bf16.mxu0 0
    %586 = vmatpush1.bf16.msra.mxu0 0
    %587 = vmatprep.subr.bf16.mxu0 0
    %588 = vmatpush1.bf16.msra.mxu0 0
    %589 = vmatprep.subr.bf16.mxu0 0
    %590 = vmatpush1.bf16.msra.mxu0 0
    %591 = vmatprep.subr.bf16.mxu0 0
    %592 = vmatpush1.bf16.msra.mxu0 0
    %593 = vmatprep.subr.bf16.mxu0 0
    %594 = vmatpush1.bf16.msra.mxu0 %v578
    %595 = vmatprep.subr.bf16.mxu0 0
    %596 = vmatpush1.bf16.msra.mxu0 %v577
    %597 = vmatprep.subr.bf16.mxu0 0
    %598 = vmatpush2.bf16.msra.mxu0 0
    %599 = vmatprep.subr.bf16.mxu0 0
    %600 = vmatpush2.bf16.msra.mxu0 0
    %601 = vmatprep.subr.bf16.mxu0 0
    %602 = vmatpush2.bf16.msra.mxu0 0
    %603 = vmatprep.subr.bf16.mxu0 0
    %604 = vmatpush2.bf16.msra.mxu0 0
    %605 = vmatprep.subr.bf16.mxu0 0
    %606 = vmatpush2.bf16.msra.mxu0 0
    %607 = vmatprep.subr.bf16.mxu0 0
    %608 = vmatpush2.bf16.msra.mxu0 0
    %609 = vmatprep.subr.bf16.mxu0 0
    %610 = vmatpush2.bf16.msra.mxu0 0
    %611 = vmatprep.subr.bf16.mxu0 0
    %612 = vmatpush2.bf16.msra.mxu0 0
    %613 = vmatprep.mubr.bf16.mxu0 0
    %614 = vmatmul.mubr.bf16.gmra.mxu0 %v156
    %v615 = vpop.f32.mrf.mxu0
    %v616 = vadd.f32 0.0, %v615
    %v617 = vpop.f32.mrf.mxu0
    %v618 = vpop.f32.mrf.mxu0
    %v619 = vpop.f32.mrf.mxu0
    %620 = vdwg.mxu0
    %v625 = vunpack.c.l.b16 %v118
    %v626 = vunpack.c.l.b16 %v119
    %v627 = vunpack.c.l.b16 %v120
    %v628 = vunpack.c.l.b16 %v121
    %v629 = vpack.c.b16 %v626, %v625
    %v630 = vpack.c.b16 %v628, %v627
    %633 = vmatprep.subr.bf16.mxu0 0
    %634 = vmatpush1.bf16.msra.mxu0 0
    %635 = vmatprep.subr.bf16.mxu0 0
    %636 = vmatpush1.bf16.msra.mxu0 0
    %637 = vmatprep.subr.bf16.mxu0 0
    %638 = vmatpush1.bf16.msra.mxu0 0
    %639 = vmatprep.subr.bf16.mxu0 0
    %640 = vmatpush1.bf16.msra.mxu0 0
    %641 = vmatprep.subr.bf16.mxu0 0
    %642 = vmatpush1.bf16.msra.mxu0 0
    %643 = vmatprep.subr.bf16.mxu0 0
    %644 = vmatpush1.bf16.msra.mxu0 0
    %645 = vmatprep.subr.bf16.mxu0 0
    %646 = vmatpush1.bf16.msra.mxu0 %v630
    %647 = vmatprep.subr.bf16.mxu0 0
    %648 = vmatpush1.bf16.msra.mxu0 %v629
    %649 = vmatprep.subr.bf16.mxu0 0
    %650 = vmatpush2.bf16.msra.mxu0 0
    %651 = vmatprep.subr.bf16.mxu0 0
    %652 = vmatpush2.bf16.msra.mxu0 0
    %653 = vmatprep.subr.bf16.mxu0 0
    %654 = vmatpush2.bf16.msra.mxu0 0
    %655 = vmatprep.subr.bf16.mxu0 0
    %656 = vmatpush2.bf16.msra.mxu0 0
    %657 = vmatprep.subr.bf16.mxu0 0
    %658 = vmatpush2.bf16.msra.mxu0 0
    %659 = vmatprep.subr.bf16.mxu0 0
    %660 = vmatpush2.bf16.msra.mxu0 0
    %661 = vmatprep.subr.bf16.mxu0 0
    %662 = vmatpush2.bf16.msra.mxu0 0
    %663 = vmatprep.subr.bf16.mxu0 0
    %664 = vmatpush2.bf16.msra.mxu0 0
    %665 = vmatprep.mubr.bf16.mxu0 0
    %666 = vmatmul.mubr.bf16.gmra.mxu0 %v156
    %v667 = vpop.f32.mrf.mxu0
    %v668 = vadd.f32 0.0, %v667
    %v669 = vpop.f32.mrf.mxu0
    %v670 = vpop.f32.mrf.mxu0
    %v671 = vpop.f32.mrf.mxu0
    %672 = vdwg.mxu0
    %v677 = vunpack.c.l.b16 %v122
    %v678 = vunpack.c.l.b16 %v123
    %v679 = vunpack.c.l.b16 %v124
    %v680 = vunpack.c.l.b16 %v125
    %v681 = vpack.c.b16 %v678, %v677
    %v682 = vpack.c.b16 %v680, %v679
    %685 = vmatprep.subr.bf16.mxu0 0
    %686 = vmatpush1.bf16.msra.mxu0 0
    %687 = vmatprep.subr.bf16.mxu0 0
    %688 = vmatpush1.bf16.msra.mxu0 0
    %689 = vmatprep.subr.bf16.mxu0 0
    %690 = vmatpush1.bf16.msra.mxu0 0
    %691 = vmatprep.subr.bf16.mxu0 0
    %692 = vmatpush1.bf16.msra.mxu0 0
    %693 = vmatprep.subr.bf16.mxu0 0
    %694 = vmatpush1.bf16.msra.mxu0 0
    %695 = vmatprep.subr.bf16.mxu0 0
    %696 = vmatpush1.bf16.msra.mxu0 0
    %697 = vmatprep.subr.bf16.mxu0 0
    %698 = vmatpush1.bf16.msra.mxu0 %v682
    %699 = vmatprep.subr.bf16.mxu0 0
    %700 = vmatpush1.bf16.msra.mxu0 %v681
    %701 = vmatprep.subr.bf16.mxu0 0
    %702 = vmatpush2.bf16.msra.mxu0 0
    %703 = vmatprep.subr.bf16.mxu0 0
    %704 = vmatpush2.bf16.msra.mxu0 0
    %705 = vmatprep.subr.bf16.mxu0 0
    %706 = vmatpush2.bf16.msra.mxu0 0
    %707 = vmatprep.subr.bf16.mxu0 0
    %708 = vmatpush2.bf16.msra.mxu0 0
    %709 = vmatprep.subr.bf16.mxu0 0
    %710 = vmatpush2.bf16.msra.mxu0 0
    %711 = vmatprep.subr.bf16.mxu0 0
    %712 = vmatpush2.bf16.msra.mxu0 0
    %713 = vmatprep.subr.bf16.mxu0 0
    %714 = vmatpush2.bf16.msra.mxu0 0
    %715 = vmatprep.subr.bf16.mxu0 0
    %716 = vmatpush2.bf16.msra.mxu0 0
    %717 = vmatprep.mubr.bf16.mxu0 0
    %718 = vmatmul.mubr.bf16.gmra.mxu0 %v156
    %v719 = vpop.f32.mrf.mxu0
    %v720 = vadd.f32 0.0, %v719
    %v721 = vpop.f32.mrf.mxu0
    %v722 = vpop.f32.mrf.mxu0
    %v723 = vpop.f32.mrf.mxu0
    %724 = vdwg.mxu0
    %725 = vmatprep.subr.bf16.mxu0 0
    %726 = vmatpush1.bf16.msra.mxu0 0
    %727 = vmatprep.subr.bf16.mxu0 0
    %728 = vmatpush1.bf16.msra.mxu0 0
    %729 = vmatprep.subr.bf16.mxu0 0
    %730 = vmatpush1.bf16.msra.mxu0 0
    %731 = vmatprep.subr.bf16.mxu0 0
    %732 = vmatpush1.bf16.msra.mxu0 0
    %733 = vmatprep.subr.bf16.mxu0 0
    %734 = vmatpush1.bf16.msra.mxu0 0
    %735 = vmatprep.subr.bf16.mxu0 0
    %736 = vmatpush1.bf16.msra.mxu0 0
    %737 = vmatprep.subr.bf16.mxu0 0
    %738 = vmatpush1.bf16.msra.mxu0 %v526
    %739 = vmatprep.subr.bf16.mxu0 0
    %740 = vmatpush1.bf16.msra.mxu0 %v525
    %741 = vmatprep.subr.bf16.mxu0 0
    %742 = vmatpush2.bf16.msra.mxu0 0
    %743 = vmatprep.subr.bf16.mxu0 0
    %744 = vmatpush2.bf16.msra.mxu0 0
    %745 = vmatprep.subr.bf16.mxu0 0
    %746 = vmatpush2.bf16.msra.mxu0 0
    %747 = vmatprep.subr.bf16.mxu0 0
    %748 = vmatpush2.bf16.msra.mxu0 0
    %749 = vmatprep.subr.bf16.mxu0 0
    %750 = vmatpush2.bf16.msra.mxu0 0
    %751 = vmatprep.subr.bf16.mxu0 0
    %752 = vmatpush2.bf16.msra.mxu0 0
    %753 = vmatprep.subr.bf16.mxu0 0
    %754 = vmatpush2.bf16.msra.mxu0 0
    %755 = vmatprep.subr.bf16.mxu0 0
    %756 = vmatpush2.bf16.msra.mxu0 0
    %757 = vmatprep.mubr.bf16.mxu0 0
    %758 = vmatmul.mubr.bf16.gmra.mxu0 %v355
    %v759 = vpop.f32.mrf.mxu0
    %v760 = vadd.f32 0.0, %v759
    %v761 = vpop.f32.mrf.mxu0
    %v762 = vpop.f32.mrf.mxu0
    %v763 = vpop.f32.mrf.mxu0
    %764 = vdwg.mxu0
    %765 = vmatprep.subr.bf16.mxu0 0
    %766 = vmatpush1.bf16.msra.mxu0 0
    %767 = vmatprep.subr.bf16.mxu0 0
    %768 = vmatpush1.bf16.msra.mxu0 0
    %769 = vmatprep.subr.bf16.mxu0 0
    %770 = vmatpush1.bf16.msra.mxu0 0
    %771 = vmatprep.subr.bf16.mxu0 0
    %772 = vmatpush1.bf16.msra.mxu0 0
    %773 = vmatprep.subr.bf16.mxu0 0
    %774 = vmatpush1.bf16.msra.mxu0 0
    %775 = vmatprep.subr.bf16.mxu0 0
    %776 = vmatpush1.bf16.msra.mxu0 0
    %777 = vmatprep.subr.bf16.mxu0 0
    %778 = vmatpush1.bf16.msra.mxu0 %v578
    %779 = vmatprep.subr.bf16.mxu0 0
    %780 = vmatpush1.bf16.msra.mxu0 %v577
    %781 = vmatprep.subr.bf16.mxu0 0
    %782 = vmatpush2.bf16.msra.mxu0 0
    %783 = vmatprep.subr.bf16.mxu0 0
    %784 = vmatpush2.bf16.msra.mxu0 0
    %785 = vmatprep.subr.bf16.mxu0 0
    %786 = vmatpush2.bf16.msra.mxu0 0
    %787 = vmatprep.subr.bf16.mxu0 0
    %788 = vmatpush2.bf16.msra.mxu0 0
    %789 = vmatprep.subr.bf16.mxu0 0
    %790 = vmatpush2.bf16.msra.mxu0 0
    %791 = vmatprep.subr.bf16.mxu0 0
    %792 = vmatpush2.bf16.msra.mxu0 0
    %793 = vmatprep.subr.bf16.mxu0 0
    %794 = vmatpush2.bf16.msra.mxu0 0
    %795 = vmatprep.subr.bf16.mxu0 0
    %796 = vmatpush2.bf16.msra.mxu0 0
    %797 = vmatprep.mubr.bf16.mxu0 0
    %798 = vmatmul.mubr.bf16.gmra.mxu0 %v355
    %v799 = vpop.f32.mrf.mxu0
    %v800 = vadd.f32 0.0, %v799
    %v801 = vpop.f32.mrf.mxu0
    %v802 = vpop.f32.mrf.mxu0
    %v803 = vpop.f32.mrf.mxu0
    %804 = vdwg.mxu0
    %805 = vmatprep.subr.bf16.mxu0 0
    %806 = vmatpush1.bf16.msra.mxu0 0
    %807 = vmatprep.subr.bf16.mxu0 0
    %808 = vmatpush1.bf16.msra.mxu0 0
    %809 = vmatprep.subr.bf16.mxu0 0
    %810 = vmatpush1.bf16.msra.mxu0 0
    %811 = vmatprep.subr.bf16.mxu0 0
    %812 = vmatpush1.bf16.msra.mxu0 0
    %813 = vmatprep.subr.bf16.mxu0 0
    %814 = vmatpush1.bf16.msra.mxu0 0
    %815 = vmatprep.subr.bf16.mxu0 0
    %816 = vmatpush1.bf16.msra.mxu0 0
    %817 = vmatprep.subr.bf16.mxu0 0
    %818 = vmatpush1.bf16.msra.mxu0 %v630
    %819 = vmatprep.subr.bf16.mxu0 0
    %820 = vmatpush1.bf16.msra.mxu0 %v629
    %821 = vmatprep.subr.bf16.mxu0 0
    %822 = vmatpush2.bf16.msra.mxu0 0
    %823 = vmatprep.subr.bf16.mxu0 0
    %824 = vmatpush2.bf16.msra.mxu0 0
    %825 = vmatprep.subr.bf16.mxu0 0
    %826 = vmatpush2.bf16.msra.mxu0 0
    %827 = vmatprep.subr.bf16.mxu0 0
    %828 = vmatpush2.bf16.msra.mxu0 0
    %829 = vmatprep.subr.bf16.mxu0 0
    %830 = vmatpush2.bf16.msra.mxu0 0
    %831 = vmatprep.subr.bf16.mxu0 0
    %832 = vmatpush2.bf16.msra.mxu0 0
    %833 = vmatprep.subr.bf16.mxu0 0
    %834 = vmatpush2.bf16.msra.mxu0 0
    %835 = vmatprep.subr.bf16.mxu0 0
    %836 = vmatpush2.bf16.msra.mxu0 0
    %837 = vmatprep.mubr.bf16.mxu0 0
    %838 = vmatmul.mubr.bf16.gmra.mxu0 %v355
    %v839 = vpop.f32.mrf.mxu0
    %v840 = vadd.f32 0.0, %v839
    %v841 = vpop.f32.mrf.mxu0
    %v842 = vpop.f32.mrf.mxu0
    %v843 = vpop.f32.mrf.mxu0
    %844 = vdwg.mxu0
    %845 = vmatprep.subr.bf16.mxu0 0
    %846 = vmatpush1.bf16.msra.mxu0 0
    %847 = vmatprep.subr.bf16.mxu0 0
    %848 = vmatpush1.bf16.msra.mxu0 0
    %849 = vmatprep.subr.bf16.mxu0 0
    %850 = vmatpush1.bf16.msra.mxu0 0
    %851 = vmatprep.subr.bf16.mxu0 0
    %852 = vmatpush1.bf16.msra.mxu0 0
    %853 = vmatprep.subr.bf16.mxu0 0
    %854 = vmatpush1.bf16.msra.mxu0 0
    %855 = vmatprep.subr.bf16.mxu0 0
    %856 = vmatpush1.bf16.msra.mxu0 0
    %857 = vmatprep.subr.bf16.mxu0 0
    %858 = vmatpush1.bf16.msra.mxu0 %v682
    %859 = vmatprep.subr.bf16.mxu0 0
    %860 = vmatpush1.bf16.msra.mxu0 %v681
    %861 = vmatprep.subr.bf16.mxu0 0
    %862 = vmatpush2.bf16.msra.mxu0 0
    %863 = vmatprep.subr.bf16.mxu0 0
    %864 = vmatpush2.bf16.msra.mxu0 0
    %865 = vmatprep.subr.bf16.mxu0 0
    %866 = vmatpush2.bf16.msra.mxu0 0
    %867 = vmatprep.subr.bf16.mxu0 0
    %868 = vmatpush2.bf16.msra.mxu0 0
    %869 = vmatprep.subr.bf16.mxu0 0
    %870 = vmatpush2.bf16.msra.mxu0 0
    %871 = vmatprep.subr.bf16.mxu0 0
    %872 = vmatpush2.bf16.msra.mxu0 0
    %873 = vmatprep.subr.bf16.mxu0 0
    %874 = vmatpush2.bf16.msra.mxu0 0
    %875 = vmatprep.subr.bf16.mxu0 0
    %876 = vmatpush2.bf16.msra.mxu0 0
    %877 = vmatprep.mubr.bf16.mxu0 0
    %878 = vmatmul.mubr.bf16.gmra.mxu0 %v355
    %v879 = vpop.f32.mrf.mxu0
    %v880 = vadd.f32 0.0, %v879
    %v881 = vpop.f32.mrf.mxu0
    %v882 = vpop.f32.mrf.mxu0
    %v883 = vpop.f32.mrf.mxu0
    %884 = vdwg.mxu0
    %v889 = vunpack.c.l.b16 %v127
    %v890 = vunpack.c.l.b16 %v128
    %v891 = vunpack.c.l.b16 %v129
    %v892 = vunpack.c.l.b16 %v130
    %v893 = vpack.c.b16 %v890, %v889
    %v894 = vpack.c.b16 %v892, %v891
    %897 = vmatprep.subr.bf16.mxu0 0
    %898 = vmatpush1.bf16.msra.mxu0 0
    %899 = vmatprep.subr.bf16.mxu0 0
    %900 = vmatpush1.bf16.msra.mxu0 0
    %901 = vmatprep.subr.bf16.mxu0 0
    %902 = vmatpush1.bf16.msra.mxu0 0
    %903 = vmatprep.subr.bf16.mxu0 0
    %904 = vmatpush1.bf16.msra.mxu0 0
    %905 = vmatprep.subr.bf16.mxu0 0
    %906 = vmatpush1.bf16.msra.mxu0 0
    %907 = vmatprep.subr.bf16.mxu0 0
    %908 = vmatpush1.bf16.msra.mxu0 0
    %909 = vmatprep.subr.bf16.mxu0 0
    %910 = vmatpush1.bf16.msra.mxu0 %v894
    %911 = vmatprep.subr.bf16.mxu0 0
    %912 = vmatpush1.bf16.msra.mxu0 %v893
    %913 = vmatprep.subr.bf16.mxu0 0
    %914 = vmatpush2.bf16.msra.mxu0 0
    %915 = vmatprep.subr.bf16.mxu0 0
    %916 = vmatpush2.bf16.msra.mxu0 0
    %917 = vmatprep.subr.bf16.mxu0 0
    %918 = vmatpush2.bf16.msra.mxu0 0
    %919 = vmatprep.subr.bf16.mxu0 0
    %920 = vmatpush2.bf16.msra.mxu0 0
    %921 = vmatprep.subr.bf16.mxu0 0
    %922 = vmatpush2.bf16.msra.mxu0 0
    %923 = vmatprep.subr.bf16.mxu0 0
    %924 = vmatpush2.bf16.msra.mxu0 0
    %925 = vmatprep.subr.bf16.mxu0 0
    %926 = vmatpush2.bf16.msra.mxu0 0
    %927 = vmatprep.subr.bf16.mxu0 0
    %928 = vmatpush2.bf16.msra.mxu0 0
    %929 = vmatprep.mubr.bf16.mxu0 0
    %930 = vmatmul.mubr.bf16.gmra.mxu0 %v156
    %v931 = vpop.f32.mrf.mxu0
    %v932 = vadd.f32 0.0, %v931
    %v933 = vpop.f32.mrf.mxu0
    %v934 = vpop.f32.mrf.mxu0
    %v935 = vpop.f32.mrf.mxu0
    %936 = vdwg.mxu0
    %v941 = vunpack.c.l.b16 %v131
    %v942 = vunpack.c.l.b16 %v132
    %v943 = vunpack.c.l.b16 %v133
    %v944 = vunpack.c.l.b16 %v134
    %v945 = vpack.c.b16 %v942, %v941
    %v946 = vpack.c.b16 %v944, %v943
    %949 = vmatprep.subr.bf16.mxu0 0
    %950 = vmatpush1.bf16.msra.mxu0 0
    %951 = vmatprep.subr.bf16.mxu0 0
    %952 = vmatpush1.bf16.msra.mxu0 0
    %953 = vmatprep.subr.bf16.mxu0 0
    %954 = vmatpush1.bf16.msra.mxu0 0
    %955 = vmatprep.subr.bf16.mxu0 0
    %956 = vmatpush1.bf16.msra.mxu0 0
    %957 = vmatprep.subr.bf16.mxu0 0
    %958 = vmatpush1.bf16.msra.mxu0 0
    %959 = vmatprep.subr.bf16.mxu0 0
    %960 = vmatpush1.bf16.msra.mxu0 0
    %961 = vmatprep.subr.bf16.mxu0 0
    %962 = vmatpush1.bf16.msra.mxu0 %v946
    %963 = vmatprep.subr.bf16.mxu0 0
    %964 = vmatpush1.bf16.msra.mxu0 %v945
    %965 = vmatprep.subr.bf16.mxu0 0
    %966 = vmatpush2.bf16.msra.mxu0 0
    %967 = vmatprep.subr.bf16.mxu0 0
    %968 = vmatpush2.bf16.msra.mxu0 0
    %969 = vmatprep.subr.bf16.mxu0 0
    %970 = vmatpush2.bf16.msra.mxu0 0
    %971 = vmatprep.subr.bf16.mxu0 0
    %972 = vmatpush2.bf16.msra.mxu0 0
    %973 = vmatprep.subr.bf16.mxu0 0
    %974 = vmatpush2.bf16.msra.mxu0 0
    %975 = vmatprep.subr.bf16.mxu0 0
    %976 = vmatpush2.bf16.msra.mxu0 0
    %977 = vmatprep.subr.bf16.mxu0 0
    %978 = vmatpush2.bf16.msra.mxu0 0
    %979 = vmatprep.subr.bf16.mxu0 0
    %980 = vmatpush2.bf16.msra.mxu0 0
    %981 = vmatprep.mubr.bf16.mxu0 0
    %982 = vmatmul.mubr.bf16.gmra.mxu0 %v156
    %v983 = vpop.f32.mrf.mxu0
    %v984 = vadd.f32 0.0, %v983
    %v985 = vpop.f32.mrf.mxu0
    %v986 = vpop.f32.mrf.mxu0
    %v987 = vpop.f32.mrf.mxu0
    %988 = vdwg.mxu0
    %v993 = vunpack.c.l.b16 %v135
    %v994 = vunpack.c.l.b16 %v136
    %v995 = vunpack.c.l.b16 %v137
    %v996 = vunpack.c.l.b16 %v138
    %v997 = vpack.c.b16 %v994, %v993
    %v998 = vpack.c.b16 %v996, %v995
    %1001 = vmatprep.subr.bf16.mxu0 0
    %1002 = vmatpush1.bf16.msra.mxu0 0
    %1003 = vmatprep.subr.bf16.mxu0 0
    %1004 = vmatpush1.bf16.msra.mxu0 0
    %1005 = vmatprep.subr.bf16.mxu0 0
    %1006 = vmatpush1.bf16.msra.mxu0 0
    %1007 = vmatprep.subr.bf16.mxu0 0
    %1008 = vmatpush1.bf16.msra.mxu0 0
    %1009 = vmatprep.subr.bf16.mxu0 0
    %1010 = vmatpush1.bf16.msra.mxu0 0
    %1011 = vmatprep.subr.bf16.mxu0 0
    %1012 = vmatpush1.bf16.msra.mxu0 0
    %1013 = vmatprep.subr.bf16.mxu0 0
    %1014 = vmatpush1.bf16.msra.mxu0 %v998
    %1015 = vmatprep.subr.bf16.mxu0 0
    %1016 = vmatpush1.bf16.msra.mxu0 %v997
    %1017 = vmatprep.subr.bf16.mxu0 0
    %1018 = vmatpush2.bf16.msra.mxu0 0
    %1019 = vmatprep.subr.bf16.mxu0 0
    %1020 = vmatpush2.bf16.msra.mxu0 0
    %1021 = vmatprep.subr.bf16.mxu0 0
    %1022 = vmatpush2.bf16.msra.mxu0 0
    %1023 = vmatprep.subr.bf16.mxu0 0
    %1024 = vmatpush2.bf16.msra.mxu0 0
    %1025 = vmatprep.subr.bf16.mxu0 0
    %1026 = vmatpush2.bf16.msra.mxu0 0
    %1027 = vmatprep.subr.bf16.mxu0 0
    %1028 = vmatpush2.bf16.msra.mxu0 0
    %1029 = vmatprep.subr.bf16.mxu0 0
    %1030 = vmatpush2.bf16.msra.mxu0 0
    %1031 = vmatprep.subr.bf16.mxu0 0
    %1032 = vmatpush2.bf16.msra.mxu0 0
    %1033 = vmatprep.mubr.bf16.mxu0 0
    %1034 = vmatmul.mubr.bf16.gmra.mxu0 %v156
    %v1035 = vpop.f32.mrf.mxu0
    %v1036 = vadd.f32 0.0, %v1035
    %v1037 = vpop.f32.mrf.mxu0
    %v1038 = vpop.f32.mrf.mxu0
    %v1039 = vpop.f32.mrf.mxu0
    %1040 = vdwg.mxu0
    %v1045 = vunpack.c.l.b16 %v139
    %v1046 = vunpack.c.l.b16 %v140
    %v1047 = vunpack.c.l.b16 %v141
    %v1048 = vunpack.c.l.b16 %v142
    %v1049 = vpack.c.b16 %v1046, %v1045
    %v1050 = vpack.c.b16 %v1048, %v1047
    %1053 = vmatprep.subr.bf16.mxu0 0
    %1054 = vmatpush1.bf16.msra.mxu0 0
    %1055 = vmatprep.subr.bf16.mxu0 0
    %1056 = vmatpush1.bf16.msra.mxu0 0
    %1057 = vmatprep.subr.bf16.mxu0 0
    %1058 = vmatpush1.bf16.msra.mxu0 0
    %1059 = vmatprep.subr.bf16.mxu0 0
    %1060 = vmatpush1.bf16.msra.mxu0 0
    %1061 = vmatprep.subr.bf16.mxu0 0
    %1062 = vmatpush1.bf16.msra.mxu0 0
    %1063 = vmatprep.subr.bf16.mxu0 0
    %1064 = vmatpush1.bf16.msra.mxu0 0
    %1065 = vmatprep.subr.bf16.mxu0 0
    %1066 = vmatpush1.bf16.msra.mxu0 %v1050
    %1067 = vmatprep.subr.bf16.mxu0 0
    %1068 = vmatpush1.bf16.msra.mxu0 %v1049
    %1069 = vmatprep.subr.bf16.mxu0 0
    %1070 = vmatpush2.bf16.msra.mxu0 0
    %1071 = vmatprep.subr.bf16.mxu0 0
    %1072 = vmatpush2.bf16.msra.mxu0 0
    %1073 = vmatprep.subr.bf16.mxu0 0
    %1074 = vmatpush2.bf16.msra.mxu0 0
    %1075 = vmatprep.subr.bf16.mxu0 0
    %1076 = vmatpush2.bf16.msra.mxu0 0
    %1077 = vmatprep.subr.bf16.mxu0 0
    %1078 = vmatpush2.bf16.msra.mxu0 0
    %1079 = vmatprep.subr.bf16.mxu0 0
    %1080 = vmatpush2.bf16.msra.mxu0 0
    %1081 = vmatprep.subr.bf16.mxu0 0
    %1082 = vmatpush2.bf16.msra.mxu0 0
    %1083 = vmatprep.subr.bf16.mxu0 0
    %1084 = vmatpush2.bf16.msra.mxu0 0
    %1085 = vmatprep.mubr.bf16.mxu0 0
    %1086 = vmatmul.mubr.bf16.gmra.mxu0 %v156
    %v1087 = vpop.f32.mrf.mxu0
    %v1088 = vadd.f32 0.0, %v1087
    %v1089 = vpop.f32.mrf.mxu0
    %v1090 = vpop.f32.mrf.mxu0
    %v1091 = vpop.f32.mrf.mxu0
    %1092 = vdwg.mxu0
    %1093 = vmatprep.subr.bf16.mxu0 0
    %1094 = vmatpush1.bf16.msra.mxu0 0
    %1095 = vmatprep.subr.bf16.mxu0 0
    %1096 = vmatpush1.bf16.msra.mxu0 0
    %1097 = vmatprep.subr.bf16.mxu0 0
    %1098 = vmatpush1.bf16.msra.mxu0 0
    %1099 = vmatprep.subr.bf16.mxu0 0
    %1100 = vmatpush1.bf16.msra.mxu0 0
    %1101 = vmatprep.subr.bf16.mxu0 0
    %1102 = vmatpush1.bf16.msra.mxu0 0
    %1103 = vmatprep.subr.bf16.mxu0 0
    %1104 = vmatpush1.bf16.msra.mxu0 0
    %1105 = vmatprep.subr.bf16.mxu0 0
    %1106 = vmatpush1.bf16.msra.mxu0 %v894
    %1107 = vmatprep.subr.bf16.mxu0 0
    %1108 = vmatpush1.bf16.msra.mxu0 %v893
    %1109 = vmatprep.subr.bf16.mxu0 0
    %1110 = vmatpush2.bf16.msra.mxu0 0
    %1111 = vmatprep.subr.bf16.mxu0 0
    %1112 = vmatpush2.bf16.msra.mxu0 0
    %1113 = vmatprep.subr.bf16.mxu0 0
    %1114 = vmatpush2.bf16.msra.mxu0 0
    %1115 = vmatprep.subr.bf16.mxu0 0
    %1116 = vmatpush2.bf16.msra.mxu0 0
    %1117 = vmatprep.subr.bf16.mxu0 0
    %1118 = vmatpush2.bf16.msra.mxu0 0
    %1119 = vmatprep.subr.bf16.mxu0 0
    %1120 = vmatpush2.bf16.msra.mxu0 0
    %1121 = vmatprep.subr.bf16.mxu0 0
    %1122 = vmatpush2.bf16.msra.mxu0 0
    %1123 = vmatprep.subr.bf16.mxu0 0
    %1124 = vmatpush2.bf16.msra.mxu0 0
    %1125 = vmatprep.mubr.bf16.mxu0 0
    %1126 = vmatmul.mubr.bf16.gmra.mxu0 %v355
    %v1127 = vpop.f32.mrf.mxu0
    %v1128 = vadd.f32 0.0, %v1127
    %v1129 = vpop.f32.mrf.mxu0
    %v1130 = vpop.f32.mrf.mxu0
    %v1131 = vpop.f32.mrf.mxu0
    %1132 = vdwg.mxu0
    %1133 = vmatprep.subr.bf16.mxu0 0
    %1134 = vmatpush1.bf16.msra.mxu0 0
    %1135 = vmatprep.subr.bf16.mxu0 0
    %1136 = vmatpush1.bf16.msra.mxu0 0
    %1137 = vmatprep.subr.bf16.mxu0 0
    %1138 = vmatpush1.bf16.msra.mxu0 0
    %1139 = vmatprep.subr.bf16.mxu0 0
    %1140 = vmatpush1.bf16.msra.mxu0 0
    %1141 = vmatprep.subr.bf16.mxu0 0
    %1142 = vmatpush1.bf16.msra.mxu0 0
    %1143 = vmatprep.subr.bf16.mxu0 0
    %1144 = vmatpush1.bf16.msra.mxu0 0
    %1145 = vmatprep.subr.bf16.mxu0 0
    %1146 = vmatpush1.bf16.msra.mxu0 %v946
    %1147 = vmatprep.subr.bf16.mxu0 0
    %1148 = vmatpush1.bf16.msra.mxu0 %v945
    %1149 = vmatprep.subr.bf16.mxu0 0
    %1150 = vmatpush2.bf16.msra.mxu0 0
    %1151 = vmatprep.subr.bf16.mxu0 0
    %1152 = vmatpush2.bf16.msra.mxu0 0
    %1153 = vmatprep.subr.bf16.mxu0 0
    %1154 = vmatpush2.bf16.msra.mxu0 0
    %1155 = vmatprep.subr.bf16.mxu0 0
    %1156 = vmatpush2.bf16.msra.mxu0 0
    %1157 = vmatprep.subr.bf16.mxu0 0
    %1158 = vmatpush2.bf16.msra.mxu0 0
    %1159 = vmatprep.subr.bf16.mxu0 0
    %1160 = vmatpush2.bf16.msra.mxu0 0
    %1161 = vmatprep.subr.bf16.mxu0 0
    %1162 = vmatpush2.bf16.msra.mxu0 0
    %1163 = vmatprep.subr.bf16.mxu0 0
    %1164 = vmatpush2.bf16.msra.mxu0 0
    %1165 = vmatprep.mubr.bf16.mxu0 0
    %1166 = vmatmul.mubr.bf16.gmra.mxu0 %v355
    %v1167 = vpop.f32.mrf.mxu0
    %v1168 = vadd.f32 0.0, %v1167
    %v1169 = vpop.f32.mrf.mxu0
    %v1170 = vpop.f32.mrf.mxu0
    %v1171 = vpop.f32.mrf.mxu0
    %1172 = vdwg.mxu0
    %1173 = vmatprep.subr.bf16.mxu0 0
    %1174 = vmatpush1.bf16.msra.mxu0 0
    %1175 = vmatprep.subr.bf16.mxu0 0
    %1176 = vmatpush1.bf16.msra.mxu0 0
    %1177 = vmatprep.subr.bf16.mxu0 0
    %1178 = vmatpush1.bf16.msra.mxu0 0
    %1179 = vmatprep.subr.bf16.mxu0 0
    %1180 = vmatpush1.bf16.msra.mxu0 0
    %1181 = vmatprep.subr.bf16.mxu0 0
    %1182 = vmatpush1.bf16.msra.mxu0 0
    %1183 = vmatprep.subr.bf16.mxu0 0
    %1184 = vmatpush1.bf16.msra.mxu0 0
    %1185 = vmatprep.subr.bf16.mxu0 0
    %1186 = vmatpush1.bf16.msra.mxu0 %v998
    %1187 = vmatprep.subr.bf16.mxu0 0
    %1188 = vmatpush1.bf16.msra.mxu0 %v997
    %1189 = vmatprep.subr.bf16.mxu0 0
    %1190 = vmatpush2.bf16.msra.mxu0 0
    %1191 = vmatprep.subr.bf16.mxu0 0
    %1192 = vmatpush2.bf16.msra.mxu0 0
    %1193 = vmatprep.subr.bf16.mxu0 0
    %1194 = vmatpush2.bf16.msra.mxu0 0
    %1195 = vmatprep.subr.bf16.mxu0 0
    %1196 = vmatpush2.bf16.msra.mxu0 0
    %1197 = vmatprep.subr.bf16.mxu0 0
    %1198 = vmatpush2.bf16.msra.mxu0 0
    %1199 = vmatprep.subr.bf16.mxu0 0
    %1200 = vmatpush2.bf16.msra.mxu0 0
    %1201 = vmatprep.subr.bf16.mxu0 0
    %1202 = vmatpush2.bf16.msra.mxu0 0
    %1203 = vmatprep.subr.bf16.mxu0 0
    %1204 = vmatpush2.bf16.msra.mxu0 0
    %1205 = vmatprep.mubr.bf16.mxu0 0
    %1206 = vmatmul.mubr.bf16.gmra.mxu0 %v355
    %v1207 = vpop.f32.mrf.mxu0
    %v1208 = vadd.f32 0.0, %v1207
    %v1209 = vpop.f32.mrf.mxu0
    %v1210 = vpop.f32.mrf.mxu0
    %v1211 = vpop.f32.mrf.mxu0
    %1212 = vdwg.mxu0
    %1213 = vmatprep.subr.bf16.mxu0 0
    %1214 = vmatpush1.bf16.msra.mxu0 0
    %1215 = vmatprep.subr.bf16.mxu0 0
    %1216 = vmatpush1.bf16.msra.mxu0 0
    %1217 = vmatprep.subr.bf16.mxu0 0
    %1218 = vmatpush1.bf16.msra.mxu0 0
    %1219 = vmatprep.subr.bf16.mxu0 0
    %1220 = vmatpush1.bf16.msra.mxu0 0
    %1221 = vmatprep.subr.bf16.mxu0 0
    %1222 = vmatpush1.bf16.msra.mxu0 0
    %1223 = vmatprep.subr.bf16.mxu0 0
    %1224 = vmatpush1.bf16.msra.mxu0 0
    %1225 = vmatprep.subr.bf16.mxu0 0
    %1226 = vmatpush1.bf16.msra.mxu0 %v1050
    %1227 = vmatprep.subr.bf16.mxu0 0
    %1228 = vmatpush1.bf16.msra.mxu0 %v1049
    %1229 = vmatprep.subr.bf16.mxu0 0
    %1230 = vmatpush2.bf16.msra.mxu0 0
    %1231 = vmatprep.subr.bf16.mxu0 0
    %1232 = vmatpush2.bf16.msra.mxu0 0
    %1233 = vmatprep.subr.bf16.mxu0 0
    %1234 = vmatpush2.bf16.msra.mxu0 0
    %1235 = vmatprep.subr.bf16.mxu0 0
    %1236 = vmatpush2.bf16.msra.mxu0 0
    %1237 = vmatprep.subr.bf16.mxu0 0
    %1238 = vmatpush2.bf16.msra.mxu0 0
    %1239 = vmatprep.subr.bf16.mxu0 0
    %1240 = vmatpush2.bf16.msra.mxu0 0
    %1241 = vmatprep.subr.bf16.mxu0 0
    %1242 = vmatpush2.bf16.msra.mxu0 0
    %1243 = vmatprep.subr.bf16.mxu0 0
    %1244 = vmatpush2.bf16.msra.mxu0 0
    %1245 = vmatprep.mubr.bf16.mxu0 0
    %1246 = vmatmul.mubr.bf16.gmra.mxu0 %v355
    %v1247 = vpop.f32.mrf.mxu0
    %v1248 = vadd.f32 0.0, %v1247
    %v1249 = vpop.f32.mrf.mxu0
    %v1250 = vpop.f32.mrf.mxu0
    %v1251 = vpop.f32.mrf.mxu0
    %1252 = vdwg.mxu0
    %v1253 = vmul.f32 %v193, 0.35355338
    %v1254 = vmul.f32 %v245, 0.35355338
    %v1255 = vmul.f32 %v297, 0.35355338
    %v1256 = vmul.f32 %v349, 0.35355338
    %v1257 = vmul.f32 %v392, 0.35355338
    %v1258 = vmul.f32 %v432, 0.35355338
    %v1259 = vmul.f32 %v472, 0.35355338
    %v1260 = vmul.f32 %v512, 0.35355338
    %v1261 = vpack.c.bf16 %v1253, %v1253
    %v1262 = vpack.c.bf16 %v1254, %v1254
    %v1263 = vpack.c.bf16 %v1255, %v1255
    %v1264 = vpack.c.bf16 %v1256, %v1256
    %v1265 = vpack.c.bf16 %v1257, %v1257
    %v1266 = vpack.c.bf16 %v1258, %v1258
    %v1267 = vpack.c.bf16 %v1259, %v1259
    %v1268 = vpack.c.bf16 %v1260, %v1260
    %v1269 = vpack.c.bf16 %v564, %v564
    %v1270 = vpack.c.bf16 %v616, %v616
    %v1271 = vpack.c.bf16 %v668, %v668
    %v1272 = vpack.c.bf16 %v720, %v720
    %v1273 = vpack.c.bf16 %v760, %v760
    %v1274 = vpack.c.bf16 %v800, %v800
    %v1275 = vpack.c.bf16 %v840, %v840
    %v1276 = vpack.c.bf16 %v880, %v880
    %v1277 = vpack.c.bf16 %v932, %v932
    %v1278 = vpack.c.bf16 %v984, %v984
    %v1279 = vpack.c.bf16 %v1036, %v1036
    %v1280 = vpack.c.bf16 %v1088, %v1088
    %v1281 = vpack.c.bf16 %v1128, %v1128
    %v1282 = vpack.c.bf16 %v1168, %v1168
    %v1283 = vpack.c.bf16 %v1208, %v1208
    %v1284 = vpack.c.bf16 %v1248, %v1248
    %vm1285 = vcmask 64512
    %v1287 = vsel %vm1285, %v1261, 0
    %v1290 = vsel %vm1285, %v1269, 0
    %1292 = vmatprep.subr.bf16.mxu0 0
    %1293 = vmatpush1.bf16.xpose.msra.mxu0 0
    %1294 = vmatprep.subr.bf16.mxu0 0
    %1295 = vmatpush1.bf16.xpose.msra.mxu0 0
    %1296 = vmatprep.subr.bf16.mxu0 0
    %1297 = vmatpush1.bf16.xpose.msra.mxu0 0
    %1298 = vmatprep.subr.bf16.mxu0 0
    %1299 = vmatpush1.bf16.xpose.msra.mxu0 0
    %1300 = vmatprep.subr.bf16.mxu0 0
    %1301 = vmatpush1.bf16.xpose.msra.mxu0 0
    %1302 = vmatprep.subr.bf16.mxu0 0
    %1303 = vmatpush1.bf16.xpose.msra.mxu0 0
    %1304 = vmatprep.subr.bf16.mxu0 0
    %1305 = vmatpush1.bf16.xpose.msra.mxu0 0
    %1306 = vmatprep.subr.bf16.mxu0 0
    %1307 = vmatpush1.bf16.xpose.msra.mxu0 %v1290
    %1308 = vmatprep.subr.bf16.mxu0 0
    %1309 = vmatpush2.bf16.xpose.msra.mxu0 0
    %1310 = vmatprep.subr.bf16.mxu0 0
    %1311 = vmatpush2.bf16.xpose.msra.mxu0 0
    %1312 = vmatprep.subr.bf16.mxu0 0
    %1313 = vmatpush2.bf16.xpose.msra.mxu0 0
    %1314 = vmatprep.subr.bf16.mxu0 0
    %1315 = vmatpush2.bf16.xpose.msra.mxu0 0
    %1316 = vmatprep.subr.bf16.mxu0 0
    %1317 = vmatpush2.bf16.xpose.msra.mxu0 0
    %1318 = vmatprep.subr.bf16.mxu0 0
    %1319 = vmatpush2.bf16.xpose.msra.mxu0 0
    %1320 = vmatprep.subr.bf16.mxu0 0
    %1321 = vmatpush2.bf16.xpose.msra.mxu0 0
    %1322 = vmatprep.subr.bf16.mxu0 0
    %1323 = vmatpush2.bf16.xpose.msra.mxu0 0
    %1324 = vmatprep.mubr.bf16.mxu0 0
    %1325 = vmatmul.mubr.bf16.gmra.mxu0 %v1287
    %v1326 = vpop.f32.mrf.mxu0
    %v1327 = vadd.f32 0.0, %v1326
    %v1328 = vpop.f32.mrf.mxu0
    %v1329 = vpop.f32.mrf.mxu0
    %v1330 = vpop.f32.mrf.mxu0
    %1331 = vdwg.mxu0
    %v1333 = vsel %vm1285, %v1262, 0
    %v1336 = vsel %vm1285, %v1270, 0
    %1338 = vmatprep.subr.bf16.mxu0 0
    %1339 = vmatpush1.bf16.xpose.msra.mxu0 0
    %1340 = vmatprep.subr.bf16.mxu0 0
    %1341 = vmatpush1.bf16.xpose.msra.mxu0 0
    %1342 = vmatprep.subr.bf16.mxu0 0
    %1343 = vmatpush1.bf16.xpose.msra.mxu0 0
    %1344 = vmatprep.subr.bf16.mxu0 0
    %1345 = vmatpush1.bf16.xpose.msra.mxu0 0
    %1346 = vmatprep.subr.bf16.mxu0 0
    %1347 = vmatpush1.bf16.xpose.msra.mxu0 0
    %1348 = vmatprep.subr.bf16.mxu0 0
    %1349 = vmatpush1.bf16.xpose.msra.mxu0 0
    %1350 = vmatprep.subr.bf16.mxu0 0
    %1351 = vmatpush1.bf16.xpose.msra.mxu0 0
    %1352 = vmatprep.subr.bf16.mxu0 0
    %1353 = vmatpush1.bf16.xpose.msra.mxu0 %v1336
    %1354 = vmatprep.subr.bf16.mxu0 0
    %1355 = vmatpush2.bf16.xpose.msra.mxu0 0
    %1356 = vmatprep.subr.bf16.mxu0 0
    %1357 = vmatpush2.bf16.xpose.msra.mxu0 0
    %1358 = vmatprep.subr.bf16.mxu0 0
    %1359 = vmatpush2.bf16.xpose.msra.mxu0 0
    %1360 = vmatprep.subr.bf16.mxu0 0
    %1361 = vmatpush2.bf16.xpose.msra.mxu0 0
    %1362 = vmatprep.subr.bf16.mxu0 0
    %1363 = vmatpush2.bf16.xpose.msra.mxu0 0
    %1364 = vmatprep.subr.bf16.mxu0 0
    %1365 = vmatpush2.bf16.xpose.msra.mxu0 0
    %1366 = vmatprep.subr.bf16.mxu0 0
    %1367 = vmatpush2.bf16.xpose.msra.mxu0 0
    %1368 = vmatprep.subr.bf16.mxu0 0
    %1369 = vmatpush2.bf16.xpose.msra.mxu0 0
    %1370 = vmatprep.mubr.bf16.mxu0 0
    %1371 = vmatmul.mubr.bf16.gmra.mxu0 %v1333
    %v1372 = vpop.f32.mrf.mxu0
    %v1373 = vadd.f32 0.0, %v1372
    %v1374 = vpop.f32.mrf.mxu0
    %v1375 = vpop.f32.mrf.mxu0
    %v1376 = vpop.f32.mrf.mxu0
    %1377 = vdwg.mxu0
    %v1379 = vsel %vm1285, %v1263, 0
    %v1382 = vsel %vm1285, %v1271, 0
    %1384 = vmatprep.subr.bf16.mxu0 0
    %1385 = vmatpush1.bf16.xpose.msra.mxu0 0
    %1386 = vmatprep.subr.bf16.mxu0 0
    %1387 = vmatpush1.bf16.xpose.msra.mxu0 0
    %1388 = vmatprep.subr.bf16.mxu0 0
    %1389 = vmatpush1.bf16.xpose.msra.mxu0 0
    %1390 = vmatprep.subr.bf16.mxu0 0
    %1391 = vmatpush1.bf16.xpose.msra.mxu0 0
    %1392 = vmatprep.subr.bf16.mxu0 0
    %1393 = vmatpush1.bf16.xpose.msra.mxu0 0
    %1394 = vmatprep.subr.bf16.mxu0 0
    %1395 = vmatpush1.bf16.xpose.msra.mxu0 0
    %1396 = vmatprep.subr.bf16.mxu0 0
    %1397 = vmatpush1.bf16.xpose.msra.mxu0 0
    %1398 = vmatprep.subr.bf16.mxu0 0
    %1399 = vmatpush1.bf16.xpose.msra.mxu0 %v1382
    %1400 = vmatprep.subr.bf16.mxu0 0
    %1401 = vmatpush2.bf16.xpose.msra.mxu0 0
    %1402 = vmatprep.subr.bf16.mxu0 0
    %1403 = vmatpush2.bf16.xpose.msra.mxu0 0
    %1404 = vmatprep.subr.bf16.mxu0 0
    %1405 = vmatpush2.bf16.xpose.msra.mxu0 0
    %1406 = vmatprep.subr.bf16.mxu0 0
    %1407 = vmatpush2.bf16.xpose.msra.mxu0 0
    %1408 = vmatprep.subr.bf16.mxu0 0
    %1409 = vmatpush2.bf16.xpose.msra.mxu0 0
    %1410 = vmatprep.subr.bf16.mxu0 0
    %1411 = vmatpush2.bf16.xpose.msra.mxu0 0
    %1412 = vmatprep.subr.bf16.mxu0 0
    %1413 = vmatpush2.bf16.xpose.msra.mxu0 0
    %1414 = vmatprep.subr.bf16.mxu0 0
    %1415 = vmatpush2.bf16.xpose.msra.mxu0 0
    %1416 = vmatprep.mubr.bf16.mxu0 0
    %1417 = vmatmul.mubr.bf16.gmra.mxu0 %v1379
    %v1418 = vpop.f32.mrf.mxu0
    %v1419 = vadd.f32 0.0, %v1418
    %v1420 = vpop.f32.mrf.mxu0
    %v1421 = vpop.f32.mrf.mxu0
    %v1422 = vpop.f32.mrf.mxu0
    %1423 = vdwg.mxu0
    %v1425 = vsel %vm1285, %v1264, 0
    %v1428 = vsel %vm1285, %v1272, 0
    %1430 = vmatprep.subr.bf16.mxu0 0
    %1431 = vmatpush1.bf16.xpose.msra.mxu0 0
    %1432 = vmatprep.subr.bf16.mxu0 0
    %1433 = vmatpush1.bf16.xpose.msra.mxu0 0
    %1434 = vmatprep.subr.bf16.mxu0 0
    %1435 = vmatpush1.bf16.xpose.msra.mxu0 0
    %1436 = vmatprep.subr.bf16.mxu0 0
    %1437 = vmatpush1.bf16.xpose.msra.mxu0 0
    %1438 = vmatprep.subr.bf16.mxu0 0
    %1439 = vmatpush1.bf16.xpose.msra.mxu0 0
    %1440 = vmatprep.subr.bf16.mxu0 0
    %1441 = vmatpush1.bf16.xpose.msra.mxu0 0
    %1442 = vmatprep.subr.bf16.mxu0 0
    %1443 = vmatpush1.bf16.xpose.msra.mxu0 0
    %1444 = vmatprep.subr.bf16.mxu0 0
    %1445 = vmatpush1.bf16.xpose.msra.mxu0 %v1428
    %1446 = vmatprep.subr.bf16.mxu0 0
    %1447 = vmatpush2.bf16.xpose.msra.mxu0 0
    %1448 = vmatprep.subr.bf16.mxu0 0
    %1449 = vmatpush2.bf16.xpose.msra.mxu0 0
    %1450 = vmatprep.subr.bf16.mxu0 0
    %1451 = vmatpush2.bf16.xpose.msra.mxu0 0
    %1452 = vmatprep.subr.bf16.mxu0 0
    %1453 = vmatpush2.bf16.xpose.msra.mxu0 0
    %1454 = vmatprep.subr.bf16.mxu0 0
    %1455 = vmatpush2.bf16.xpose.msra.mxu0 0
    %1456 = vmatprep.subr.bf16.mxu0 0
    %1457 = vmatpush2.bf16.xpose.msra.mxu0 0
    %1458 = vmatprep.subr.bf16.mxu0 0
    %1459 = vmatpush2.bf16.xpose.msra.mxu0 0
    %1460 = vmatprep.subr.bf16.mxu0 0
    %1461 = vmatpush2.bf16.xpose.msra.mxu0 0
    %1462 = vmatprep.mubr.bf16.mxu0 0
    %1463 = vmatmul.mubr.bf16.gmra.mxu0 %v1425
    %v1464 = vpop.f32.mrf.mxu0
    %v1465 = vadd.f32 0.0, %v1464
    %v1466 = vpop.f32.mrf.mxu0
    %v1467 = vpop.f32.mrf.mxu0
    %v1468 = vpop.f32.mrf.mxu0
    %1469 = vdwg.mxu0
    %v1471 = vsel %vm1285, %v1265, 0
    %v1474 = vsel %vm1285, %v1273, 0
    %1476 = vmatprep.subr.bf16.mxu0 0
    %1477 = vmatpush1.bf16.xpose.msra.mxu0 0
    %1478 = vmatprep.subr.bf16.mxu0 0
    %1479 = vmatpush1.bf16.xpose.msra.mxu0 0
    %1480 = vmatprep.subr.bf16.mxu0 0
    %1481 = vmatpush1.bf16.xpose.msra.mxu0 0
    %1482 = vmatprep.subr.bf16.mxu0 0
    %1483 = vmatpush1.bf16.xpose.msra.mxu0 0
    %1484 = vmatprep.subr.bf16.mxu0 0
    %1485 = vmatpush1.bf16.xpose.msra.mxu0 0
    %1486 = vmatprep.subr.bf16.mxu0 0
    %1487 = vmatpush1.bf16.xpose.msra.mxu0 0
    %1488 = vmatprep.subr.bf16.mxu0 0
    %1489 = vmatpush1.bf16.xpose.msra.mxu0 0
    %1490 = vmatprep.subr.bf16.mxu0 0
    %1491 = vmatpush1.bf16.xpose.msra.mxu0 %v1474
    %1492 = vmatprep.subr.bf16.mxu0 0
    %1493 = vmatpush2.bf16.xpose.msra.mxu0 0
    %1494 = vmatprep.subr.bf16.mxu0 0
    %1495 = vmatpush2.bf16.xpose.msra.mxu0 0
    %1496 = vmatprep.subr.bf16.mxu0 0
    %1497 = vmatpush2.bf16.xpose.msra.mxu0 0
    %1498 = vmatprep.subr.bf16.mxu0 0
    %1499 = vmatpush2.bf16.xpose.msra.mxu0 0
    %1500 = vmatprep.subr.bf16.mxu0 0
    %1501 = vmatpush2.bf16.xpose.msra.mxu0 0
    %1502 = vmatprep.subr.bf16.mxu0 0
    %1503 = vmatpush2.bf16.xpose.msra.mxu0 0
    %1504 = vmatprep.subr.bf16.mxu0 0
    %1505 = vmatpush2.bf16.xpose.msra.mxu0 0
    %1506 = vmatprep.subr.bf16.mxu0 0
    %1507 = vmatpush2.bf16.xpose.msra.mxu0 0
    %1508 = vmatprep.mubr.bf16.mxu0 0
    %1509 = vmatmul.mubr.bf16.gmra.mxu0 %v1471
    %v1510 = vpop.f32.mrf.mxu0
    %v1511 = vadd.f32 0.0, %v1510
    %v1512 = vpop.f32.mrf.mxu0
    %v1513 = vpop.f32.mrf.mxu0
    %v1514 = vpop.f32.mrf.mxu0
    %1515 = vdwg.mxu0
    %v1517 = vsel %vm1285, %v1266, 0
    %v1520 = vsel %vm1285, %v1274, 0
    %1522 = vmatprep.subr.bf16.mxu0 0
    %1523 = vmatpush1.bf16.xpose.msra.mxu0 0
    %1524 = vmatprep.subr.bf16.mxu0 0
    %1525 = vmatpush1.bf16.xpose.msra.mxu0 0
    %1526 = vmatprep.subr.bf16.mxu0 0
    %1527 = vmatpush1.bf16.xpose.msra.mxu0 0
    %1528 = vmatprep.subr.bf16.mxu0 0
    %1529 = vmatpush1.bf16.xpose.msra.mxu0 0
    %1530 = vmatprep.subr.bf16.mxu0 0
    %1531 = vmatpush1.bf16.xpose.msra.mxu0 0
    %1532 = vmatprep.subr.bf16.mxu0 0
    %1533 = vmatpush1.bf16.xpose.msra.mxu0 0
    %1534 = vmatprep.subr.bf16.mxu0 0
    %1535 = vmatpush1.bf16.xpose.msra.mxu0 0
    %1536 = vmatprep.subr.bf16.mxu0 0
    %1537 = vmatpush1.bf16.xpose.msra.mxu0 %v1520
    %1538 = vmatprep.subr.bf16.mxu0 0
    %1539 = vmatpush2.bf16.xpose.msra.mxu0 0
    %1540 = vmatprep.subr.bf16.mxu0 0
    %1541 = vmatpush2.bf16.xpose.msra.mxu0 0
    %1542 = vmatprep.subr.bf16.mxu0 0
    %1543 = vmatpush2.bf16.xpose.msra.mxu0 0
    %1544 = vmatprep.subr.bf16.mxu0 0
    %1545 = vmatpush2.bf16.xpose.msra.mxu0 0
    %1546 = vmatprep.subr.bf16.mxu0 0
    %1547 = vmatpush2.bf16.xpose.msra.mxu0 0
    %1548 = vmatprep.subr.bf16.mxu0 0
    %1549 = vmatpush2.bf16.xpose.msra.mxu0 0
    %1550 = vmatprep.subr.bf16.mxu0 0
    %1551 = vmatpush2.bf16.xpose.msra.mxu0 0
    %1552 = vmatprep.subr.bf16.mxu0 0
    %1553 = vmatpush2.bf16.xpose.msra.mxu0 0
    %1554 = vmatprep.mubr.bf16.mxu0 0
    %1555 = vmatmul.mubr.bf16.gmra.mxu0 %v1517
    %v1556 = vpop.f32.mrf.mxu0
    %v1557 = vadd.f32 0.0, %v1556
    %v1558 = vpop.f32.mrf.mxu0
    %v1559 = vpop.f32.mrf.mxu0
    %v1560 = vpop.f32.mrf.mxu0
    %1561 = vdwg.mxu0
    %v1563 = vsel %vm1285, %v1267, 0
    %v1566 = vsel %vm1285, %v1275, 0
    %1568 = vmatprep.subr.bf16.mxu0 0
    %1569 = vmatpush1.bf16.xpose.msra.mxu0 0
    %1570 = vmatprep.subr.bf16.mxu0 0
    %1571 = vmatpush1.bf16.xpose.msra.mxu0 0
    %1572 = vmatprep.subr.bf16.mxu0 0
    %1573 = vmatpush1.bf16.xpose.msra.mxu0 0
    %1574 = vmatprep.subr.bf16.mxu0 0
    %1575 = vmatpush1.bf16.xpose.msra.mxu0 0
    %1576 = vmatprep.subr.bf16.mxu0 0
    %1577 = vmatpush1.bf16.xpose.msra.mxu0 0
    %1578 = vmatprep.subr.bf16.mxu0 0
    %1579 = vmatpush1.bf16.xpose.msra.mxu0 0
    %1580 = vmatprep.subr.bf16.mxu0 0
    %1581 = vmatpush1.bf16.xpose.msra.mxu0 0
    %1582 = vmatprep.subr.bf16.mxu0 0
    %1583 = vmatpush1.bf16.xpose.msra.mxu0 %v1566
    %1584 = vmatprep.subr.bf16.mxu0 0
    %1585 = vmatpush2.bf16.xpose.msra.mxu0 0
    %1586 = vmatprep.subr.bf16.mxu0 0
    %1587 = vmatpush2.bf16.xpose.msra.mxu0 0
    %1588 = vmatprep.subr.bf16.mxu0 0
    %1589 = vmatpush2.bf16.xpose.msra.mxu0 0
    %1590 = vmatprep.subr.bf16.mxu0 0
    %1591 = vmatpush2.bf16.xpose.msra.mxu0 0
    %1592 = vmatprep.subr.bf16.mxu0 0
    %1593 = vmatpush2.bf16.xpose.msra.mxu0 0
    %1594 = vmatprep.subr.bf16.mxu0 0
    %1595 = vmatpush2.bf16.xpose.msra.mxu0 0
    %1596 = vmatprep.subr.bf16.mxu0 0
    %1597 = vmatpush2.bf16.xpose.msra.mxu0 0
    %1598 = vmatprep.subr.bf16.mxu0 0
    %1599 = vmatpush2.bf16.xpose.msra.mxu0 0
    %1600 = vmatprep.mubr.bf16.mxu0 0
    %1601 = vmatmul.mubr.bf16.gmra.mxu0 %v1563
    %v1602 = vpop.f32.mrf.mxu0
    %v1603 = vadd.f32 0.0, %v1602
    %v1604 = vpop.f32.mrf.mxu0
    %v1605 = vpop.f32.mrf.mxu0
    %v1606 = vpop.f32.mrf.mxu0
    %1607 = vdwg.mxu0
    %v1609 = vsel %vm1285, %v1268, 0
    %v1612 = vsel %vm1285, %v1276, 0
    %1614 = vmatprep.subr.bf16.mxu0 0
    %1615 = vmatpush1.bf16.xpose.msra.mxu0 0
    %1616 = vmatprep.subr.bf16.mxu0 0
    %1617 = vmatpush1.bf16.xpose.msra.mxu0 0
    %1618 = vmatprep.subr.bf16.mxu0 0
    %1619 = vmatpush1.bf16.xpose.msra.mxu0 0
    %1620 = vmatprep.subr.bf16.mxu0 0
    %1621 = vmatpush1.bf16.xpose.msra.mxu0 0
    %1622 = vmatprep.subr.bf16.mxu0 0
    %1623 = vmatpush1.bf16.xpose.msra.mxu0 0
    %1624 = vmatprep.subr.bf16.mxu0 0
    %1625 = vmatpush1.bf16.xpose.msra.mxu0 0
    %1626 = vmatprep.subr.bf16.mxu0 0
    %1627 = vmatpush1.bf16.xpose.msra.mxu0 0
    %1628 = vmatprep.subr.bf16.mxu0 0
    %1629 = vmatpush1.bf16.xpose.msra.mxu0 %v1612
    %1630 = vmatprep.subr.bf16.mxu0 0
    %1631 = vmatpush2.bf16.xpose.msra.mxu0 0
    %1632 = vmatprep.subr.bf16.mxu0 0
    %1633 = vmatpush2.bf16.xpose.msra.mxu0 0
    %1634 = vmatprep.subr.bf16.mxu0 0
    %1635 = vmatpush2.bf16.xpose.msra.mxu0 0
    %1636 = vmatprep.subr.bf16.mxu0 0
    %1637 = vmatpush2.bf16.xpose.msra.mxu0 0
    %1638 = vmatprep.subr.bf16.mxu0 0
    %1639 = vmatpush2.bf16.xpose.msra.mxu0 0
    %1640 = vmatprep.subr.bf16.mxu0 0
    %1641 = vmatpush2.bf16.xpose.msra.mxu0 0
    %1642 = vmatprep.subr.bf16.mxu0 0
    %1643 = vmatpush2.bf16.xpose.msra.mxu0 0
    %1644 = vmatprep.subr.bf16.mxu0 0
    %1645 = vmatpush2.bf16.xpose.msra.mxu0 0
    %1646 = vmatprep.mubr.bf16.mxu0 0
    %1647 = vmatmul.mubr.bf16.gmra.mxu0 %v1609
    %v1648 = vpop.f32.mrf.mxu0
    %v1649 = vadd.f32 0.0, %v1648
    %v1650 = vpop.f32.mrf.mxu0
    %v1651 = vpop.f32.mrf.mxu0
    %v1652 = vpop.f32.mrf.mxu0
    %1653 = vdwg.mxu0
    %v1654 = vsel %vm1285, %v1327, -inf
    %1655 = vmax.xlane.f32.xlu0 %v1654
    %v1656 = vpop.xlane.xlu0 %1655
    %v1657 = vsel %vm1285, %v1373, -inf
    %1658 = vmax.xlane.f32.xlu0 %v1657
    %v1659 = vpop.xlane.xlu0 %1658
    %v1660 = vsel %vm1285, %v1419, -inf
    %1661 = vmax.xlane.f32.xlu0 %v1660
    %v1662 = vpop.xlane.xlu0 %1661
    %v1663 = vsel %vm1285, %v1465, -inf
    %1664 = vmax.xlane.f32.xlu0 %v1663
    %v1665 = vpop.xlane.xlu0 %1664
    %v1666 = vsel %vm1285, %v1511, -inf
    %1667 = vmax.xlane.f32.xlu0 %v1666
    %v1668 = vpop.xlane.xlu0 %1667
    %v1669 = vsel %vm1285, %v1557, -inf
    %1670 = vmax.xlane.f32.xlu0 %v1669
    %v1671 = vpop.xlane.xlu0 %1670
    %v1672 = vsel %vm1285, %v1603, -inf
    %1673 = vmax.xlane.f32.xlu0 %v1672
    %v1674 = vpop.xlane.xlu0 %1673
    %v1675 = vsel %vm1285, %v1649, -inf
    %1676 = vmax.xlane.f32.xlu0 %v1675
    %v1677 = vpop.xlane.xlu0 %1676
    %vm1678 = vcmp.ge.f32.partialorder %v1327, %v1656
    %vm1679 = vcmp.ge.f32.partialorder %v1373, %v1659
    %vm1680 = vcmp.ge.f32.partialorder %v1419, %v1662
    %vm1681 = vcmp.ge.f32.partialorder %v1465, %v1665
    %vm1682 = vcmp.ge.f32.partialorder %v1511, %v1668
    %vm1683 = vcmp.ge.f32.partialorder %v1557, %v1671
    %vm1684 = vcmp.ge.f32.partialorder %v1603, %v1674
    %vm1685 = vcmp.ge.f32.partialorder %v1649, %v1677
    %v1686 = vsel %vm1678, -inf, %v1327
    %v1687 = vsel %vm1679, -inf, %v1373
    %v1688 = vsel %vm1680, -inf, %v1419
    %v1689 = vsel %vm1681, -inf, %v1465
    %v1690 = vsel %vm1682, -inf, %v1511
    %v1691 = vsel %vm1683, -inf, %v1557
    %v1692 = vsel %vm1684, -inf, %v1603
    %v1693 = vsel %vm1685, -inf, %v1649
    %v1694 = vsel %vm1285, %v1686, -inf
    %1695 = vmax.xlane.f32.xlu0 %v1694
    %v1696 = vpop.xlane.xlu0 %1695
    %v1697 = vsel %vm1285, %v1687, -inf
    %1698 = vmax.xlane.f32.xlu0 %v1697
    %v1699 = vpop.xlane.xlu0 %1698
    %v1700 = vsel %vm1285, %v1688, -inf
    %1701 = vmax.xlane.f32.xlu0 %v1700
    %v1702 = vpop.xlane.xlu0 %1701
    %v1703 = vsel %vm1285, %v1689, -inf
    %1704 = vmax.xlane.f32.xlu0 %v1703
    %v1705 = vpop.xlane.xlu0 %1704
    %v1706 = vsel %vm1285, %v1690, -inf
    %1707 = vmax.xlane.f32.xlu0 %v1706
    %v1708 = vpop.xlane.xlu0 %1707
    %v1709 = vsel %vm1285, %v1691, -inf
    %1710 = vmax.xlane.f32.xlu0 %v1709
    %v1711 = vpop.xlane.xlu0 %1710
    %v1712 = vsel %vm1285, %v1692, -inf
    %1713 = vmax.xlane.f32.xlu0 %v1712
    %v1714 = vpop.xlane.xlu0 %1713
    %v1715 = vsel %vm1285, %v1693, -inf
    %1716 = vmax.xlane.f32.xlu0 %v1715
    %v1717 = vpop.xlane.xlu0 %1716
    %vm1718 = vcmp.ge.f32.partialorder %v1686, %v1696
    %vm1719 = vcmp.ge.f32.partialorder %v1687, %v1699
    %vm1720 = vcmp.ge.f32.partialorder %v1688, %v1702
    %vm1721 = vcmp.ge.f32.partialorder %v1689, %v1705
    %vm1722 = vcmp.ge.f32.partialorder %v1690, %v1708
    %vm1723 = vcmp.ge.f32.partialorder %v1691, %v1711
    %vm1724 = vcmp.ge.f32.partialorder %v1692, %v1714
    %vm1725 = vcmp.ge.f32.partialorder %v1693, %v1717
    %v1726 = vsel %vm1718, -inf, %v1686
    %v1727 = vsel %vm1719, -inf, %v1687
    %v1728 = vsel %vm1720, -inf, %v1688
    %v1729 = vsel %vm1721, -inf, %v1689
    %v1730 = vsel %vm1722, -inf, %v1690
    %v1731 = vsel %vm1723, -inf, %v1691
    %v1732 = vsel %vm1724, -inf, %v1692
    %v1733 = vsel %vm1725, -inf, %v1693
    %v1734 = vsel %vm1285, %v1726, -inf
    %1735 = vmax.xlane.f32.xlu0 %v1734
    %v1736 = vpop.xlane.xlu0 %1735
    %v1737 = vsel %vm1285, %v1727, -inf
    %1738 = vmax.xlane.f32.xlu0 %v1737
    %v1739 = vpop.xlane.xlu0 %1738
    %v1740 = vsel %vm1285, %v1728, -inf
    %1741 = vmax.xlane.f32.xlu0 %v1740
    %v1742 = vpop.xlane.xlu0 %1741
    %v1743 = vsel %vm1285, %v1729, -inf
    %1744 = vmax.xlane.f32.xlu0 %v1743
    %v1745 = vpop.xlane.xlu0 %1744
    %v1746 = vsel %vm1285, %v1730, -inf
    %1747 = vmax.xlane.f32.xlu0 %v1746
    %v1748 = vpop.xlane.xlu0 %1747
    %v1749 = vsel %vm1285, %v1731, -inf
    %1750 = vmax.xlane.f32.xlu0 %v1749
    %v1751 = vpop.xlane.xlu0 %1750
    %v1752 = vsel %vm1285, %v1732, -inf
    %1753 = vmax.xlane.f32.xlu0 %v1752
    %v1754 = vpop.xlane.xlu0 %1753
    %v1755 = vsel %vm1285, %v1733, -inf
    %1756 = vmax.xlane.f32.xlu0 %v1755
    %v1757 = vpop.xlane.xlu0 %1756
    %vm1758 = vcmp.ge.f32.partialorder %v1726, %v1736
    %vm1759 = vcmp.ge.f32.partialorder %v1727, %v1739
    %vm1760 = vcmp.ge.f32.partialorder %v1728, %v1742
    %vm1761 = vcmp.ge.f32.partialorder %v1729, %v1745
    %vm1762 = vcmp.ge.f32.partialorder %v1730, %v1748
    %vm1763 = vcmp.ge.f32.partialorder %v1731, %v1751
    %vm1764 = vcmp.ge.f32.partialorder %v1732, %v1754
    %vm1765 = vcmp.ge.f32.partialorder %v1733, %v1757
    %v1766 = vsel %vm1758, -inf, %v1726
    %v1767 = vsel %vm1759, -inf, %v1727
    %v1768 = vsel %vm1760, -inf, %v1728
    %v1769 = vsel %vm1761, -inf, %v1729
    %v1770 = vsel %vm1762, -inf, %v1730
    %v1771 = vsel %vm1763, -inf, %v1731
    %v1772 = vsel %vm1764, -inf, %v1732
    %v1773 = vsel %vm1765, -inf, %v1733
    %v1774 = vsel %vm1285, %v1766, -inf
    %1775 = vmax.xlane.f32.xlu0 %v1774
    %v1776 = vpop.xlane.xlu0 %1775
    %v1777 = vsel %vm1285, %v1767, -inf
    %1778 = vmax.xlane.f32.xlu0 %v1777
    %v1779 = vpop.xlane.xlu0 %1778
    %v1780 = vsel %vm1285, %v1768, -inf
    %1781 = vmax.xlane.f32.xlu0 %v1780
    %v1782 = vpop.xlane.xlu0 %1781
    %v1783 = vsel %vm1285, %v1769, -inf
    %1784 = vmax.xlane.f32.xlu0 %v1783
    %v1785 = vpop.xlane.xlu0 %1784
    %v1786 = vsel %vm1285, %v1770, -inf
    %1787 = vmax.xlane.f32.xlu0 %v1786
    %v1788 = vpop.xlane.xlu0 %1787
    %v1789 = vsel %vm1285, %v1771, -inf
    %1790 = vmax.xlane.f32.xlu0 %v1789
    %v1791 = vpop.xlane.xlu0 %1790
    %v1792 = vsel %vm1285, %v1772, -inf
    %1793 = vmax.xlane.f32.xlu0 %v1792
    %v1794 = vpop.xlane.xlu0 %1793
    %v1795 = vsel %vm1285, %v1773, -inf
    %1796 = vmax.xlane.f32.xlu0 %v1795
    %v1797 = vpop.xlane.xlu0 %1796
    %vm1798 = vcmp.ge.f32.partialorder %v1327, %v1776
    %vm1799 = vcmp.ge.f32.partialorder %v1373, %v1779
    %vm1800 = vcmp.ge.f32.partialorder %v1419, %v1782
    %vm1801 = vcmp.ge.f32.partialorder %v1465, %v1785
    %vm1802 = vcmp.ge.f32.partialorder %v1511, %v1788
    %vm1803 = vcmp.ge.f32.partialorder %v1557, %v1791
    %vm1804 = vcmp.ge.f32.partialorder %v1603, %v1794
    %vm1805 = vcmp.ge.f32.partialorder %v1649, %v1797
    %v1806 = vsub.f32 %v1327, %v1656
    %v1807 = vsub.f32 %v1373, %v1659
    %v1808 = vsub.f32 %v1419, %v1662
    %v1809 = vsub.f32 %v1465, %v1665
    %v1810 = vsub.f32 %v1511, %v1668
    %v1811 = vsub.f32 %v1557, %v1671
    %v1812 = vsub.f32 %v1603, %v1674
    %v1813 = vsub.f32 %v1649, %v1677
    %v1814 = vmul.f32 %v1806, 1.442695
    %v1815 = vpow.pop %v1814
    %v1816 = vmul.f32 %v1807, 1.442695
    %v1817 = vpow.pop %v1816
    %v1818 = vmul.f32 %v1808, 1.442695
    %v1819 = vpow.pop %v1818
    %v1820 = vmul.f32 %v1809, 1.442695
    %v1821 = vpow.pop %v1820
    %v1822 = vmul.f32 %v1810, 1.442695
    %v1823 = vpow.pop %v1822
    %v1824 = vmul.f32 %v1811, 1.442695
    %v1825 = vpow.pop %v1824
    %v1826 = vmul.f32 %v1812, 1.442695
    %v1827 = vpow.pop %v1826
    %v1828 = vmul.f32 %v1813, 1.442695
    %v1829 = vpow.pop %v1828
    %v1830 = vsel %vm1798, %v1815, 0.0
    %v1831 = vsel %vm1799, %v1817, 0.0
    %v1832 = vsel %vm1800, %v1819, 0.0
    %v1833 = vsel %vm1801, %v1821, 0.0
    %v1834 = vsel %vm1802, %v1823, 0.0
    %v1835 = vsel %vm1803, %v1825, 0.0
    %v1836 = vsel %vm1804, %v1827, 0.0
    %v1837 = vsel %vm1805, %v1829, 0.0
    %v1838 = vsel %vm1285, %v1830, 0.0
    %1839 = vadd.xlane.f32.xlu0 %v1838
    %v1840 = vpop.xlane.xlu0 %1839
    %v1841 = vsel %vm1285, %v1831, 0.0
    %1842 = vadd.xlane.f32.xlu0 %v1841
    %v1843 = vpop.xlane.xlu0 %1842
    %v1844 = vsel %vm1285, %v1832, 0.0
    %1845 = vadd.xlane.f32.xlu0 %v1844
    %v1846 = vpop.xlane.xlu0 %1845
    %v1847 = vsel %vm1285, %v1833, 0.0
    %1848 = vadd.xlane.f32.xlu0 %v1847
    %v1849 = vpop.xlane.xlu0 %1848
    %v1850 = vsel %vm1285, %v1834, 0.0
    %1851 = vadd.xlane.f32.xlu0 %v1850
    %v1852 = vpop.xlane.xlu0 %1851
    %v1853 = vsel %vm1285, %v1835, 0.0
    %1854 = vadd.xlane.f32.xlu0 %v1853
    %v1855 = vpop.xlane.xlu0 %1854
    %v1856 = vsel %vm1285, %v1836, 0.0
    %1857 = vadd.xlane.f32.xlu0 %v1856
    %v1858 = vpop.xlane.xlu0 %1857
    %v1859 = vsel %vm1285, %v1837, 0.0
    %1860 = vadd.xlane.f32.xlu0 %v1859
    %v1861 = vpop.xlane.xlu0 %1860
    %v1862 = vrcp.pop %v1840
    %v1863 = vrcp.pop %v1843
    %v1864 = vrcp.pop %v1846
    %v1865 = vrcp.pop %v1849
    %v1866 = vrcp.pop %v1852
    %v1867 = vrcp.pop %v1855
    %v1868 = vrcp.pop %v1858
    %v1869 = vrcp.pop %v1861
    %v1870 = vmul.f32 %v1830, %v1862
    %v1871 = vmul.f32 %v1831, %v1863
    %v1872 = vmul.f32 %v1832, %v1864
    %v1873 = vmul.f32 %v1833, %v1865
    %v1874 = vmul.f32 %v1834, %v1866
    %v1875 = vmul.f32 %v1835, %v1867
    %v1876 = vmul.f32 %v1836, %v1868
    %v1877 = vmul.f32 %v1837, %v1869
    %v1878 = vpack.c.bf16 %v1870, %v1870
    %v1879 = vpack.c.bf16 %v1871, %v1871
    %v1880 = vpack.c.bf16 %v1872, %v1872
    %v1881 = vpack.c.bf16 %v1873, %v1873
    %v1882 = vpack.c.bf16 %v1874, %v1874
    %v1883 = vpack.c.bf16 %v1875, %v1875
    %v1884 = vpack.c.bf16 %v1876, %v1876
    %v1885 = vpack.c.bf16 %v1877, %v1877
    %v1887 = vsel %vm1285, %v1878, 0
    %vm1889 = vcmask 1043456
    %v1891 = vsel %vm1889, %v1277, 0
    %1893 = vmatprep.subr.bf16.mxu0 0
    %1894 = vmatpush1.bf16.msra.mxu0 0
    %1895 = vmatprep.subr.bf16.mxu0 0
    %1896 = vmatpush1.bf16.msra.mxu0 0
    %1897 = vmatprep.subr.bf16.mxu0 0
    %1898 = vmatpush1.bf16.msra.mxu0 0
    %1899 = vmatprep.subr.bf16.mxu0 0
    %1900 = vmatpush1.bf16.msra.mxu0 0
    %1901 = vmatprep.subr.bf16.mxu0 0
    %1902 = vmatpush1.bf16.msra.mxu0 0
    %1903 = vmatprep.subr.bf16.mxu0 0
    %1904 = vmatpush1.bf16.msra.mxu0 0
    %1905 = vmatprep.subr.bf16.mxu0 0
    %1906 = vmatpush1.bf16.msra.mxu0 0
    %1907 = vmatprep.subr.bf16.mxu0 0
    %1908 = vmatpush1.bf16.msra.mxu0 %v1891
    %1909 = vmatprep.subr.bf16.mxu0 0
    %1910 = vmatpush2.bf16.msra.mxu0 0
    %1911 = vmatprep.subr.bf16.mxu0 0
    %1912 = vmatpush2.bf16.msra.mxu0 0
    %1913 = vmatprep.subr.bf16.mxu0 0
    %1914 = vmatpush2.bf16.msra.mxu0 0
    %1915 = vmatprep.subr.bf16.mxu0 0
    %1916 = vmatpush2.bf16.msra.mxu0 0
    %1917 = vmatprep.subr.bf16.mxu0 0
    %1918 = vmatpush2.bf16.msra.mxu0 0
    %1919 = vmatprep.subr.bf16.mxu0 0
    %1920 = vmatpush2.bf16.msra.mxu0 0
    %1921 = vmatprep.subr.bf16.mxu0 0
    %1922 = vmatpush2.bf16.msra.mxu0 0
    %1923 = vmatprep.subr.bf16.mxu0 0
    %1924 = vmatpush2.bf16.msra.mxu0 0
    %1925 = vmatprep.mubr.bf16.mxu0 0
    %1926 = vmatmul.mubr.bf16.gmra.mxu0 %v1887
    %v1927 = vpop.f32.mrf.mxu0
    %v1928 = vadd.f32 0.0, %v1927
    %v1929 = vpop.f32.mrf.mxu0
    %v1930 = vpop.f32.mrf.mxu0
    %v1931 = vpop.f32.mrf.mxu0
    %1932 = vdwg.mxu0
    %v1934 = vsel %vm1285, %v1879, 0
    %v1937 = vsel %vm1889, %v1278, 0
    %1939 = vmatprep.subr.bf16.mxu0 0
    %1940 = vmatpush1.bf16.msra.mxu0 0
    %1941 = vmatprep.subr.bf16.mxu0 0
    %1942 = vmatpush1.bf16.msra.mxu0 0
    %1943 = vmatprep.subr.bf16.mxu0 0
    %1944 = vmatpush1.bf16.msra.mxu0 0
    %1945 = vmatprep.subr.bf16.mxu0 0
    %1946 = vmatpush1.bf16.msra.mxu0 0
    %1947 = vmatprep.subr.bf16.mxu0 0
    %1948 = vmatpush1.bf16.msra.mxu0 0
    %1949 = vmatprep.subr.bf16.mxu0 0
    %1950 = vmatpush1.bf16.msra.mxu0 0
    %1951 = vmatprep.subr.bf16.mxu0 0
    %1952 = vmatpush1.bf16.msra.mxu0 0
    %1953 = vmatprep.subr.bf16.mxu0 0
    %1954 = vmatpush1.bf16.msra.mxu0 %v1937
    %1955 = vmatprep.subr.bf16.mxu0 0
    %1956 = vmatpush2.bf16.msra.mxu0 0
    %1957 = vmatprep.subr.bf16.mxu0 0
    %1958 = vmatpush2.bf16.msra.mxu0 0
    %1959 = vmatprep.subr.bf16.mxu0 0
    %1960 = vmatpush2.bf16.msra.mxu0 0
    %1961 = vmatprep.subr.bf16.mxu0 0
    %1962 = vmatpush2.bf16.msra.mxu0 0
    %1963 = vmatprep.subr.bf16.mxu0 0
    %1964 = vmatpush2.bf16.msra.mxu0 0
    %1965 = vmatprep.subr.bf16.mxu0 0
    %1966 = vmatpush2.bf16.msra.mxu0 0
    %1967 = vmatprep.subr.bf16.mxu0 0
    %1968 = vmatpush2.bf16.msra.mxu0 0
    %1969 = vmatprep.subr.bf16.mxu0 0
    %1970 = vmatpush2.bf16.msra.mxu0 0
    %1971 = vmatprep.mubr.bf16.mxu0 0
    %1972 = vmatmul.mubr.bf16.gmra.mxu0 %v1934
    %v1973 = vpop.f32.mrf.mxu0
    %v1974 = vadd.f32 0.0, %v1973
    %v1975 = vpop.f32.mrf.mxu0
    %v1976 = vpop.f32.mrf.mxu0
    %v1977 = vpop.f32.mrf.mxu0
    %1978 = vdwg.mxu0
    %v1980 = vsel %vm1285, %v1880, 0
    %v1983 = vsel %vm1889, %v1279, 0
    %1985 = vmatprep.subr.bf16.mxu0 0
    %1986 = vmatpush1.bf16.msra.mxu0 0
    %1987 = vmatprep.subr.bf16.mxu0 0
    %1988 = vmatpush1.bf16.msra.mxu0 0
    %1989 = vmatprep.subr.bf16.mxu0 0
    %1990 = vmatpush1.bf16.msra.mxu0 0
    %1991 = vmatprep.subr.bf16.mxu0 0
    %1992 = vmatpush1.bf16.msra.mxu0 0
    %1993 = vmatprep.subr.bf16.mxu0 0
    %1994 = vmatpush1.bf16.msra.mxu0 0
    %1995 = vmatprep.subr.bf16.mxu0 0
    %1996 = vmatpush1.bf16.msra.mxu0 0
    %1997 = vmatprep.subr.bf16.mxu0 0
    %1998 = vmatpush1.bf16.msra.mxu0 0
    %1999 = vmatprep.subr.bf16.mxu0 0
    %2000 = vmatpush1.bf16.msra.mxu0 %v1983
    %2001 = vmatprep.subr.bf16.mxu0 0
    %2002 = vmatpush2.bf16.msra.mxu0 0
    %2003 = vmatprep.subr.bf16.mxu0 0
    %2004 = vmatpush2.bf16.msra.mxu0 0
    %2005 = vmatprep.subr.bf16.mxu0 0
    %2006 = vmatpush2.bf16.msra.mxu0 0
    %2007 = vmatprep.subr.bf16.mxu0 0
    %2008 = vmatpush2.bf16.msra.mxu0 0
    %2009 = vmatprep.subr.bf16.mxu0 0
    %2010 = vmatpush2.bf16.msra.mxu0 0
    %2011 = vmatprep.subr.bf16.mxu0 0
    %2012 = vmatpush2.bf16.msra.mxu0 0
    %2013 = vmatprep.subr.bf16.mxu0 0
    %2014 = vmatpush2.bf16.msra.mxu0 0
    %2015 = vmatprep.subr.bf16.mxu0 0
    %2016 = vmatpush2.bf16.msra.mxu0 0
    %2017 = vmatprep.mubr.bf16.mxu0 0
    %2018 = vmatmul.mubr.bf16.gmra.mxu0 %v1980
    %v2019 = vpop.f32.mrf.mxu0
    %v2020 = vadd.f32 0.0, %v2019
    %v2021 = vpop.f32.mrf.mxu0
    %v2022 = vpop.f32.mrf.mxu0
    %v2023 = vpop.f32.mrf.mxu0
    %2024 = vdwg.mxu0
    %v2026 = vsel %vm1285, %v1881, 0
    %v2029 = vsel %vm1889, %v1280, 0
    %2031 = vmatprep.subr.bf16.mxu0 0
    %2032 = vmatpush1.bf16.msra.mxu0 0
    %2033 = vmatprep.subr.bf16.mxu0 0
    %2034 = vmatpush1.bf16.msra.mxu0 0
    %2035 = vmatprep.subr.bf16.mxu0 0
    %2036 = vmatpush1.bf16.msra.mxu0 0
    %2037 = vmatprep.subr.bf16.mxu0 0
    %2038 = vmatpush1.bf16.msra.mxu0 0
    %2039 = vmatprep.subr.bf16.mxu0 0
    %2040 = vmatpush1.bf16.msra.mxu0 0
    %2041 = vmatprep.subr.bf16.mxu0 0
    %2042 = vmatpush1.bf16.msra.mxu0 0
    %2043 = vmatprep.subr.bf16.mxu0 0
    %2044 = vmatpush1.bf16.msra.mxu0 0
    %2045 = vmatprep.subr.bf16.mxu0 0
    %2046 = vmatpush1.bf16.msra.mxu0 %v2029
    %2047 = vmatprep.subr.bf16.mxu0 0
    %2048 = vmatpush2.bf16.msra.mxu0 0
    %2049 = vmatprep.subr.bf16.mxu0 0
    %2050 = vmatpush2.bf16.msra.mxu0 0
    %2051 = vmatprep.subr.bf16.mxu0 0
    %2052 = vmatpush2.bf16.msra.mxu0 0
    %2053 = vmatprep.subr.bf16.mxu0 0
    %2054 = vmatpush2.bf16.msra.mxu0 0
    %2055 = vmatprep.subr.bf16.mxu0 0
    %2056 = vmatpush2.bf16.msra.mxu0 0
    %2057 = vmatprep.subr.bf16.mxu0 0
    %2058 = vmatpush2.bf16.msra.mxu0 0
    %2059 = vmatprep.subr.bf16.mxu0 0
    %2060 = vmatpush2.bf16.msra.mxu0 0
    %2061 = vmatprep.subr.bf16.mxu0 0
    %2062 = vmatpush2.bf16.msra.mxu0 0
    %2063 = vmatprep.mubr.bf16.mxu0 0
    %2064 = vmatmul.mubr.bf16.gmra.mxu0 %v2026
    %v2065 = vpop.f32.mrf.mxu0
    %v2066 = vadd.f32 0.0, %v2065
    %v2067 = vpop.f32.mrf.mxu0
    %v2068 = vpop.f32.mrf.mxu0
    %v2069 = vpop.f32.mrf.mxu0
    %2070 = vdwg.mxu0
    %v2072 = vsel %vm1285, %v1882, 0
    %v2075 = vsel %vm1889, %v1281, 0
    %2077 = vmatprep.subr.bf16.mxu0 0
    %2078 = vmatpush1.bf16.msra.mxu0 0
    %2079 = vmatprep.subr.bf16.mxu0 0
    %2080 = vmatpush1.bf16.msra.mxu0 0
    %2081 = vmatprep.subr.bf16.mxu0 0
    %2082 = vmatpush1.bf16.msra.mxu0 0
    %2083 = vmatprep.subr.bf16.mxu0 0
    %2084 = vmatpush1.bf16.msra.mxu0 0
    %2085 = vmatprep.subr.bf16.mxu0 0
    %2086 = vmatpush1.bf16.msra.mxu0 0
    %2087 = vmatprep.subr.bf16.mxu0 0
    %2088 = vmatpush1.bf16.msra.mxu0 0
    %2089 = vmatprep.subr.bf16.mxu0 0
    %2090 = vmatpush1.bf16.msra.mxu0 0
    %2091 = vmatprep.subr.bf16.mxu0 0
    %2092 = vmatpush1.bf16.msra.mxu0 %v2075
    %2093 = vmatprep.subr.bf16.mxu0 0
    %2094 = vmatpush2.bf16.msra.mxu0 0
    %2095 = vmatprep.subr.bf16.mxu0 0
    %2096 = vmatpush2.bf16.msra.mxu0 0
    %2097 = vmatprep.subr.bf16.mxu0 0
    %2098 = vmatpush2.bf16.msra.mxu0 0
    %2099 = vmatprep.subr.bf16.mxu0 0
    %2100 = vmatpush2.bf16.msra.mxu0 0
    %2101 = vmatprep.subr.bf16.mxu0 0
    %2102 = vmatpush2.bf16.msra.mxu0 0
    %2103 = vmatprep.subr.bf16.mxu0 0
    %2104 = vmatpush2.bf16.msra.mxu0 0
    %2105 = vmatprep.subr.bf16.mxu0 0
    %2106 = vmatpush2.bf16.msra.mxu0 0
    %2107 = vmatprep.subr.bf16.mxu0 0
    %2108 = vmatpush2.bf16.msra.mxu0 0
    %2109 = vmatprep.mubr.bf16.mxu0 0
    %2110 = vmatmul.mubr.bf16.gmra.mxu0 %v2072
    %v2111 = vpop.f32.mrf.mxu0
    %v2112 = vadd.f32 0.0, %v2111
    %v2113 = vpop.f32.mrf.mxu0
    %v2114 = vpop.f32.mrf.mxu0
    %v2115 = vpop.f32.mrf.mxu0
    %2116 = vdwg.mxu0
    %v2118 = vsel %vm1285, %v1883, 0
    %v2121 = vsel %vm1889, %v1282, 0
    %2123 = vmatprep.subr.bf16.mxu0 0
    %2124 = vmatpush1.bf16.msra.mxu0 0
    %2125 = vmatprep.subr.bf16.mxu0 0
    %2126 = vmatpush1.bf16.msra.mxu0 0
    %2127 = vmatprep.subr.bf16.mxu0 0
    %2128 = vmatpush1.bf16.msra.mxu0 0
    %2129 = vmatprep.subr.bf16.mxu0 0
    %2130 = vmatpush1.bf16.msra.mxu0 0
    %2131 = vmatprep.subr.bf16.mxu0 0
    %2132 = vmatpush1.bf16.msra.mxu0 0
    %2133 = vmatprep.subr.bf16.mxu0 0
    %2134 = vmatpush1.bf16.msra.mxu0 0
    %2135 = vmatprep.subr.bf16.mxu0 0
    %2136 = vmatpush1.bf16.msra.mxu0 0
    %2137 = vmatprep.subr.bf16.mxu0 0
    %2138 = vmatpush1.bf16.msra.mxu0 %v2121
    %2139 = vmatprep.subr.bf16.mxu0 0
    %2140 = vmatpush2.bf16.msra.mxu0 0
    %2141 = vmatprep.subr.bf16.mxu0 0
    %2142 = vmatpush2.bf16.msra.mxu0 0
    %2143 = vmatprep.subr.bf16.mxu0 0
    %2144 = vmatpush2.bf16.msra.mxu0 0
    %2145 = vmatprep.subr.bf16.mxu0 0
    %2146 = vmatpush2.bf16.msra.mxu0 0
    %2147 = vmatprep.subr.bf16.mxu0 0
    %2148 = vmatpush2.bf16.msra.mxu0 0
    %2149 = vmatprep.subr.bf16.mxu0 0
    %2150 = vmatpush2.bf16.msra.mxu0 0
    %2151 = vmatprep.subr.bf16.mxu0 0
    %2152 = vmatpush2.bf16.msra.mxu0 0
    %2153 = vmatprep.subr.bf16.mxu0 0
    %2154 = vmatpush2.bf16.msra.mxu0 0
    %2155 = vmatprep.mubr.bf16.mxu0 0
    %2156 = vmatmul.mubr.bf16.gmra.mxu0 %v2118
    %v2157 = vpop.f32.mrf.mxu0
    %v2158 = vadd.f32 0.0, %v2157
    %v2159 = vpop.f32.mrf.mxu0
    %v2160 = vpop.f32.mrf.mxu0
    %v2161 = vpop.f32.mrf.mxu0
    %2162 = vdwg.mxu0
    %v2164 = vsel %vm1285, %v1884, 0
    %v2167 = vsel %vm1889, %v1283, 0
    %2169 = vmatprep.subr.bf16.mxu0 0
    %2170 = vmatpush1.bf16.msra.mxu0 0
    %2171 = vmatprep.subr.bf16.mxu0 0
    %2172 = vmatpush1.bf16.msra.mxu0 0
    %2173 = vmatprep.subr.bf16.mxu0 0
    %2174 = vmatpush1.bf16.msra.mxu0 0
    %2175 = vmatprep.subr.bf16.mxu0 0
    %2176 = vmatpush1.bf16.msra.mxu0 0
    %2177 = vmatprep.subr.bf16.mxu0 0
    %2178 = vmatpush1.bf16.msra.mxu0 0
    %2179 = vmatprep.subr.bf16.mxu0 0
    %2180 = vmatpush1.bf16.msra.mxu0 0
    %2181 = vmatprep.subr.bf16.mxu0 0
    %2182 = vmatpush1.bf16.msra.mxu0 0
    %2183 = vmatprep.subr.bf16.mxu0 0
    %2184 = vmatpush1.bf16.msra.mxu0 %v2167
    %2185 = vmatprep.subr.bf16.mxu0 0
    %2186 = vmatpush2.bf16.msra.mxu0 0
    %2187 = vmatprep.subr.bf16.mxu0 0
    %2188 = vmatpush2.bf16.msra.mxu0 0
    %2189 = vmatprep.subr.bf16.mxu0 0
    %2190 = vmatpush2.bf16.msra.mxu0 0
    %2191 = vmatprep.subr.bf16.mxu0 0
    %2192 = vmatpush2.bf16.msra.mxu0 0
    %2193 = vmatprep.subr.bf16.mxu0 0
    %2194 = vmatpush2.bf16.msra.mxu0 0
    %2195 = vmatprep.subr.bf16.mxu0 0
    %2196 = vmatpush2.bf16.msra.mxu0 0
    %2197 = vmatprep.subr.bf16.mxu0 0
    %2198 = vmatpush2.bf16.msra.mxu0 0
    %2199 = vmatprep.subr.bf16.mxu0 0
    %2200 = vmatpush2.bf16.msra.mxu0 0
    %2201 = vmatprep.mubr.bf16.mxu0 0
    %2202 = vmatmul.mubr.bf16.gmra.mxu0 %v2164
    %v2203 = vpop.f32.mrf.mxu0
    %v2204 = vadd.f32 0.0, %v2203
    %v2205 = vpop.f32.mrf.mxu0
    %v2206 = vpop.f32.mrf.mxu0
    %v2207 = vpop.f32.mrf.mxu0
    %2208 = vdwg.mxu0
    %v2210 = vsel %vm1285, %v1885, 0
    %v2213 = vsel %vm1889, %v1284, 0
    %2215 = vmatprep.subr.bf16.mxu0 0
    %2216 = vmatpush1.bf16.msra.mxu0 0
    %2217 = vmatprep.subr.bf16.mxu0 0
    %2218 = vmatpush1.bf16.msra.mxu0 0
    %2219 = vmatprep.subr.bf16.mxu0 0
    %2220 = vmatpush1.bf16.msra.mxu0 0
    %2221 = vmatprep.subr.bf16.mxu0 0
    %2222 = vmatpush1.bf16.msra.mxu0 0
    %2223 = vmatprep.subr.bf16.mxu0 0
    %2224 = vmatpush1.bf16.msra.mxu0 0
    %2225 = vmatprep.subr.bf16.mxu0 0
    %2226 = vmatpush1.bf16.msra.mxu0 0
    %2227 = vmatprep.subr.bf16.mxu0 0
    %2228 = vmatpush1.bf16.msra.mxu0 0
    %2229 = vmatprep.subr.bf16.mxu0 0
    %2230 = vmatpush1.bf16.msra.mxu0 %v2213
    %2231 = vmatprep.subr.bf16.mxu0 0
    %2232 = vmatpush2.bf16.msra.mxu0 0
    %2233 = vmatprep.subr.bf16.mxu0 0
    %2234 = vmatpush2.bf16.msra.mxu0 0
    %2235 = vmatprep.subr.bf16.mxu0 0
    %2236 = vmatpush2.bf16.msra.mxu0 0
    %2237 = vmatprep.subr.bf16.mxu0 0
    %2238 = vmatpush2.bf16.msra.mxu0 0
    %2239 = vmatprep.subr.bf16.mxu0 0
    %2240 = vmatpush2.bf16.msra.mxu0 0
    %2241 = vmatprep.subr.bf16.mxu0 0
    %2242 = vmatpush2.bf16.msra.mxu0 0
    %2243 = vmatprep.subr.bf16.mxu0 0
    %2244 = vmatpush2.bf16.msra.mxu0 0
    %2245 = vmatprep.subr.bf16.mxu0 0
    %2246 = vmatpush2.bf16.msra.mxu0 0
    %2247 = vmatprep.mubr.bf16.mxu0 0
    %2248 = vmatmul.mubr.bf16.gmra.mxu0 %v2210
    %v2249 = vpop.f32.mrf.mxu0
    %v2250 = vadd.f32 0.0, %v2249
    %v2251 = vpop.f32.mrf.mxu0
    %v2252 = vpop.f32.mrf.mxu0
    %v2253 = vpop.f32.mrf.mxu0
    %2254 = vdwg.mxu0
    %v2255 = vpack.c.bf16 %v1928, %v1928
    %v2256 = vpack.c.bf16 %v1974, %v1974
    %v2257 = vpack.c.bf16 %v2020, %v2020
    %v2258 = vpack.c.bf16 %v2066, %v2066
    %v2259 = vpack.c.bf16 %v2112, %v2112
    %v2260 = vpack.c.bf16 %v2158, %v2158
    %v2261 = vpack.c.bf16 %v2204, %v2204
    %v2262 = vpack.c.bf16 %v2250, %v2250
    %v2263 = vld [vmem:[%s4] sm:$0xf]
    %v2264 = vld [vmem:[%s4 + $0x4] sm:$0xf]
    %v2265 = vld [vmem:[%s4 + $0x8] sm:$0xf]
    %v2266 = vld [vmem:[%s4 + $0xc] sm:$0xf]
    %v2268 = vsel %vm1285, %v2255, 0
    %v2271 = vsel %vm1889, %v2263, 0
    %2273 = vmatprep.subr.bf16.mxu0 0
    %2274 = vmatpush1.bf16.msra.mxu0 0
    %2275 = vmatprep.subr.bf16.mxu0 0
    %2276 = vmatpush1.bf16.msra.mxu0 0
    %2277 = vmatprep.subr.bf16.mxu0 0
    %2278 = vmatpush1.bf16.msra.mxu0 0
    %2279 = vmatprep.subr.bf16.mxu0 0
    %2280 = vmatpush1.bf16.msra.mxu0 0
    %2281 = vmatprep.subr.bf16.mxu0 0
    %2282 = vmatpush1.bf16.msra.mxu0 0
    %2283 = vmatprep.subr.bf16.mxu0 0
    %2284 = vmatpush1.bf16.msra.mxu0 0
    %2285 = vmatprep.subr.bf16.mxu0 0
    %2286 = vmatpush1.bf16.msra.mxu0 0
    %2287 = vmatprep.subr.bf16.mxu0 0
    %2288 = vmatpush1.bf16.msra.mxu0 %v2271
    %2289 = vmatprep.subr.bf16.mxu0 0
    %2290 = vmatpush2.bf16.msra.mxu0 0
    %2291 = vmatprep.subr.bf16.mxu0 0
    %2292 = vmatpush2.bf16.msra.mxu0 0
    %2293 = vmatprep.subr.bf16.mxu0 0
    %2294 = vmatpush2.bf16.msra.mxu0 0
    %2295 = vmatprep.subr.bf16.mxu0 0
    %2296 = vmatpush2.bf16.msra.mxu0 0
    %2297 = vmatprep.subr.bf16.mxu0 0
    %2298 = vmatpush2.bf16.msra.mxu0 0
    %2299 = vmatprep.subr.bf16.mxu0 0
    %2300 = vmatpush2.bf16.msra.mxu0 0
    %2301 = vmatprep.subr.bf16.mxu0 0
    %2302 = vmatpush2.bf16.msra.mxu0 0
    %2303 = vmatprep.subr.bf16.mxu0 0
    %2304 = vmatpush2.bf16.msra.mxu0 0
    %2305 = vmatprep.mubr.bf16.mxu0 0
    %2306 = vmatmul.mubr.bf16.gmra.mxu0 %v2268
    %v2307 = vpop.f32.mrf.mxu0
    %v2308 = vadd.f32 0.0, %v2307
    %v2309 = vpop.f32.mrf.mxu0
    %v2310 = vpop.f32.mrf.mxu0
    %v2311 = vpop.f32.mrf.mxu0
    %2312 = vdwg.mxu0
    %v2314 = vsel %vm1285, %v2256, 0
    %v2317 = vsel %vm1889, %v2264, 0
    %2319 = vmatprep.subr.bf16.mxu0 0
    %2320 = vmatpush1.bf16.msra.mxu0 0
    %2321 = vmatprep.subr.bf16.mxu0 0
    %2322 = vmatpush1.bf16.msra.mxu0 0
    %2323 = vmatprep.subr.bf16.mxu0 0
    %2324 = vmatpush1.bf16.msra.mxu0 0
    %2325 = vmatprep.subr.bf16.mxu0 0
    %2326 = vmatpush1.bf16.msra.mxu0 0
    %2327 = vmatprep.subr.bf16.mxu0 0
    %2328 = vmatpush1.bf16.msra.mxu0 0
    %2329 = vmatprep.subr.bf16.mxu0 0
    %2330 = vmatpush1.bf16.msra.mxu0 0
    %2331 = vmatprep.subr.bf16.mxu0 0
    %2332 = vmatpush1.bf16.msra.mxu0 0
    %2333 = vmatprep.subr.bf16.mxu0 0
    %2334 = vmatpush1.bf16.msra.mxu0 %v2317
    %2335 = vmatprep.subr.bf16.mxu0 0
    %2336 = vmatpush2.bf16.msra.mxu0 0
    %2337 = vmatprep.subr.bf16.mxu0 0
    %2338 = vmatpush2.bf16.msra.mxu0 0
    %2339 = vmatprep.subr.bf16.mxu0 0
    %2340 = vmatpush2.bf16.msra.mxu0 0
    %2341 = vmatprep.subr.bf16.mxu0 0
    %2342 = vmatpush2.bf16.msra.mxu0 0
    %2343 = vmatprep.subr.bf16.mxu0 0
    %2344 = vmatpush2.bf16.msra.mxu0 0
    %2345 = vmatprep.subr.bf16.mxu0 0
    %2346 = vmatpush2.bf16.msra.mxu0 0
    %2347 = vmatprep.subr.bf16.mxu0 0
    %2348 = vmatpush2.bf16.msra.mxu0 0
    %2349 = vmatprep.subr.bf16.mxu0 0
    %2350 = vmatpush2.bf16.msra.mxu0 0
    %2351 = vmatprep.mubr.bf16.mxu0 0
    %2352 = vmatmul.mubr.bf16.gmra.mxu0 %v2314
    %v2353 = vpop.f32.mrf.mxu0
    %v2354 = vadd.f32 0.0, %v2353
    %v2355 = vpop.f32.mrf.mxu0
    %v2356 = vpop.f32.mrf.mxu0
    %v2357 = vpop.f32.mrf.mxu0
    %2358 = vdwg.mxu0
    %v2360 = vsel %vm1285, %v2257, 0
    %v2363 = vsel %vm1889, %v2265, 0
    %2365 = vmatprep.subr.bf16.mxu0 0
    %2366 = vmatpush1.bf16.msra.mxu0 0
    %2367 = vmatprep.subr.bf16.mxu0 0
    %2368 = vmatpush1.bf16.msra.mxu0 0
    %2369 = vmatprep.subr.bf16.mxu0 0
    %2370 = vmatpush1.bf16.msra.mxu0 0
    %2371 = vmatprep.subr.bf16.mxu0 0
    %2372 = vmatpush1.bf16.msra.mxu0 0
    %2373 = vmatprep.subr.bf16.mxu0 0
    %2374 = vmatpush1.bf16.msra.mxu0 0
    %2375 = vmatprep.subr.bf16.mxu0 0
    %2376 = vmatpush1.bf16.msra.mxu0 0
    %2377 = vmatprep.subr.bf16.mxu0 0
    %2378 = vmatpush1.bf16.msra.mxu0 0
    %2379 = vmatprep.subr.bf16.mxu0 0
    %2380 = vmatpush1.bf16.msra.mxu0 %v2363
    %2381 = vmatprep.subr.bf16.mxu0 0
    %2382 = vmatpush2.bf16.msra.mxu0 0
    %2383 = vmatprep.subr.bf16.mxu0 0
    %2384 = vmatpush2.bf16.msra.mxu0 0
    %2385 = vmatprep.subr.bf16.mxu0 0
    %2386 = vmatpush2.bf16.msra.mxu0 0
    %2387 = vmatprep.subr.bf16.mxu0 0
    %2388 = vmatpush2.bf16.msra.mxu0 0
    %2389 = vmatprep.subr.bf16.mxu0 0
    %2390 = vmatpush2.bf16.msra.mxu0 0
    %2391 = vmatprep.subr.bf16.mxu0 0
    %2392 = vmatpush2.bf16.msra.mxu0 0
    %2393 = vmatprep.subr.bf16.mxu0 0
    %2394 = vmatpush2.bf16.msra.mxu0 0
    %2395 = vmatprep.subr.bf16.mxu0 0
    %2396 = vmatpush2.bf16.msra.mxu0 0
    %2397 = vmatprep.mubr.bf16.mxu0 0
    %2398 = vmatmul.mubr.bf16.gmra.mxu0 %v2360
    %v2399 = vpop.f32.mrf.mxu0
    %v2400 = vadd.f32 0.0, %v2399
    %v2401 = vpop.f32.mrf.mxu0
    %v2402 = vpop.f32.mrf.mxu0
    %v2403 = vpop.f32.mrf.mxu0
    %2404 = vdwg.mxu0
    %v2406 = vsel %vm1285, %v2258, 0
    %v2409 = vsel %vm1889, %v2266, 0
    %2411 = vmatprep.subr.bf16.mxu0 0
    %2412 = vmatpush1.bf16.msra.mxu0 0
    %2413 = vmatprep.subr.bf16.mxu0 0
    %2414 = vmatpush1.bf16.msra.mxu0 0
    %2415 = vmatprep.subr.bf16.mxu0 0
    %2416 = vmatpush1.bf16.msra.mxu0 0
    %2417 = vmatprep.subr.bf16.mxu0 0
    %2418 = vmatpush1.bf16.msra.mxu0 0
    %2419 = vmatprep.subr.bf16.mxu0 0
    %2420 = vmatpush1.bf16.msra.mxu0 0
    %2421 = vmatprep.subr.bf16.mxu0 0
    %2422 = vmatpush1.bf16.msra.mxu0 0
    %2423 = vmatprep.subr.bf16.mxu0 0
    %2424 = vmatpush1.bf16.msra.mxu0 0
    %2425 = vmatprep.subr.bf16.mxu0 0
    %2426 = vmatpush1.bf16.msra.mxu0 %v2409
    %2427 = vmatprep.subr.bf16.mxu0 0
    %2428 = vmatpush2.bf16.msra.mxu0 0
    %2429 = vmatprep.subr.bf16.mxu0 0
    %2430 = vmatpush2.bf16.msra.mxu0 0
    %2431 = vmatprep.subr.bf16.mxu0 0
    %2432 = vmatpush2.bf16.msra.mxu0 0
    %2433 = vmatprep.subr.bf16.mxu0 0
    %2434 = vmatpush2.bf16.msra.mxu0 0
    %2435 = vmatprep.subr.bf16.mxu0 0
    %2436 = vmatpush2.bf16.msra.mxu0 0
    %2437 = vmatprep.subr.bf16.mxu0 0
    %2438 = vmatpush2.bf16.msra.mxu0 0
    %2439 = vmatprep.subr.bf16.mxu0 0
    %2440 = vmatpush2.bf16.msra.mxu0 0
    %2441 = vmatprep.subr.bf16.mxu0 0
    %2442 = vmatpush2.bf16.msra.mxu0 0
    %2443 = vmatprep.mubr.bf16.mxu0 0
    %2444 = vmatmul.mubr.bf16.gmra.mxu0 %v2406
    %v2445 = vpop.f32.mrf.mxu0
    %v2446 = vadd.f32 0.0, %v2445
    %v2447 = vpop.f32.mrf.mxu0
    %v2448 = vpop.f32.mrf.mxu0
    %v2449 = vpop.f32.mrf.mxu0
    %2450 = vdwg.mxu0
    %v2452 = vsel %vm1285, %v2259, 0
    %2454 = vmatprep.subr.bf16.mxu0 0
    %2455 = vmatpush1.bf16.msra.mxu0 0
    %2456 = vmatprep.subr.bf16.mxu0 0
    %2457 = vmatpush1.bf16.msra.mxu0 0
    %2458 = vmatprep.subr.bf16.mxu0 0
    %2459 = vmatpush1.bf16.msra.mxu0 0
    %2460 = vmatprep.subr.bf16.mxu0 0
    %2461 = vmatpush1.bf16.msra.mxu0 0
    %2462 = vmatprep.subr.bf16.mxu0 0
    %2463 = vmatpush1.bf16.msra.mxu0 0
    %2464 = vmatprep.subr.bf16.mxu0 0
    %2465 = vmatpush1.bf16.msra.mxu0 0
    %2466 = vmatprep.subr.bf16.mxu0 0
    %2467 = vmatpush1.bf16.msra.mxu0 0
    %2468 = vmatprep.subr.bf16.mxu0 0
    %2469 = vmatpush1.bf16.msra.mxu0 %v2271
    %2470 = vmatprep.subr.bf16.mxu0 0
    %2471 = vmatpush2.bf16.msra.mxu0 0
    %2472 = vmatprep.subr.bf16.mxu0 0
    %2473 = vmatpush2.bf16.msra.mxu0 0
    %2474 = vmatprep.subr.bf16.mxu0 0
    %2475 = vmatpush2.bf16.msra.mxu0 0
    %2476 = vmatprep.subr.bf16.mxu0 0
    %2477 = vmatpush2.bf16.msra.mxu0 0
    %2478 = vmatprep.subr.bf16.mxu0 0
    %2479 = vmatpush2.bf16.msra.mxu0 0
    %2480 = vmatprep.subr.bf16.mxu0 0
    %2481 = vmatpush2.bf16.msra.mxu0 0
    %2482 = vmatprep.subr.bf16.mxu0 0
    %2483 = vmatpush2.bf16.msra.mxu0 0
    %2484 = vmatprep.subr.bf16.mxu0 0
    %2485 = vmatpush2.bf16.msra.mxu0 0
    %2486 = vmatprep.mubr.bf16.mxu0 0
    %2487 = vmatmul.mubr.bf16.gmra.mxu0 %v2452
    %v2488 = vpop.f32.mrf.mxu0
    %v2489 = vadd.f32 0.0, %v2488
    %v2490 = vpop.f32.mrf.mxu0
    %v2491 = vpop.f32.mrf.mxu0
    %v2492 = vpop.f32.mrf.mxu0
    %2493 = vdwg.mxu0
    %v2495 = vsel %vm1285, %v2260, 0
    %2497 = vmatprep.subr.bf16.mxu0 0
    %2498 = vmatpush1.bf16.msra.mxu0 0
    %2499 = vmatprep.subr.bf16.mxu0 0
    %2500 = vmatpush1.bf16.msra.mxu0 0
    %2501 = vmatprep.subr.bf16.mxu0 0
    %2502 = vmatpush1.bf16.msra.mxu0 0
    %2503 = vmatprep.subr.bf16.mxu0 0
    %2504 = vmatpush1.bf16.msra.mxu0 0
    %2505 = vmatprep.subr.bf16.mxu0 0
    %2506 = vmatpush1.bf16.msra.mxu0 0
    %2507 = vmatprep.subr.bf16.mxu0 0
    %2508 = vmatpush1.bf16.msra.mxu0 0
    %2509 = vmatprep.subr.bf16.mxu0 0
    %2510 = vmatpush1.bf16.msra.mxu0 0
    %2511 = vmatprep.subr.bf16.mxu0 0
    %2512 = vmatpush1.bf16.msra.mxu0 %v2317
    %2513 = vmatprep.subr.bf16.mxu0 0
    %2514 = vmatpush2.bf16.msra.mxu0 0
    %2515 = vmatprep.subr.bf16.mxu0 0
    %2516 = vmatpush2.bf16.msra.mxu0 0
    %2517 = vmatprep.subr.bf16.mxu0 0
    %2518 = vmatpush2.bf16.msra.mxu0 0
    %2519 = vmatprep.subr.bf16.mxu0 0
    %2520 = vmatpush2.bf16.msra.mxu0 0
    %2521 = vmatprep.subr.bf16.mxu0 0
    %2522 = vmatpush2.bf16.msra.mxu0 0
    %2523 = vmatprep.subr.bf16.mxu0 0
    %2524 = vmatpush2.bf16.msra.mxu0 0
    %2525 = vmatprep.subr.bf16.mxu0 0
    %2526 = vmatpush2.bf16.msra.mxu0 0
    %2527 = vmatprep.subr.bf16.mxu0 0
    %2528 = vmatpush2.bf16.msra.mxu0 0
    %2529 = vmatprep.mubr.bf16.mxu0 0
    %2530 = vmatmul.mubr.bf16.gmra.mxu0 %v2495
    %v2531 = vpop.f32.mrf.mxu0
    %v2532 = vadd.f32 0.0, %v2531
    %v2533 = vpop.f32.mrf.mxu0
    %v2534 = vpop.f32.mrf.mxu0
    %v2535 = vpop.f32.mrf.mxu0
    %2536 = vdwg.mxu0
    %v2538 = vsel %vm1285, %v2261, 0
    %2540 = vmatprep.subr.bf16.mxu0 0
    %2541 = vmatpush1.bf16.msra.mxu0 0
    %2542 = vmatprep.subr.bf16.mxu0 0
    %2543 = vmatpush1.bf16.msra.mxu0 0
    %2544 = vmatprep.subr.bf16.mxu0 0
    %2545 = vmatpush1.bf16.msra.mxu0 0
    %2546 = vmatprep.subr.bf16.mxu0 0
    %2547 = vmatpush1.bf16.msra.mxu0 0
    %2548 = vmatprep.subr.bf16.mxu0 0
    %2549 = vmatpush1.bf16.msra.mxu0 0
    %2550 = vmatprep.subr.bf16.mxu0 0
    %2551 = vmatpush1.bf16.msra.mxu0 0
    %2552 = vmatprep.subr.bf16.mxu0 0
    %2553 = vmatpush1.bf16.msra.mxu0 0
    %2554 = vmatprep.subr.bf16.mxu0 0
    %2555 = vmatpush1.bf16.msra.mxu0 %v2363
    %2556 = vmatprep.subr.bf16.mxu0 0
    %2557 = vmatpush2.bf16.msra.mxu0 0
    %2558 = vmatprep.subr.bf16.mxu0 0
    %2559 = vmatpush2.bf16.msra.mxu0 0
    %2560 = vmatprep.subr.bf16.mxu0 0
    %2561 = vmatpush2.bf16.msra.mxu0 0
    %2562 = vmatprep.subr.bf16.mxu0 0
    %2563 = vmatpush2.bf16.msra.mxu0 0
    %2564 = vmatprep.subr.bf16.mxu0 0
    %2565 = vmatpush2.bf16.msra.mxu0 0
    %2566 = vmatprep.subr.bf16.mxu0 0
    %2567 = vmatpush2.bf16.msra.mxu0 0
    %2568 = vmatprep.subr.bf16.mxu0 0
    %2569 = vmatpush2.bf16.msra.mxu0 0
    %2570 = vmatprep.subr.bf16.mxu0 0
    %2571 = vmatpush2.bf16.msra.mxu0 0
    %2572 = vmatprep.mubr.bf16.mxu0 0
    %2573 = vmatmul.mubr.bf16.gmra.mxu0 %v2538
    %v2574 = vpop.f32.mrf.mxu0
    %v2575 = vadd.f32 0.0, %v2574
    %v2576 = vpop.f32.mrf.mxu0
    %v2577 = vpop.f32.mrf.mxu0
    %v2578 = vpop.f32.mrf.mxu0
    %2579 = vdwg.mxu0
    %v2581 = vsel %vm1285, %v2262, 0
    %2583 = vmatprep.subr.bf16.mxu0 0
    %2584 = vmatpush1.bf16.msra.mxu0 0
    %2585 = vmatprep.subr.bf16.mxu0 0
    %2586 = vmatpush1.bf16.msra.mxu0 0
    %2587 = vmatprep.subr.bf16.mxu0 0
    %2588 = vmatpush1.bf16.msra.mxu0 0
    %2589 = vmatprep.subr.bf16.mxu0 0
    %2590 = vmatpush1.bf16.msra.mxu0 0
    %2591 = vmatprep.subr.bf16.mxu0 0
    %2592 = vmatpush1.bf16.msra.mxu0 0
    %2593 = vmatprep.subr.bf16.mxu0 0
    %2594 = vmatpush1.bf16.msra.mxu0 0
    %2595 = vmatprep.subr.bf16.mxu0 0
    %2596 = vmatpush1.bf16.msra.mxu0 0
    %2597 = vmatprep.subr.bf16.mxu0 0
    %2598 = vmatpush1.bf16.msra.mxu0 %v2409
    %2599 = vmatprep.subr.bf16.mxu0 0
    %2600 = vmatpush2.bf16.msra.mxu0 0
    %2601 = vmatprep.subr.bf16.mxu0 0
    %2602 = vmatpush2.bf16.msra.mxu0 0
    %2603 = vmatprep.subr.bf16.mxu0 0
    %2604 = vmatpush2.bf16.msra.mxu0 0
    %2605 = vmatprep.subr.bf16.mxu0 0
    %2606 = vmatpush2.bf16.msra.mxu0 0
    %2607 = vmatprep.subr.bf16.mxu0 0
    %2608 = vmatpush2.bf16.msra.mxu0 0
    %2609 = vmatprep.subr.bf16.mxu0 0
    %2610 = vmatpush2.bf16.msra.mxu0 0
    %2611 = vmatprep.subr.bf16.mxu0 0
    %2612 = vmatpush2.bf16.msra.mxu0 0
    %2613 = vmatprep.subr.bf16.mxu0 0
    %2614 = vmatpush2.bf16.msra.mxu0 0
    %2615 = vmatprep.mubr.bf16.mxu0 0
    %2616 = vmatmul.mubr.bf16.gmra.mxu0 %v2581
    %v2617 = vpop.f32.mrf.mxu0
    %v2618 = vadd.f32 0.0, %v2617
    %v2619 = vpop.f32.mrf.mxu0
    %v2620 = vpop.f32.mrf.mxu0
    %v2621 = vpop.f32.mrf.mxu0
    %2622 = vdwg.mxu0
    %v2623 = vsel %vm47, %v2308, 0.0
    %v2624 = vsel %vm47, %v2354, 0.0
    %v2625 = vadd.f32 %v2623, %v2624
    %v2626 = vsel %vm47, %v2400, 0.0
    %v2627 = vadd.f32 %v2625, %v2626
    %v2628 = vsel %vm47, %v2446, 0.0
    %v2629 = vadd.f32 %v2627, %v2628
    %v2630 = vsel %vm47, %v2489, 0.0
    %v2631 = vsel %vm47, %v2532, 0.0
    %v2632 = vadd.f32 %v2630, %v2631
    %v2633 = vsel %vm47, %v2575, 0.0
    %v2634 = vadd.f32 %v2632, %v2633
    %v2635 = vsel %vm47, %v2618, 0.0
    %v2636 = vadd.f32 %v2634, %v2635
    %v2637 = vld [vmem:[%s5] sm:$0x1]
    %v2639 = vlaneseq
    %v2640 = vshrl.u32 %v2639, 7
    %v2641 = vsub.s32 0, %v2640
    %v2642 = vrot.slane %v2637, %v2641
    %v2644 = vadd.f32 %v2629, %v2642
    %v2645 = vadd.f32 %v2636, %v2642
    %v2646 = vadd.f32 %v43, %v2644
    %v2647 = vadd.f32 %v44, %v2645
    %v2648 = vld [vmem:[%s6] sm:$0x1]
    %v2649 = vld [vmem:[%s7] sm:$0x1]
    %v2650 = vsel %vm47, %v2646, 0.0
    %2651 = vadd.xlane.f32.xlu0 %v2650
    %v2652 = vpop.xlane.xlu0 %2651
    %v2653 = vsel %vm47, %v2647, 0.0
    %2654 = vadd.xlane.f32.xlu0 %v2653
    %v2655 = vpop.xlane.xlu0 %2654
    %v2656 = vmul.f32 %v2652, %v54
    %v2657 = vmul.f32 %v2655, %v54
    %v2658 = vsub.f32 %v2646, %v2656
    %v2659 = vsub.f32 %v2647, %v2657
    %v2660 = vmul.f32 %v2658, %v2658
    %v2661 = vmul.f32 %v2659, %v2659
    %v2662 = vsel %vm47, %v2660, 0.0
    %2663 = vadd.xlane.f32.xlu0 %v2662
    %v2664 = vpop.xlane.xlu0 %2663
    %v2665 = vsel %vm47, %v2661, 0.0
    %2666 = vadd.xlane.f32.xlu0 %v2665
    %v2667 = vpop.xlane.xlu0 %2666
    %v2668 = vmul.f32 %v2664, %v54
    %v2669 = vmul.f32 %v2667, %v54
    %v2670 = vadd.f32 %v2668, 1e-05
    %v2671 = vadd.f32 %v2669, 1e-05
    %v2672 = vrsqrt.pop %v2670
    %v2673 = vrsqrt.pop %v2671
    %v2674 = vmul.f32 %v2658, %v2672
    %v2675 = vmul.f32 %v2659, %v2673
    %v2677 = vlaneseq
    %v2678 = vshrl.u32 %v2677, 7
    %v2679 = vsub.s32 0, %v2678
    %v2680 = vrot.slane %v2648, %v2679
    %v2682 = vmul.f32 %v2674, %v2680
    %v2683 = vmul.f32 %v2675, %v2680
    %v2685 = vlaneseq
    %v2686 = vshrl.u32 %v2685, 7
    %v2687 = vsub.s32 0, %v2686
    %v2688 = vrot.slane %v2649, %v2687
    %v2690 = vadd.f32 %v2682, %v2688
    %v2691 = vadd.f32 %v2683, %v2688
    %v2692 = vpack.c.bf16 %v2691, %v2690
    %v2693 = vld [vmem:[%s8] sm:$0xf]
    %v2694 = vld [vmem:[%s8 + $0x4] sm:$0xf]
    %v2695 = vld [vmem:[%s8 + $0x8] sm:$0xf]
    %v2696 = vld [vmem:[%s8 + $0xc] sm:$0xf]
    %v2697 = vld [vmem:[%s9] sm:$0x1]
    %v2699 = vlaneseq
    %v2700 = vshrl.u32 %v2699, 7
    %v2701 = vsub.s32 0, %v2700
    %v2702 = vrot.slane %v2697, %v2701
    %v2708 = vunpack.c.l.b16 %v2693
    %v2709 = vunpack.c.l.b16 %v2694
    %v2710 = vunpack.c.l.b16 %v2695
    %v2711 = vunpack.c.l.b16 %v2696
    %v2712 = vpack.c.b16 %v2709, %v2708
    %v2713 = vpack.c.b16 %v2711, %v2710
    %v2717 = vsel %vm47, %v2692, 0
    %2719 = vmatprep.subr.bf16.mxu0 0
    %2720 = vmatpush1.bf16.msra.mxu0 0
    %2721 = vmatprep.subr.bf16.mxu0 0
    %2722 = vmatpush1.bf16.msra.mxu0 0
    %2723 = vmatprep.subr.bf16.mxu0 0
    %2724 = vmatpush1.bf16.msra.mxu0 0
    %2725 = vmatprep.subr.bf16.mxu0 0
    %2726 = vmatpush1.bf16.msra.mxu0 0
    %2727 = vmatprep.subr.bf16.mxu0 0
    %2728 = vmatpush1.bf16.msra.mxu0 0
    %2729 = vmatprep.subr.bf16.mxu0 0
    %2730 = vmatpush1.bf16.msra.mxu0 0
    %2731 = vmatprep.subr.bf16.mxu0 0
    %2732 = vmatpush1.bf16.msra.mxu0 %v2713
    %2733 = vmatprep.subr.bf16.mxu0 0
    %2734 = vmatpush1.bf16.msra.mxu0 %v2712
    %2735 = vmatprep.subr.bf16.mxu0 0
    %2736 = vmatpush2.bf16.msra.mxu0 0
    %2737 = vmatprep.subr.bf16.mxu0 0
    %2738 = vmatpush2.bf16.msra.mxu0 0
    %2739 = vmatprep.subr.bf16.mxu0 0
    %2740 = vmatpush2.bf16.msra.mxu0 0
    %2741 = vmatprep.subr.bf16.mxu0 0
    %2742 = vmatpush2.bf16.msra.mxu0 0
    %2743 = vmatprep.subr.bf16.mxu0 0
    %2744 = vmatpush2.bf16.msra.mxu0 0
    %2745 = vmatprep.subr.bf16.mxu0 0
    %2746 = vmatpush2.bf16.msra.mxu0 0
    %2747 = vmatprep.subr.bf16.mxu0 0
    %2748 = vmatpush2.bf16.msra.mxu0 0
    %2749 = vmatprep.subr.bf16.mxu0 0
    %2750 = vmatpush2.bf16.msra.mxu0 0
    %2751 = vmatprep.mubr.bf16.mxu0 0
    %2752 = vmatmul.mubr.bf16.gmra.mxu0 %v2717
    %v2753 = vpop.f32.mrf.mxu0
    %v2754 = vadd.f32 %v2702, %v2753
    %v2755 = vpop.f32.mrf.mxu0
    %v2756 = vpop.f32.mrf.mxu0
    %v2757 = vadd.f32 %v2702, %v2756
    %v2758 = vpop.f32.mrf.mxu0
    %2759 = vdwg.mxu0
    %v2760 = vmul.f32 %v2754, 0.5
    %v2761 = vmul.f32 %v2757, 0.5
    %v2762 = vmul.f32 %v2754, 0.70710677
    %v2763 = vmul.f32 %v2757, 0.70710677
    %v2764 = verf.f32.pop %v2762
    %v2765 = verf.f32.pop %v2763
    %v2766 = vadd.f32 %v2764, 1.0
    %v2767 = vadd.f32 %v2765, 1.0
    %v2768 = vmul.f32 %v2760, %v2766
    %v2769 = vmul.f32 %v2761, %v2767
    %v2770 = vpack.c.bf16 %v2769, %v2768
    %v2771 = vld [vmem:[%s10] sm:$0xf]
    %v2772 = vld [vmem:[%s10 + $0x4] sm:$0xf]
    %v2773 = vld [vmem:[%s10 + $0x8] sm:$0xf]
    %v2774 = vld [vmem:[%s10 + $0xc] sm:$0xf]
    %v2775 = vld [vmem:[%s10 + $0x10] sm:$0xf]
    %v2776 = vld [vmem:[%s10 + $0x14] sm:$0xf]
    %v2777 = vld [vmem:[%s10 + $0x18] sm:$0xf]
    %v2778 = vld [vmem:[%s10 + $0x1c] sm:$0xf]
    %v2779 = vld [vmem:[%s10 + $0x20] sm:$0xf]
    %v2780 = vld [vmem:[%s10 + $0x24] sm:$0xf]
    %v2781 = vld [vmem:[%s10 + $0x28] sm:$0xf]
    %v2782 = vld [vmem:[%s10 + $0x2c] sm:$0xf]
    %v2783 = vld [vmem:[%s10 + $0x30] sm:$0xf]
    %v2784 = vld [vmem:[%s10 + $0x34] sm:$0xf]
    %v2785 = vld [vmem:[%s10 + $0x38] sm:$0xf]
    %v2786 = vld [vmem:[%s10 + $0x3c] sm:$0xf]
    %v2787 = vld [vmem:[%s11] sm:$0x1]
    %v2789 = vlaneseq
    %v2790 = vshrl.u32 %v2789, 7
    %v2791 = vsub.s32 0, %v2790
    %v2792 = vrot.slane %v2787, %v2791
    %v2810 = vunpack.c.l.b16 %v2771
    %v2811 = vunpack.c.l.b16 %v2772
    %v2812 = vunpack.c.l.b16 %v2773
    %v2813 = vunpack.c.l.b16 %v2774
    %v2814 = vunpack.c.l.b16 %v2775
    %v2815 = vunpack.c.l.b16 %v2776
    %v2816 = vunpack.c.l.b16 %v2777
    %v2817 = vunpack.c.l.b16 %v2778
    %v2818 = vunpack.c.l.b16 %v2779
    %v2819 = vunpack.c.l.b16 %v2780
    %v2820 = vunpack.c.l.b16 %v2781
    %v2821 = vunpack.c.l.b16 %v2782
    %v2822 = vunpack.c.l.b16 %v2783
    %v2823 = vunpack.c.l.b16 %v2784
    %v2824 = vunpack.c.l.b16 %v2785
    %v2825 = vunpack.c.l.b16 %v2786
    %v2826 = vpack.c.b16 %v2811, %v2810
    %v2827 = vpack.c.b16 %v2813, %v2812
    %v2828 = vpack.c.b16 %v2815, %v2814
    %v2829 = vpack.c.b16 %v2817, %v2816
    %v2830 = vpack.c.b16 %v2819, %v2818
    %v2831 = vpack.c.b16 %v2821, %v2820
    %v2832 = vpack.c.b16 %v2823, %v2822
    %v2833 = vpack.c.b16 %v2825, %v2824
    %2842 = vmatprep.subr.bf16.mxu0 0
    %2843 = vmatpush1.bf16.msra.mxu0 %v2833
    %2844 = vmatprep.subr.bf16.mxu0 0
    %2845 = vmatpush1.bf16.msra.mxu0 %v2832
    %2846 = vmatprep.subr.bf16.mxu0 0
    %2847 = vmatpush1.bf16.msra.mxu0 %v2831
    %2848 = vmatprep.subr.bf16.mxu0 0
    %2849 = vmatpush1.bf16.msra.mxu0 %v2830
    %2850 = vmatprep.subr.bf16.mxu0 0
    %2851 = vmatpush1.bf16.msra.mxu0 %v2829
    %2852 = vmatprep.subr.bf16.mxu0 0
    %2853 = vmatpush1.bf16.msra.mxu0 %v2828
    %2854 = vmatprep.subr.bf16.mxu0 0
    %2855 = vmatpush1.bf16.msra.mxu0 %v2827
    %2856 = vmatprep.subr.bf16.mxu0 0
    %2857 = vmatpush1.bf16.msra.mxu0 %v2826
    %2858 = vmatprep.subr.bf16.mxu0 0
    %2859 = vmatpush2.bf16.msra.mxu0 0
    %2860 = vmatprep.subr.bf16.mxu0 0
    %2861 = vmatpush2.bf16.msra.mxu0 0
    %2862 = vmatprep.subr.bf16.mxu0 0
    %2863 = vmatpush2.bf16.msra.mxu0 0
    %2864 = vmatprep.subr.bf16.mxu0 0
    %2865 = vmatpush2.bf16.msra.mxu0 0
    %2866 = vmatprep.subr.bf16.mxu0 0
    %2867 = vmatpush2.bf16.msra.mxu0 0
    %2868 = vmatprep.subr.bf16.mxu0 0
    %2869 = vmatpush2.bf16.msra.mxu0 0
    %2870 = vmatprep.subr.bf16.mxu0 0
    %2871 = vmatpush2.bf16.msra.mxu0 0
    %2872 = vmatprep.subr.bf16.mxu0 0
    %2873 = vmatpush2.bf16.msra.mxu0 0
    %2874 = vmatprep.mubr.bf16.mxu0 0
    %2875 = vmatmul.mubr.bf16.gmra.mxu0 %v2770
    %v2876 = vpop.f32.mrf.mxu0
    %v2877 = vadd.f32 %v2792, %v2876
    %v2878 = vpop.f32.mrf.mxu0
    %v2879 = vpop.f32.mrf.mxu0
    %v2880 = vadd.f32 %v2792, %v2879
    %v2881 = vpop.f32.mrf.mxu0
    %2882 = vdwg.mxu0
    %v2883 = vadd.f32 %v2646, %v2877
    %v2884 = vadd.f32 %v2647, %v2880
    %2885 = vst.msk [vmem:[#allocation2] sm:$0xff] %vm47, %v2883
    %2886 = vst.msk [vmem:[#allocation2 + $0x8] sm:$0xff] %vm47, %v2884
    // Predicated region
    $region50: #{tpu_custom_call.1} parent=1 // pred_check
      _
    $region51: #{tpu_custom_call.1} parent=1 // pred_check_branch
      %2888 = sbr.rel (0) target = $region53
    $region52: #{tpu_custom_call.1} parent=1 // pred_region
      %s2890 = ssub.s32 256, 256
      %2891 = vsyncadd [#allocation3], %s2890
      %s2892 = sshll.u32 [#allocation2], 4
      %s2893 = int_to_ptr.vmem [resolvable:$true] %s2892
      %2898 = dma.vmem_to_hbm [thread:$0]  %s2893, 256, %s12, [#allocation3], 128, 128, 8
    $region53: #{tpu_custom_call.1} parent=1 // pred_fallthru
      _
    // Predicated region
    $region54: #{tpu_custom_call.1} parent=1 // pred_check
      _
    $region55: #{tpu_custom_call.1} parent=1 // pred_check_branch
      %2900 = sbr.rel (0) target = $region57
    $region56: #{tpu_custom_call.1} parent=1 // pred_region
      %2901 = dma.done [#allocation3], 256
    $region57: #{tpu_custom_call.1} parent=1 // pred_fallthru
      _
    %2902 = vsyncpa [#allocation3], 1

</llo_original>
